<compile_context>
chip_gen: v7x
topology: tpu7x:2x2x1
jax: 0.10.0
libtpu: 0.0.40
codegen_flags: <defaults>
</compile_context>

<pallas_src>
import functools
import math

import jax
import jax.numpy as jnp
from jax.experimental import pallas as pl
from jax.experimental.pallas import tpu as pltpu

LN_EPS = 1e-5


# --------------------------------------------------------------------------- #
# Kernel: full encoder stack on one (S, F) batch slab (grid over batch).
# --------------------------------------------------------------------------- #
def _encoder_kernel(
    x_ref,       # (S, F)            this batch element's tokens
    qkvw_ref,    # (L, F, 3F)        [Wq^T | Wk^T | Wv^T]
    qkvb_ref,    # (L, 1, 3F)        [bq | bk | bv]
    wo_ref,      # (L, F, F)         Wo^T
    w1_ref,      # (L, F, HID)       W1^T
    b1_ref,      # (L, 1, HID)
    w2_ref,      # (L, HID, F)       W2^T
    vecf_ref,    # (L, 6, 1, F)      [bo, ln1_w, ln1_b, ln2_w, ln2_b, b2]
    out_ref,     # (S, F)
    *,
    nhead: int,
    nlayers: int,
):
    x = x_ref[...]                          # (S, F) f32, resident across layers
    S, F = x.shape
    hd = F // nhead
    scale = 1.0 / math.sqrt(hd)

    for l in range(nlayers):                # static unroll (nlayers small)
        w_qkv = qkvw_ref[l]                 # (F, 3F)
        b_qkv = qkvb_ref[l]                 # (1, 3F)
        w_o = wo_ref[l]                     # (F, F)
        w1 = w1_ref[l]                      # (F, HID)
        b1 = b1_ref[l]                      # (1, HID)
        w2 = w2_ref[l]                      # (HID, F)
        vecs = vecf_ref[l]                  # (6, 1, F)
        bo = vecs[0]
        ln1w = vecs[1]
        ln1b = vecs[2]
        ln2w = vecs[3]
        ln2b = vecs[4]
        b2 = vecs[5]

        # ---- multi-head self-attention --------------------------------------
        # Single K=F, N=3F projection matmul (no broadcast of x).
        qkv = jnp.dot(x, w_qkv, preferred_element_type=jnp.float32) + b_qkv  # (S, 3F)
        q = qkv[:, 0:F]
        k = qkv[:, F:2 * F]
        v = qkv[:, 2 * F:3 * F]

        o_heads = []
        for h in range(nhead):              # static unroll, 2D matmuls only
            sl = slice(h * hd, (h + 1) * hd)
            qh = q[:, sl]                   # (S, hd)
            kh = k[:, sl]
            vh = v[:, sl]
            s = jnp.einsum("qd,kd->qk", qh, kh,
                           preferred_element_type=jnp.float32) * scale       # (S, S)
            s = s - jnp.max(s, axis=-1, keepdims=True)
            p = jnp.exp(s)
            p = p / jnp.sum(p, axis=-1, keepdims=True)    # exact divide (parity)
            o_heads.append(jnp.dot(p, vh, preferred_element_type=jnp.float32))

        oc = jnp.concatenate(o_heads, axis=-1)            # (S, F) concat heads
        attn = jnp.dot(oc, w_o, preferred_element_type=jnp.float32) + bo     # K=F

        # ---- residual + LayerNorm1 (post-norm, biased variance) -------------
        x = x + attn
        mu = jnp.mean(x, axis=-1, keepdims=True)
        var = jnp.mean((x - mu) * (x - mu), axis=-1, keepdims=True)
        x = (x - mu) * jax.lax.rsqrt(var + LN_EPS) * ln1w + ln1b

        # ---- feed-forward (ReLU) ---------------------------------------------
        h1 = jnp.maximum(jnp.dot(x, w1, preferred_element_type=jnp.float32) + b1, 0.0)
        h2 = jnp.dot(h1, w2, preferred_element_type=jnp.float32) + b2

        # ---- residual + LayerNorm2 -------------------------------------------
        x = x + h2
        mu = jnp.mean(x, axis=-1, keepdims=True)
        var = jnp.mean((x - mu) * (x - mu), axis=-1, keepdims=True)
        x = (x - mu) * jax.lax.rsqrt(var + LN_EPS) * ln2w + ln2b

    out_ref[...] = x


# --------------------------------------------------------------------------- #
# Build-time weight packing (call ONCE; not in the per-forward hot path).
# --------------------------------------------------------------------------- #
def pack_params(layer_params, nhead):
    """Pre-transpose / coalesce PyTorch-layout weights into 7 packed stacks.

    Head column order of torch's in_proj (h-major, hd-minor) is preserved, so
    the kernel's static lane slices match nn.MultiheadAttention exactly.
    """
    del nhead  # layout already matches torch's contiguous per-head columns

    def per_layer(p):
        qkvw = jnp.concatenate([p["wq"].T, p["wk"].T, p["wv"].T], axis=1)   # (F, 3F)
        qkvb = jnp.concatenate([p["bq"], p["bk"], p["bv"]], axis=1)         # (1, 3F)
        wo_t = p["wo"].T                                                    # (F, F)
        w1_t = p["w1"].T                                                    # (F, HID)
        b1 = p["b1"]                                                        # (1, HID)
        w2_t = p["w2"].T                                                    # (HID, F)
        vecf = jnp.stack(
            [p["bo"], p["ln1_w"], p["ln1_b"], p["ln2_w"], p["ln2_b"], p["b2"]],
            axis=0)                                                         # (6, 1, F)
        return qkvw, qkvb, wo_t, w1_t, b1, w2_t, vecf

    packed = [per_layer(p) for p in layer_params]
    stack = lambda i: jnp.stack([lp[i] for lp in packed], axis=0)
    return {
        "qkvw": stack(0), "qkvb": stack(1), "wo": stack(2),
        "w1t": stack(3), "b1": stack(4), "w2t": stack(5), "vecf": stack(6),
    }


def transformer_encoder_forward(point_features, positional_input, packed, *, nhead):
    """Mirrors TransformerEncoder.forward with pos_encoder=None, mask=None.

    point_features: (B, S, F); positional_input unused on this path.
    packed: output of pack_params() (built once at model-build time).
    """
    del positional_input  # pos_encoder is None in this config
    B, S, F = point_features.shape
    L = packed["qkvw"].shape[0]
    HID = packed["w1t"].shape[-1]

    x = point_features.astype(jnp.float32)
    weight_args = (packed["qkvw"], packed["qkvb"], packed["wo"],
                   packed["w1t"], packed["b1"], packed["w2t"], packed["vecf"])

    def resident_spec(a):
        nd = a.ndim
        return pl.BlockSpec(a.shape, lambda b, _nd=nd: (0,) * _nd)

    # Advisory cost estimate (review item): matmul flops + transcendentals.
    flops = 2 * B * L * S * F * (4 * F + 2 * S + 2 * HID)
    transcendentals = B * L * (nhead * S * S + 2 * S)
    bytes_accessed = 4 * (x.size + sum(a.size for a in weight_args) + B * S * F)

    out = pl.pallas_call(
        functools.partial(_encoder_kernel, nhead=nhead, nlayers=L),
        out_shape=jax.ShapeDtypeStruct((B, S, F), jnp.float32),
        grid=(B,),
        in_specs=[pl.BlockSpec((None, S, F), lambda b: (b, 0, 0))] +
                 [resident_spec(a) for a in weight_args],
        out_specs=pl.BlockSpec((None, S, F), lambda b: (b, 0, 0)),
        compiler_params=pltpu.CompilerParams(
            dimension_semantics=("parallel",)),
        cost_estimate=pl.CostEstimate(flops=flops,
                                      transcendentals=transcendentals,
                                      bytes_accessed=bytes_accessed),
    )(x, *weight_args)
    return out


# --------------------------------------------------------------------------- #
# Parameter init (PyTorch-style layouts) and pure-JAX reference.
# --------------------------------------------------------------------------- #
def init_layer_params(key, num_features, num_hidden):
    ks = jax.random.split(key, 8)
    F, H = num_features, num_hidden
    s = 0.05
    return {
        "wq": s * jax.random.normal(ks[0], (F, F), jnp.float32),
        "wk": s * jax.random.normal(ks[1], (F, F), jnp.float32),
        "wv": s * jax.random.normal(ks[2], (F, F), jnp.float32),
        "bq": 0.01 * jax.random.normal(ks[3], (1, F), jnp.float32),
        "bk": jnp.zeros((1, F), jnp.float32),
        "bv": jnp.zeros((1, F), jnp.float32),
        "wo": s * jax.random.normal(ks[4], (F, F), jnp.float32),
        "bo": jnp.zeros((1, F), jnp.float32),
        "ln1_w": jnp.ones((1, F), jnp.float32),
        "ln1_b": jnp.zeros((1, F), jnp.float32),
        "w1": s * jax.random.normal(ks[5], (H, F), jnp.float32),
        "b1": 0.01 * jax.random.normal(ks[6], (1, H), jnp.float32),
        "w2": s * jax.random.normal(ks[7], (F, H), jnp.float32),
        "b2": jnp.zeros((1, F), jnp.float32),
        "ln2_w": jnp.ones((1, F), jnp.float32),
        "ln2_b": jnp.zeros((1, F), jnp.float32),
    }


def _reference_forward(x, layer_params, nhead):
    """Pure-JAX mirror of nn.TransformerEncoder (post-norm, ReLU, eval mode)."""
    B, S, F = x.shape
    hd = F // nhead
    out = x.astype(jnp.float32)
    for p in layer_params:
        xs = out
        q = xs @ p["wq"].T + p["bq"]
        k = xs @ p["wk"].T + p["bk"]
        v = xs @ p["wv"].T + p["bv"]
        q = q.reshape(B, S, nhead, hd).transpose(0, 2, 1, 3)
        k = k.reshape(B, S, nhead, hd).transpose(0, 2, 1, 3)
        v = v.reshape(B, S, nhead, hd).transpose(0, 2, 1, 3)
        s = jnp.einsum("bhqd,bhkd->bhqk", q, k) / math.sqrt(hd)
        a = jax.nn.softmax(s, axis=-1)
        o = jnp.einsum("bhqk,bhkd->bhqd", a, v).transpose(0, 2, 1, 3).reshape(B, S, F)
        attn = o @ p["wo"].T + p["bo"]
        xs = xs + attn
        xs = ((xs - xs.mean(-1, keepdims=True))
              / jnp.sqrt(xs.var(-1, keepdims=True) + LN_EPS)) * p["ln1_w"] + p["ln1_b"]
        h = jnp.maximum(xs @ p["w1"].T + p["b1"], 0.0)
        h = h @ p["w2"].T + p["b2"]
        xs = xs + h
        xs = ((xs - xs.mean(-1, keepdims=True))
              / jnp.sqrt(xs.var(-1, keepdims=True) + LN_EPS)) * p["ln2_w"] + p["ln2_b"]
        out = xs
    return out


if __name__ == "__main__":
    # attention_cfg (synthetic): NUM_FEATURES=32, NUM_HEADS=4,
    # NUM_HIDDEN_FEATURES=64, NUM_LAYERS=2, DROPOUT=0.0 (inference).
    NUM_FEATURES = 32
    NUM_HEADS = 4
    NUM_HIDDEN_FEATURES = 64
    NUM_LAYERS = 2

    B, S = 2, 16  # batch, xyz points

    key = jax.random.PRNGKey(0)
    k_x, k_pos, k_w = jax.random.split(key, 3)
    point_features = jax.random.normal(k_x, (B, S, NUM_FEATURES), jnp.float32)
    positional_input = jax.random.normal(k_pos, (B, S, 3), jnp.float32)  # unused (pos_encoder=None)

    layer_keys = jax.random.split(k_w, NUM_LAYERS)
    layer_params = [
        init_layer_params(layer_keys[i], NUM_FEATURES, NUM_HIDDEN_FEATURES)
        for i in range(NUM_LAYERS)
    ]

    # Build-time packing, hoisted out of the per-call path (review item).
    packed = jax.tree_util.tree_map(jax.block_until_ready,
                                    pack_params(layer_params, NUM_HEADS))

    fwd = jax.jit(functools.partial(transformer_encoder_forward, nhead=NUM_HEADS))
    out = jax.block_until_ready(fwd(point_features, positional_input, packed))

    assert out.shape == (B, S, NUM_FEATURES)
    assert jnp.all(jnp.isfinite(out))

    # Numerical check against a pure-JAX reference.
    ref = jax.block_until_ready(_reference_forward(point_features, layer_params, NUM_HEADS))
    err = float(jnp.max(jnp.abs(out - ref)))
    assert jnp.allclose(out, ref, rtol=1e-2, atol=1e-2), f"max abs err {err}"

    print("KERNEL_OK")
</pallas_src>

<mosaic_0001>
module attributes {stable_mosaic.version = 11 : i64} {
  func.func @_encoder_kernel(%arg0: i32, %arg1: memref<1x16x32xf32, #tpu.memory_space<vmem>>, %arg2: memref<2x32x96xf32, #tpu.memory_space<vmem>>, %arg3: memref<2x1x96xf32, #tpu.memory_space<vmem>>, %arg4: memref<2x32x32xf32, #tpu.memory_space<vmem>>, %arg5: memref<2x32x64xf32, #tpu.memory_space<vmem>>, %arg6: memref<2x1x64xf32, #tpu.memory_space<vmem>>, %arg7: memref<2x64x32xf32, #tpu.memory_space<vmem>>, %arg8: memref<2x6x1x32xf32, #tpu.memory_space<vmem>>, %arg9: memref<1x16x32xf32, #tpu.memory_space<vmem>>) attributes {dimension_semantics = [#tpu.dimension_semantics<parallel>], iteration_bounds = array<i64: 2>, scalar_prefetch = 0 : i64, scratch_operands = 0 : i64, tpu.core_type = #tpu.core_type<tc>, window_params = [{transform_indices = @transform_0, window_bounds = array<i64: 1, 16, 32>}, {pipeline_mode = #tpu.pipeline_mode<synchronous>, transform_indices = @transform_1, window_bounds = array<i64: 2, 32, 96>}, {pipeline_mode = #tpu.pipeline_mode<synchronous>, transform_indices = @transform_2, window_bounds = array<i64: 2, 1, 96>}, {pipeline_mode = #tpu.pipeline_mode<synchronous>, transform_indices = @transform_3, window_bounds = array<i64: 2, 32, 32>}, {pipeline_mode = #tpu.pipeline_mode<synchronous>, transform_indices = @transform_4, window_bounds = array<i64: 2, 32, 64>}, {pipeline_mode = #tpu.pipeline_mode<synchronous>, transform_indices = @transform_5, window_bounds = array<i64: 2, 1, 64>}, {pipeline_mode = #tpu.pipeline_mode<synchronous>, transform_indices = @transform_6, window_bounds = array<i64: 2, 64, 32>}, {pipeline_mode = #tpu.pipeline_mode<synchronous>, transform_indices = @transform_7, window_bounds = array<i64: 2, 6, 1, 32>}, {transform_indices = @transform_8, window_bounds = array<i64: 1, 16, 32>}]} {
    %c0 = arith.constant 0 : index
    %c0_0 = arith.constant 0 : index
    %c0_1 = arith.constant 0 : index
    %0 = vector.load %arg1[%c0, %c0_0, %c0_1] : memref<1x16x32xf32, #tpu.memory_space<vmem>>, vector<1x16x32xf32>
    %1 = vector.shape_cast %0 : vector<1x16x32xf32> to vector<16x32xf32>
    %c0_2 = arith.constant 0 : index
    %c0_3 = arith.constant 0 : index
    %c0_4 = arith.constant 0 : index
    %2 = vector.load %arg2[%c0_2, %c0_3, %c0_4] : memref<2x32x96xf32, #tpu.memory_space<vmem>>, vector<1x32x96xf32>
    %3 = vector.shape_cast %2 : vector<1x32x96xf32> to vector<32x96xf32>
    %c0_5 = arith.constant 0 : index
    %c0_6 = arith.constant 0 : index
    %c0_7 = arith.constant 0 : index
    %4 = vector.load %arg3[%c0_5, %c0_6, %c0_7] : memref<2x1x96xf32, #tpu.memory_space<vmem>>, vector<1x1x96xf32>
    %5 = vector.shape_cast %4 : vector<1x1x96xf32> to vector<1x96xf32>
    %c0_8 = arith.constant 0 : index
    %c0_9 = arith.constant 0 : index
    %c0_10 = arith.constant 0 : index
    %6 = vector.load %arg4[%c0_8, %c0_9, %c0_10] : memref<2x32x32xf32, #tpu.memory_space<vmem>>, vector<1x32x32xf32>
    %7 = vector.shape_cast %6 : vector<1x32x32xf32> to vector<32x32xf32>
    %c0_11 = arith.constant 0 : index
    %c0_12 = arith.constant 0 : index
    %c0_13 = arith.constant 0 : index
    %8 = vector.load %arg5[%c0_11, %c0_12, %c0_13] : memref<2x32x64xf32, #tpu.memory_space<vmem>>, vector<1x32x64xf32>
    %9 = vector.shape_cast %8 : vector<1x32x64xf32> to vector<32x64xf32>
    %c0_14 = arith.constant 0 : index
    %c0_15 = arith.constant 0 : index
    %c0_16 = arith.constant 0 : index
    %10 = vector.load %arg6[%c0_14, %c0_15, %c0_16] : memref<2x1x64xf32, #tpu.memory_space<vmem>>, vector<1x1x64xf32>
    %11 = vector.shape_cast %10 : vector<1x1x64xf32> to vector<1x64xf32>
    %c0_17 = arith.constant 0 : index
    %c0_18 = arith.constant 0 : index
    %c0_19 = arith.constant 0 : index
    %12 = vector.load %arg7[%c0_17, %c0_18, %c0_19] : memref<2x64x32xf32, #tpu.memory_space<vmem>>, vector<1x64x32xf32>
    %13 = vector.shape_cast %12 : vector<1x64x32xf32> to vector<64x32xf32>
    %c0_20 = arith.constant 0 : index
    %c0_21 = arith.constant 0 : index
    %c0_22 = arith.constant 0 : index
    %c0_23 = arith.constant 0 : index
    %14 = vector.load %arg8[%c0_20, %c0_21, %c0_22, %c0_23] : memref<2x6x1x32xf32, #tpu.memory_space<vmem>>, vector<1x6x1x32xf32>
    %15 = vector.shape_cast %14 : vector<1x6x1x32xf32> to vector<6x1x32xf32>
    %16 = vector.extract_strided_slice %15 {offsets = [0, 0, 0], sizes = [1, 1, 32], strides = [1, 1, 1]} : vector<6x1x32xf32> to vector<1x1x32xf32>
    %17 = vector.shape_cast %16 : vector<1x1x32xf32> to vector<1x32xf32>
    %18 = vector.extract_strided_slice %15 {offsets = [1, 0, 0], sizes = [1, 1, 32], strides = [1, 1, 1]} : vector<6x1x32xf32> to vector<1x1x32xf32>
    %19 = vector.shape_cast %18 : vector<1x1x32xf32> to vector<1x32xf32>
    %20 = vector.extract_strided_slice %15 {offsets = [2, 0, 0], sizes = [1, 1, 32], strides = [1, 1, 1]} : vector<6x1x32xf32> to vector<1x1x32xf32>
    %21 = vector.shape_cast %20 : vector<1x1x32xf32> to vector<1x32xf32>
    %22 = vector.extract_strided_slice %15 {offsets = [3, 0, 0], sizes = [1, 1, 32], strides = [1, 1, 1]} : vector<6x1x32xf32> to vector<1x1x32xf32>
    %23 = vector.shape_cast %22 : vector<1x1x32xf32> to vector<1x32xf32>
    %24 = vector.extract_strided_slice %15 {offsets = [4, 0, 0], sizes = [1, 1, 32], strides = [1, 1, 1]} : vector<6x1x32xf32> to vector<1x1x32xf32>
    %25 = vector.shape_cast %24 : vector<1x1x32xf32> to vector<1x32xf32>
    %26 = vector.extract_strided_slice %15 {offsets = [5, 0, 0], sizes = [1, 1, 32], strides = [1, 1, 1]} : vector<6x1x32xf32> to vector<1x1x32xf32>
    %27 = vector.shape_cast %26 : vector<1x1x32xf32> to vector<1x32xf32>
    %cst = arith.constant dense<0.000000e+00> : vector<16x96xf32>
    %28 = tpu.matmul %1, %3, %cst {dimension_numbers = #tpu.dot_dimension_numbers<[1], [0], [0], [1], [0, 0, 1, 1], [], []>} : vector<16x32xf32>, vector<32x96xf32>, vector<16x96xf32> -> vector<16x96xf32>
    %29 = vector.broadcast %5 : vector<1x96xf32> to vector<16x96xf32>
    %30 = arith.addf %28, %29 : vector<16x96xf32>
    %31 = vector.extract_strided_slice %30 {offsets = [0, 0], sizes = [16, 32], strides = [1, 1]} : vector<16x96xf32> to vector<16x32xf32>
    %32 = vector.extract_strided_slice %30 {offsets = [0, 32], sizes = [16, 32], strides = [1, 1]} : vector<16x96xf32> to vector<16x32xf32>
    %33 = vector.extract_strided_slice %30 {offsets = [0, 64], sizes = [16, 32], strides = [1, 1]} : vector<16x96xf32> to vector<16x32xf32>
    %34 = vector.extract_strided_slice %31 {offsets = [0, 0], sizes = [16, 8], strides = [1, 1]} : vector<16x32xf32> to vector<16x8xf32>
    %35 = vector.extract_strided_slice %32 {offsets = [0, 0], sizes = [16, 8], strides = [1, 1]} : vector<16x32xf32> to vector<16x8xf32>
    %36 = vector.extract_strided_slice %33 {offsets = [0, 0], sizes = [16, 8], strides = [1, 1]} : vector<16x32xf32> to vector<16x8xf32>
    "tpu.trace_start"() <{level = 10 : i32, message = "qd,kd->qk"}> : () -> ()
    %cst_24 = arith.constant dense<0.000000e+00> : vector<16x16xf32>
    %37 = tpu.matmul %34, %35, %cst_24 {dimension_numbers = #tpu.dot_dimension_numbers<[1], [1], [0], [0], [0, 0, 1, 0], [], []>} : vector<16x8xf32>, vector<16x8xf32>, vector<16x16xf32> -> vector<16x16xf32>
    "tpu.trace_stop"() : () -> ()
    %cst_25 = arith.constant 0.353553385 : f32
    %38 = vector.broadcast %cst_25 : f32 to vector<16x16xf32>
    %39 = arith.mulf %37, %38 : vector<16x16xf32>
    %cst_26 = arith.constant dense<0xFF800000> : vector<16xf32>
    %40 = vector.multi_reduction <maximumf>, %39, %cst_26 [1] : vector<16x16xf32> to vector<16xf32>
    %41 = vector.shape_cast %40 : vector<16xf32> to vector<16x1xf32>
    %42 = vector.broadcast %41 : vector<16x1xf32> to vector<16x16xf32>
    %43 = arith.subf %39, %42 : vector<16x16xf32>
    %44 = math.exp %43 : vector<16x16xf32>
    %cst_27 = arith.constant dense<0.000000e+00> : vector<16xf32>
    %45 = vector.multi_reduction <add>, %44, %cst_27 [1] : vector<16x16xf32> to vector<16xf32>
    %46 = vector.shape_cast %45 : vector<16xf32> to vector<16x1xf32>
    %47 = vector.broadcast %46 : vector<16x1xf32> to vector<16x16xf32>
    %48 = arith.divf %44, %47 : vector<16x16xf32>
    %cst_28 = arith.constant dense<0.000000e+00> : vector<16x8xf32>
    %49 = tpu.matmul %48, %36, %cst_28 {dimension_numbers = #tpu.dot_dimension_numbers<[1], [0], [0], [1], [0, 0, 1, 1], [], []>} : vector<16x16xf32>, vector<16x8xf32>, vector<16x8xf32> -> vector<16x8xf32>
    %50 = vector.extract_strided_slice %31 {offsets = [0, 8], sizes = [16, 8], strides = [1, 1]} : vector<16x32xf32> to vector<16x8xf32>
    %51 = vector.extract_strided_slice %32 {offsets = [0, 8], sizes = [16, 8], strides = [1, 1]} : vector<16x32xf32> to vector<16x8xf32>
    %52 = vector.extract_strided_slice %33 {offsets = [0, 8], sizes = [16, 8], strides = [1, 1]} : vector<16x32xf32> to vector<16x8xf32>
    "tpu.trace_start"() <{level = 10 : i32, message = "qd,kd->qk"}> : () -> ()
    %cst_29 = arith.constant dense<0.000000e+00> : vector<16x16xf32>
    %53 = tpu.matmul %50, %51, %cst_29 {dimension_numbers = #tpu.dot_dimension_numbers<[1], [1], [0], [0], [0, 0, 1, 0], [], []>} : vector<16x8xf32>, vector<16x8xf32>, vector<16x16xf32> -> vector<16x16xf32>
    "tpu.trace_stop"() : () -> ()
    %cst_30 = arith.constant 0.353553385 : f32
    %54 = vector.broadcast %cst_30 : f32 to vector<16x16xf32>
    %55 = arith.mulf %53, %54 : vector<16x16xf32>
    %cst_31 = arith.constant dense<0xFF800000> : vector<16xf32>
    %56 = vector.multi_reduction <maximumf>, %55, %cst_31 [1] : vector<16x16xf32> to vector<16xf32>
    %57 = vector.shape_cast %56 : vector<16xf32> to vector<16x1xf32>
    %58 = vector.broadcast %57 : vector<16x1xf32> to vector<16x16xf32>
    %59 = arith.subf %55, %58 : vector<16x16xf32>
    %60 = math.exp %59 : vector<16x16xf32>
    %cst_32 = arith.constant dense<0.000000e+00> : vector<16xf32>
    %61 = vector.multi_reduction <add>, %60, %cst_32 [1] : vector<16x16xf32> to vector<16xf32>
    %62 = vector.shape_cast %61 : vector<16xf32> to vector<16x1xf32>
    %63 = vector.broadcast %62 : vector<16x1xf32> to vector<16x16xf32>
    %64 = arith.divf %60, %63 : vector<16x16xf32>
    %cst_33 = arith.constant dense<0.000000e+00> : vector<16x8xf32>
    %65 = tpu.matmul %64, %52, %cst_33 {dimension_numbers = #tpu.dot_dimension_numbers<[1], [0], [0], [1], [0, 0, 1, 1], [], []>} : vector<16x16xf32>, vector<16x8xf32>, vector<16x8xf32> -> vector<16x8xf32>
    %66 = vector.extract_strided_slice %31 {offsets = [0, 16], sizes = [16, 8], strides = [1, 1]} : vector<16x32xf32> to vector<16x8xf32>
    %67 = vector.extract_strided_slice %32 {offsets = [0, 16], sizes = [16, 8], strides = [1, 1]} : vector<16x32xf32> to vector<16x8xf32>
    %68 = vector.extract_strided_slice %33 {offsets = [0, 16], sizes = [16, 8], strides = [1, 1]} : vector<16x32xf32> to vector<16x8xf32>
    "tpu.trace_start"() <{level = 10 : i32, message = "qd,kd->qk"}> : () -> ()
    %cst_34 = arith.constant dense<0.000000e+00> : vector<16x16xf32>
    %69 = tpu.matmul %66, %67, %cst_34 {dimension_numbers = #tpu.dot_dimension_numbers<[1], [1], [0], [0], [0, 0, 1, 0], [], []>} : vector<16x8xf32>, vector<16x8xf32>, vector<16x16xf32> -> vector<16x16xf32>
    "tpu.trace_stop"() : () -> ()
    %cst_35 = arith.constant 0.353553385 : f32
    %70 = vector.broadcast %cst_35 : f32 to vector<16x16xf32>
    %71 = arith.mulf %69, %70 : vector<16x16xf32>
    %cst_36 = arith.constant dense<0xFF800000> : vector<16xf32>
    %72 = vector.multi_reduction <maximumf>, %71, %cst_36 [1] : vector<16x16xf32> to vector<16xf32>
    %73 = vector.shape_cast %72 : vector<16xf32> to vector<16x1xf32>
    %74 = vector.broadcast %73 : vector<16x1xf32> to vector<16x16xf32>
    %75 = arith.subf %71, %74 : vector<16x16xf32>
    %76 = math.exp %75 : vector<16x16xf32>
    %cst_37 = arith.constant dense<0.000000e+00> : vector<16xf32>
    %77 = vector.multi_reduction <add>, %76, %cst_37 [1] : vector<16x16xf32> to vector<16xf32>
    %78 = vector.shape_cast %77 : vector<16xf32> to vector<16x1xf32>
    %79 = vector.broadcast %78 : vector<16x1xf32> to vector<16x16xf32>
    %80 = arith.divf %76, %79 : vector<16x16xf32>
    %cst_38 = arith.constant dense<0.000000e+00> : vector<16x8xf32>
    %81 = tpu.matmul %80, %68, %cst_38 {dimension_numbers = #tpu.dot_dimension_numbers<[1], [0], [0], [1], [0, 0, 1, 1], [], []>} : vector<16x16xf32>, vector<16x8xf32>, vector<16x8xf32> -> vector<16x8xf32>
    %82 = vector.extract_strided_slice %31 {offsets = [0, 24], sizes = [16, 8], strides = [1, 1]} : vector<16x32xf32> to vector<16x8xf32>
    %83 = vector.extract_strided_slice %32 {offsets = [0, 24], sizes = [16, 8], strides = [1, 1]} : vector<16x32xf32> to vector<16x8xf32>
    %84 = vector.extract_strided_slice %33 {offsets = [0, 24], sizes = [16, 8], strides = [1, 1]} : vector<16x32xf32> to vector<16x8xf32>
    "tpu.trace_start"() <{level = 10 : i32, message = "qd,kd->qk"}> : () -> ()
    %cst_39 = arith.constant dense<0.000000e+00> : vector<16x16xf32>
    %85 = tpu.matmul %82, %83, %cst_39 {dimension_numbers = #tpu.dot_dimension_numbers<[1], [1], [0], [0], [0, 0, 1, 0], [], []>} : vector<16x8xf32>, vector<16x8xf32>, vector<16x16xf32> -> vector<16x16xf32>
    "tpu.trace_stop"() : () -> ()
    %cst_40 = arith.constant 0.353553385 : f32
    %86 = vector.broadcast %cst_40 : f32 to vector<16x16xf32>
    %87 = arith.mulf %85, %86 : vector<16x16xf32>
    %cst_41 = arith.constant dense<0xFF800000> : vector<16xf32>
    %88 = vector.multi_reduction <maximumf>, %87, %cst_41 [1] : vector<16x16xf32> to vector<16xf32>
    %89 = vector.shape_cast %88 : vector<16xf32> to vector<16x1xf32>
    %90 = vector.broadcast %89 : vector<16x1xf32> to vector<16x16xf32>
    %91 = arith.subf %87, %90 : vector<16x16xf32>
    %92 = math.exp %91 : vector<16x16xf32>
    %cst_42 = arith.constant dense<0.000000e+00> : vector<16xf32>
    %93 = vector.multi_reduction <add>, %92, %cst_42 [1] : vector<16x16xf32> to vector<16xf32>
    %94 = vector.shape_cast %93 : vector<16xf32> to vector<16x1xf32>
    %95 = vector.broadcast %94 : vector<16x1xf32> to vector<16x16xf32>
    %96 = arith.divf %92, %95 : vector<16x16xf32>
    %cst_43 = arith.constant dense<0.000000e+00> : vector<16x8xf32>
    %97 = tpu.matmul %96, %84, %cst_43 {dimension_numbers = #tpu.dot_dimension_numbers<[1], [0], [0], [1], [0, 0, 1, 1], [], []>} : vector<16x16xf32>, vector<16x8xf32>, vector<16x8xf32> -> vector<16x8xf32>
    %98 = tpu.concatenate %49, %65, %81, %97 in 1 : vector<16x8xf32>, vector<16x8xf32>, vector<16x8xf32>, vector<16x8xf32> -> vector<16x32xf32>
    %cst_44 = arith.constant dense<0.000000e+00> : vector<16x32xf32>
    %99 = tpu.matmul %98, %7, %cst_44 {dimension_numbers = #tpu.dot_dimension_numbers<[1], [0], [0], [1], [0, 0, 1, 1], [], []>} : vector<16x32xf32>, vector<32x32xf32>, vector<16x32xf32> -> vector<16x32xf32>
    %100 = vector.broadcast %17 : vector<1x32xf32> to vector<16x32xf32>
    %101 = arith.addf %99, %100 : vector<16x32xf32>
    %102 = arith.addf %1, %101 : vector<16x32xf32>
    %cst_45 = arith.constant dense<0.000000e+00> : vector<16xf32>
    %103 = vector.multi_reduction <add>, %102, %cst_45 [1] : vector<16x32xf32> to vector<16xf32>
    %104 = vector.shape_cast %103 : vector<16xf32> to vector<16x1xf32>
    %cst_46 = arith.constant 3.200000e+01 : f32
    %105 = vector.broadcast %cst_46 : f32 to vector<16x1xf32>
    %106 = arith.divf %104, %105 : vector<16x1xf32>
    %107 = vector.broadcast %106 : vector<16x1xf32> to vector<16x32xf32>
    %108 = arith.subf %102, %107 : vector<16x32xf32>
    %109 = vector.broadcast %106 : vector<16x1xf32> to vector<16x32xf32>
    %110 = arith.subf %102, %109 : vector<16x32xf32>
    %111 = arith.mulf %108, %110 : vector<16x32xf32>
    %cst_47 = arith.constant dense<0.000000e+00> : vector<16xf32>
    %112 = vector.multi_reduction <add>, %111, %cst_47 [1] : vector<16x32xf32> to vector<16xf32>
    %113 = vector.shape_cast %112 : vector<16xf32> to vector<16x1xf32>
    %cst_48 = arith.constant 3.200000e+01 : f32
    %114 = vector.broadcast %cst_48 : f32 to vector<16x1xf32>
    %115 = arith.divf %113, %114 : vector<16x1xf32>
    %116 = vector.broadcast %106 : vector<16x1xf32> to vector<16x32xf32>
    %117 = arith.subf %102, %116 : vector<16x32xf32>
    %cst_49 = arith.constant 9.99999974E-6 : f32
    %118 = vector.broadcast %cst_49 : f32 to vector<16x1xf32>
    %119 = arith.addf %115, %118 : vector<16x1xf32>
    %120 = math.rsqrt %119 : vector<16x1xf32>
    %121 = vector.broadcast %120 : vector<16x1xf32> to vector<16x32xf32>
    %122 = arith.mulf %117, %121 : vector<16x32xf32>
    %123 = vector.broadcast %19 : vector<1x32xf32> to vector<16x32xf32>
    %124 = arith.mulf %122, %123 : vector<16x32xf32>
    %125 = vector.broadcast %21 : vector<1x32xf32> to vector<16x32xf32>
    %126 = arith.addf %124, %125 : vector<16x32xf32>
    %cst_50 = arith.constant dense<0.000000e+00> : vector<16x64xf32>
    %127 = tpu.matmul %126, %9, %cst_50 {dimension_numbers = #tpu.dot_dimension_numbers<[1], [0], [0], [1], [0, 0, 1, 1], [], []>} : vector<16x32xf32>, vector<32x64xf32>, vector<16x64xf32> -> vector<16x64xf32>
    %128 = vector.broadcast %11 : vector<1x64xf32> to vector<16x64xf32>
    %129 = arith.addf %127, %128 : vector<16x64xf32>
    %cst_51 = arith.constant 0.000000e+00 : f32
    %130 = vector.broadcast %cst_51 : f32 to vector<16x64xf32>
    %131 = arith.maximumf %129, %130 : vector<16x64xf32>
    %cst_52 = arith.constant dense<0.000000e+00> : vector<16x32xf32>
    %132 = tpu.matmul %131, %13, %cst_52 {dimension_numbers = #tpu.dot_dimension_numbers<[1], [0], [0], [1], [0, 0, 1, 1], [], []>} : vector<16x64xf32>, vector<64x32xf32>, vector<16x32xf32> -> vector<16x32xf32>
    %133 = vector.broadcast %27 : vector<1x32xf32> to vector<16x32xf32>
    %134 = arith.addf %132, %133 : vector<16x32xf32>
    %135 = arith.addf %126, %134 : vector<16x32xf32>
    %cst_53 = arith.constant dense<0.000000e+00> : vector<16xf32>
    %136 = vector.multi_reduction <add>, %135, %cst_53 [1] : vector<16x32xf32> to vector<16xf32>
    %137 = vector.shape_cast %136 : vector<16xf32> to vector<16x1xf32>
    %cst_54 = arith.constant 3.200000e+01 : f32
    %138 = vector.broadcast %cst_54 : f32 to vector<16x1xf32>
    %139 = arith.divf %137, %138 : vector<16x1xf32>
    %140 = vector.broadcast %139 : vector<16x1xf32> to vector<16x32xf32>
    %141 = arith.subf %135, %140 : vector<16x32xf32>
    %142 = vector.broadcast %139 : vector<16x1xf32> to vector<16x32xf32>
    %143 = arith.subf %135, %142 : vector<16x32xf32>
    %144 = arith.mulf %141, %143 : vector<16x32xf32>
    %cst_55 = arith.constant dense<0.000000e+00> : vector<16xf32>
    %145 = vector.multi_reduction <add>, %144, %cst_55 [1] : vector<16x32xf32> to vector<16xf32>
    %146 = vector.shape_cast %145 : vector<16xf32> to vector<16x1xf32>
    %cst_56 = arith.constant 3.200000e+01 : f32
    %147 = vector.broadcast %cst_56 : f32 to vector<16x1xf32>
    %148 = arith.divf %146, %147 : vector<16x1xf32>
    %149 = vector.broadcast %139 : vector<16x1xf32> to vector<16x32xf32>
    %150 = arith.subf %135, %149 : vector<16x32xf32>
    %cst_57 = arith.constant 9.99999974E-6 : f32
    %151 = vector.broadcast %cst_57 : f32 to vector<16x1xf32>
    %152 = arith.addf %148, %151 : vector<16x1xf32>
    %153 = math.rsqrt %152 : vector<16x1xf32>
    %154 = vector.broadcast %153 : vector<16x1xf32> to vector<16x32xf32>
    %155 = arith.mulf %150, %154 : vector<16x32xf32>
    %156 = vector.broadcast %23 : vector<1x32xf32> to vector<16x32xf32>
    %157 = arith.mulf %155, %156 : vector<16x32xf32>
    %158 = vector.broadcast %25 : vector<1x32xf32> to vector<16x32xf32>
    %159 = arith.addf %157, %158 : vector<16x32xf32>
    %c1 = arith.constant 1 : index
    %c0_58 = arith.constant 0 : index
    %c0_59 = arith.constant 0 : index
    %160 = vector.load %arg2[%c1, %c0_58, %c0_59] : memref<2x32x96xf32, #tpu.memory_space<vmem>>, vector<1x32x96xf32>
    %161 = vector.shape_cast %160 : vector<1x32x96xf32> to vector<32x96xf32>
    %c1_60 = arith.constant 1 : index
    %c0_61 = arith.constant 0 : index
    %c0_62 = arith.constant 0 : index
    %162 = vector.load %arg3[%c1_60, %c0_61, %c0_62] : memref<2x1x96xf32, #tpu.memory_space<vmem>>, vector<1x1x96xf32>
    %163 = vector.shape_cast %162 : vector<1x1x96xf32> to vector<1x96xf32>
    %c1_63 = arith.constant 1 : index
    %c0_64 = arith.constant 0 : index
    %c0_65 = arith.constant 0 : index
    %164 = vector.load %arg4[%c1_63, %c0_64, %c0_65] : memref<2x32x32xf32, #tpu.memory_space<vmem>>, vector<1x32x32xf32>
    %165 = vector.shape_cast %164 : vector<1x32x32xf32> to vector<32x32xf32>
    %c1_66 = arith.constant 1 : index
    %c0_67 = arith.constant 0 : index
    %c0_68 = arith.constant 0 : index
    %166 = vector.load %arg5[%c1_66, %c0_67, %c0_68] : memref<2x32x64xf32, #tpu.memory_space<vmem>>, vector<1x32x64xf32>
    %167 = vector.shape_cast %166 : vector<1x32x64xf32> to vector<32x64xf32>
    %c1_69 = arith.constant 1 : index
    %c0_70 = arith.constant 0 : index
    %c0_71 = arith.constant 0 : index
    %168 = vector.load %arg6[%c1_69, %c0_70, %c0_71] : memref<2x1x64xf32, #tpu.memory_space<vmem>>, vector<1x1x64xf32>
    %169 = vector.shape_cast %168 : vector<1x1x64xf32> to vector<1x64xf32>
    %c1_72 = arith.constant 1 : index
    %c0_73 = arith.constant 0 : index
    %c0_74 = arith.constant 0 : index
    %170 = vector.load %arg7[%c1_72, %c0_73, %c0_74] : memref<2x64x32xf32, #tpu.memory_space<vmem>>, vector<1x64x32xf32>
    %171 = vector.shape_cast %170 : vector<1x64x32xf32> to vector<64x32xf32>
    %c1_75 = arith.constant 1 : index
    %c0_76 = arith.constant 0 : index
    %c0_77 = arith.constant 0 : index
    %c0_78 = arith.constant 0 : index
    %172 = vector.load %arg8[%c1_75, %c0_76, %c0_77, %c0_78] : memref<2x6x1x32xf32, #tpu.memory_space<vmem>>, vector<1x6x1x32xf32>
    %173 = vector.shape_cast %172 : vector<1x6x1x32xf32> to vector<6x1x32xf32>
    %174 = vector.extract_strided_slice %173 {offsets = [0, 0, 0], sizes = [1, 1, 32], strides = [1, 1, 1]} : vector<6x1x32xf32> to vector<1x1x32xf32>
    %175 = vector.shape_cast %174 : vector<1x1x32xf32> to vector<1x32xf32>
    %176 = vector.extract_strided_slice %173 {offsets = [1, 0, 0], sizes = [1, 1, 32], strides = [1, 1, 1]} : vector<6x1x32xf32> to vector<1x1x32xf32>
    %177 = vector.shape_cast %176 : vector<1x1x32xf32> to vector<1x32xf32>
    %178 = vector.extract_strided_slice %173 {offsets = [2, 0, 0], sizes = [1, 1, 32], strides = [1, 1, 1]} : vector<6x1x32xf32> to vector<1x1x32xf32>
    %179 = vector.shape_cast %178 : vector<1x1x32xf32> to vector<1x32xf32>
    %180 = vector.extract_strided_slice %173 {offsets = [3, 0, 0], sizes = [1, 1, 32], strides = [1, 1, 1]} : vector<6x1x32xf32> to vector<1x1x32xf32>
    %181 = vector.shape_cast %180 : vector<1x1x32xf32> to vector<1x32xf32>
    %182 = vector.extract_strided_slice %173 {offsets = [4, 0, 0], sizes = [1, 1, 32], strides = [1, 1, 1]} : vector<6x1x32xf32> to vector<1x1x32xf32>
    %183 = vector.shape_cast %182 : vector<1x1x32xf32> to vector<1x32xf32>
    %184 = vector.extract_strided_slice %173 {offsets = [5, 0, 0], sizes = [1, 1, 32], strides = [1, 1, 1]} : vector<6x1x32xf32> to vector<1x1x32xf32>
    %185 = vector.shape_cast %184 : vector<1x1x32xf32> to vector<1x32xf32>
    %cst_79 = arith.constant dense<0.000000e+00> : vector<16x96xf32>
    %186 = tpu.matmul %159, %161, %cst_79 {dimension_numbers = #tpu.dot_dimension_numbers<[1], [0], [0], [1], [0, 0, 1, 1], [], []>} : vector<16x32xf32>, vector<32x96xf32>, vector<16x96xf32> -> vector<16x96xf32>
    %187 = vector.broadcast %163 : vector<1x96xf32> to vector<16x96xf32>
    %188 = arith.addf %186, %187 : vector<16x96xf32>
    %189 = vector.extract_strided_slice %188 {offsets = [0, 0], sizes = [16, 32], strides = [1, 1]} : vector<16x96xf32> to vector<16x32xf32>
    %190 = vector.extract_strided_slice %188 {offsets = [0, 32], sizes = [16, 32], strides = [1, 1]} : vector<16x96xf32> to vector<16x32xf32>
    %191 = vector.extract_strided_slice %188 {offsets = [0, 64], sizes = [16, 32], strides = [1, 1]} : vector<16x96xf32> to vector<16x32xf32>
    %192 = vector.extract_strided_slice %189 {offsets = [0, 0], sizes = [16, 8], strides = [1, 1]} : vector<16x32xf32> to vector<16x8xf32>
    %193 = vector.extract_strided_slice %190 {offsets = [0, 0], sizes = [16, 8], strides = [1, 1]} : vector<16x32xf32> to vector<16x8xf32>
    %194 = vector.extract_strided_slice %191 {offsets = [0, 0], sizes = [16, 8], strides = [1, 1]} : vector<16x32xf32> to vector<16x8xf32>
    "tpu.trace_start"() <{level = 10 : i32, message = "qd,kd->qk"}> : () -> ()
    %cst_80 = arith.constant dense<0.000000e+00> : vector<16x16xf32>
    %195 = tpu.matmul %192, %193, %cst_80 {dimension_numbers = #tpu.dot_dimension_numbers<[1], [1], [0], [0], [0, 0, 1, 0], [], []>} : vector<16x8xf32>, vector<16x8xf32>, vector<16x16xf32> -> vector<16x16xf32>
    "tpu.trace_stop"() : () -> ()
    %cst_81 = arith.constant 0.353553385 : f32
    %196 = vector.broadcast %cst_81 : f32 to vector<16x16xf32>
    %197 = arith.mulf %195, %196 : vector<16x16xf32>
    %cst_82 = arith.constant dense<0xFF800000> : vector<16xf32>
    %198 = vector.multi_reduction <maximumf>, %197, %cst_82 [1] : vector<16x16xf32> to vector<16xf32>
    %199 = vector.shape_cast %198 : vector<16xf32> to vector<16x1xf32>
    %200 = vector.broadcast %199 : vector<16x1xf32> to vector<16x16xf32>
    %201 = arith.subf %197, %200 : vector<16x16xf32>
    %202 = math.exp %201 : vector<16x16xf32>
    %cst_83 = arith.constant dense<0.000000e+00> : vector<16xf32>
    %203 = vector.multi_reduction <add>, %202, %cst_83 [1] : vector<16x16xf32> to vector<16xf32>
    %204 = vector.shape_cast %203 : vector<16xf32> to vector<16x1xf32>
    %205 = vector.broadcast %204 : vector<16x1xf32> to vector<16x16xf32>
    %206 = arith.divf %202, %205 : vector<16x16xf32>
    %cst_84 = arith.constant dense<0.000000e+00> : vector<16x8xf32>
    %207 = tpu.matmul %206, %194, %cst_84 {dimension_numbers = #tpu.dot_dimension_numbers<[1], [0], [0], [1], [0, 0, 1, 1], [], []>} : vector<16x16xf32>, vector<16x8xf32>, vector<16x8xf32> -> vector<16x8xf32>
    %208 = vector.extract_strided_slice %189 {offsets = [0, 8], sizes = [16, 8], strides = [1, 1]} : vector<16x32xf32> to vector<16x8xf32>
    %209 = vector.extract_strided_slice %190 {offsets = [0, 8], sizes = [16, 8], strides = [1, 1]} : vector<16x32xf32> to vector<16x8xf32>
    %210 = vector.extract_strided_slice %191 {offsets = [0, 8], sizes = [16, 8], strides = [1, 1]} : vector<16x32xf32> to vector<16x8xf32>
    "tpu.trace_start"() <{level = 10 : i32, message = "qd,kd->qk"}> : () -> ()
    %cst_85 = arith.constant dense<0.000000e+00> : vector<16x16xf32>
    %211 = tpu.matmul %208, %209, %cst_85 {dimension_numbers = #tpu.dot_dimension_numbers<[1], [1], [0], [0], [0, 0, 1, 0], [], []>} : vector<16x8xf32>, vector<16x8xf32>, vector<16x16xf32> -> vector<16x16xf32>
    "tpu.trace_stop"() : () -> ()
    %cst_86 = arith.constant 0.353553385 : f32
    %212 = vector.broadcast %cst_86 : f32 to vector<16x16xf32>
    %213 = arith.mulf %211, %212 : vector<16x16xf32>
    %cst_87 = arith.constant dense<0xFF800000> : vector<16xf32>
    %214 = vector.multi_reduction <maximumf>, %213, %cst_87 [1] : vector<16x16xf32> to vector<16xf32>
    %215 = vector.shape_cast %214 : vector<16xf32> to vector<16x1xf32>
    %216 = vector.broadcast %215 : vector<16x1xf32> to vector<16x16xf32>
    %217 = arith.subf %213, %216 : vector<16x16xf32>
    %218 = math.exp %217 : vector<16x16xf32>
    %cst_88 = arith.constant dense<0.000000e+00> : vector<16xf32>
    %219 = vector.multi_reduction <add>, %218, %cst_88 [1] : vector<16x16xf32> to vector<16xf32>
    %220 = vector.shape_cast %219 : vector<16xf32> to vector<16x1xf32>
    %221 = vector.broadcast %220 : vector<16x1xf32> to vector<16x16xf32>
    %222 = arith.divf %218, %221 : vector<16x16xf32>
    %cst_89 = arith.constant dense<0.000000e+00> : vector<16x8xf32>
    %223 = tpu.matmul %222, %210, %cst_89 {dimension_numbers = #tpu.dot_dimension_numbers<[1], [0], [0], [1], [0, 0, 1, 1], [], []>} : vector<16x16xf32>, vector<16x8xf32>, vector<16x8xf32> -> vector<16x8xf32>
    %224 = vector.extract_strided_slice %189 {offsets = [0, 16], sizes = [16, 8], strides = [1, 1]} : vector<16x32xf32> to vector<16x8xf32>
    %225 = vector.extract_strided_slice %190 {offsets = [0, 16], sizes = [16, 8], strides = [1, 1]} : vector<16x32xf32> to vector<16x8xf32>
    %226 = vector.extract_strided_slice %191 {offsets = [0, 16], sizes = [16, 8], strides = [1, 1]} : vector<16x32xf32> to vector<16x8xf32>
    "tpu.trace_start"() <{level = 10 : i32, message = "qd,kd->qk"}> : () -> ()
    %cst_90 = arith.constant dense<0.000000e+00> : vector<16x16xf32>
    %227 = tpu.matmul %224, %225, %cst_90 {dimension_numbers = #tpu.dot_dimension_numbers<[1], [1], [0], [0], [0, 0, 1, 0], [], []>} : vector<16x8xf32>, vector<16x8xf32>, vector<16x16xf32> -> vector<16x16xf32>
    "tpu.trace_stop"() : () -> ()
    %cst_91 = arith.constant 0.353553385 : f32
    %228 = vector.broadcast %cst_91 : f32 to vector<16x16xf32>
    %229 = arith.mulf %227, %228 : vector<16x16xf32>
    %cst_92 = arith.constant dense<0xFF800000> : vector<16xf32>
    %230 = vector.multi_reduction <maximumf>, %229, %cst_92 [1] : vector<16x16xf32> to vector<16xf32>
    %231 = vector.shape_cast %230 : vector<16xf32> to vector<16x1xf32>
    %232 = vector.broadcast %231 : vector<16x1xf32> to vector<16x16xf32>
    %233 = arith.subf %229, %232 : vector<16x16xf32>
    %234 = math.exp %233 : vector<16x16xf32>
    %cst_93 = arith.constant dense<0.000000e+00> : vector<16xf32>
    %235 = vector.multi_reduction <add>, %234, %cst_93 [1] : vector<16x16xf32> to vector<16xf32>
    %236 = vector.shape_cast %235 : vector<16xf32> to vector<16x1xf32>
    %237 = vector.broadcast %236 : vector<16x1xf32> to vector<16x16xf32>
    %238 = arith.divf %234, %237 : vector<16x16xf32>
    %cst_94 = arith.constant dense<0.000000e+00> : vector<16x8xf32>
    %239 = tpu.matmul %238, %226, %cst_94 {dimension_numbers = #tpu.dot_dimension_numbers<[1], [0], [0], [1], [0, 0, 1, 1], [], []>} : vector<16x16xf32>, vector<16x8xf32>, vector<16x8xf32> -> vector<16x8xf32>
    %240 = vector.extract_strided_slice %189 {offsets = [0, 24], sizes = [16, 8], strides = [1, 1]} : vector<16x32xf32> to vector<16x8xf32>
    %241 = vector.extract_strided_slice %190 {offsets = [0, 24], sizes = [16, 8], strides = [1, 1]} : vector<16x32xf32> to vector<16x8xf32>
    %242 = vector.extract_strided_slice %191 {offsets = [0, 24], sizes = [16, 8], strides = [1, 1]} : vector<16x32xf32> to vector<16x8xf32>
    "tpu.trace_start"() <{level = 10 : i32, message = "qd,kd->qk"}> : () -> ()
    %cst_95 = arith.constant dense<0.000000e+00> : vector<16x16xf32>
    %243 = tpu.matmul %240, %241, %cst_95 {dimension_numbers = #tpu.dot_dimension_numbers<[1], [1], [0], [0], [0, 0, 1, 0], [], []>} : vector<16x8xf32>, vector<16x8xf32>, vector<16x16xf32> -> vector<16x16xf32>
    "tpu.trace_stop"() : () -> ()
    %cst_96 = arith.constant 0.353553385 : f32
    %244 = vector.broadcast %cst_96 : f32 to vector<16x16xf32>
    %245 = arith.mulf %243, %244 : vector<16x16xf32>
    %cst_97 = arith.constant dense<0xFF800000> : vector<16xf32>
    %246 = vector.multi_reduction <maximumf>, %245, %cst_97 [1] : vector<16x16xf32> to vector<16xf32>
    %247 = vector.shape_cast %246 : vector<16xf32> to vector<16x1xf32>
    %248 = vector.broadcast %247 : vector<16x1xf32> to vector<16x16xf32>
    %249 = arith.subf %245, %248 : vector<16x16xf32>
    %250 = math.exp %249 : vector<16x16xf32>
    %cst_98 = arith.constant dense<0.000000e+00> : vector<16xf32>
    %251 = vector.multi_reduction <add>, %250, %cst_98 [1] : vector<16x16xf32> to vector<16xf32>
    %252 = vector.shape_cast %251 : vector<16xf32> to vector<16x1xf32>
    %253 = vector.broadcast %252 : vector<16x1xf32> to vector<16x16xf32>
    %254 = arith.divf %250, %253 : vector<16x16xf32>
    %cst_99 = arith.constant dense<0.000000e+00> : vector<16x8xf32>
    %255 = tpu.matmul %254, %242, %cst_99 {dimension_numbers = #tpu.dot_dimension_numbers<[1], [0], [0], [1], [0, 0, 1, 1], [], []>} : vector<16x16xf32>, vector<16x8xf32>, vector<16x8xf32> -> vector<16x8xf32>
    %256 = tpu.concatenate %207, %223, %239, %255 in 1 : vector<16x8xf32>, vector<16x8xf32>, vector<16x8xf32>, vector<16x8xf32> -> vector<16x32xf32>
    %cst_100 = arith.constant dense<0.000000e+00> : vector<16x32xf32>
    %257 = tpu.matmul %256, %165, %cst_100 {dimension_numbers = #tpu.dot_dimension_numbers<[1], [0], [0], [1], [0, 0, 1, 1], [], []>} : vector<16x32xf32>, vector<32x32xf32>, vector<16x32xf32> -> vector<16x32xf32>
    %258 = vector.broadcast %175 : vector<1x32xf32> to vector<16x32xf32>
    %259 = arith.addf %257, %258 : vector<16x32xf32>
    %260 = arith.addf %159, %259 : vector<16x32xf32>
    %cst_101 = arith.constant dense<0.000000e+00> : vector<16xf32>
    %261 = vector.multi_reduction <add>, %260, %cst_101 [1] : vector<16x32xf32> to vector<16xf32>
    %262 = vector.shape_cast %261 : vector<16xf32> to vector<16x1xf32>
    %cst_102 = arith.constant 3.200000e+01 : f32
    %263 = vector.broadcast %cst_102 : f32 to vector<16x1xf32>
    %264 = arith.divf %262, %263 : vector<16x1xf32>
    %265 = vector.broadcast %264 : vector<16x1xf32> to vector<16x32xf32>
    %266 = arith.subf %260, %265 : vector<16x32xf32>
    %267 = vector.broadcast %264 : vector<16x1xf32> to vector<16x32xf32>
    %268 = arith.subf %260, %267 : vector<16x32xf32>
    %269 = arith.mulf %266, %268 : vector<16x32xf32>
    %cst_103 = arith.constant dense<0.000000e+00> : vector<16xf32>
    %270 = vector.multi_reduction <add>, %269, %cst_103 [1] : vector<16x32xf32> to vector<16xf32>
    %271 = vector.shape_cast %270 : vector<16xf32> to vector<16x1xf32>
    %cst_104 = arith.constant 3.200000e+01 : f32
    %272 = vector.broadcast %cst_104 : f32 to vector<16x1xf32>
    %273 = arith.divf %271, %272 : vector<16x1xf32>
    %274 = vector.broadcast %264 : vector<16x1xf32> to vector<16x32xf32>
    %275 = arith.subf %260, %274 : vector<16x32xf32>
    %cst_105 = arith.constant 9.99999974E-6 : f32
    %276 = vector.broadcast %cst_105 : f32 to vector<16x1xf32>
    %277 = arith.addf %273, %276 : vector<16x1xf32>
    %278 = math.rsqrt %277 : vector<16x1xf32>
    %279 = vector.broadcast %278 : vector<16x1xf32> to vector<16x32xf32>
    %280 = arith.mulf %275, %279 : vector<16x32xf32>
    %281 = vector.broadcast %177 : vector<1x32xf32> to vector<16x32xf32>
    %282 = arith.mulf %280, %281 : vector<16x32xf32>
    %283 = vector.broadcast %179 : vector<1x32xf32> to vector<16x32xf32>
    %284 = arith.addf %282, %283 : vector<16x32xf32>
    %cst_106 = arith.constant dense<0.000000e+00> : vector<16x64xf32>
    %285 = tpu.matmul %284, %167, %cst_106 {dimension_numbers = #tpu.dot_dimension_numbers<[1], [0], [0], [1], [0, 0, 1, 1], [], []>} : vector<16x32xf32>, vector<32x64xf32>, vector<16x64xf32> -> vector<16x64xf32>
    %286 = vector.broadcast %169 : vector<1x64xf32> to vector<16x64xf32>
    %287 = arith.addf %285, %286 : vector<16x64xf32>
    %cst_107 = arith.constant 0.000000e+00 : f32
    %288 = vector.broadcast %cst_107 : f32 to vector<16x64xf32>
    %289 = arith.maximumf %287, %288 : vector<16x64xf32>
    %cst_108 = arith.constant dense<0.000000e+00> : vector<16x32xf32>
    %290 = tpu.matmul %289, %171, %cst_108 {dimension_numbers = #tpu.dot_dimension_numbers<[1], [0], [0], [1], [0, 0, 1, 1], [], []>} : vector<16x64xf32>, vector<64x32xf32>, vector<16x32xf32> -> vector<16x32xf32>
    %291 = vector.broadcast %185 : vector<1x32xf32> to vector<16x32xf32>
    %292 = arith.addf %290, %291 : vector<16x32xf32>
    %293 = arith.addf %284, %292 : vector<16x32xf32>
    %cst_109 = arith.constant dense<0.000000e+00> : vector<16xf32>
    %294 = vector.multi_reduction <add>, %293, %cst_109 [1] : vector<16x32xf32> to vector<16xf32>
    %295 = vector.shape_cast %294 : vector<16xf32> to vector<16x1xf32>
    %cst_110 = arith.constant 3.200000e+01 : f32
    %296 = vector.broadcast %cst_110 : f32 to vector<16x1xf32>
    %297 = arith.divf %295, %296 : vector<16x1xf32>
    %298 = vector.broadcast %297 : vector<16x1xf32> to vector<16x32xf32>
    %299 = arith.subf %293, %298 : vector<16x32xf32>
    %300 = vector.broadcast %297 : vector<16x1xf32> to vector<16x32xf32>
    %301 = arith.subf %293, %300 : vector<16x32xf32>
    %302 = arith.mulf %299, %301 : vector<16x32xf32>
    %cst_111 = arith.constant dense<0.000000e+00> : vector<16xf32>
    %303 = vector.multi_reduction <add>, %302, %cst_111 [1] : vector<16x32xf32> to vector<16xf32>
    %304 = vector.shape_cast %303 : vector<16xf32> to vector<16x1xf32>
    %cst_112 = arith.constant 3.200000e+01 : f32
    %305 = vector.broadcast %cst_112 : f32 to vector<16x1xf32>
    %306 = arith.divf %304, %305 : vector<16x1xf32>
    %307 = vector.broadcast %297 : vector<16x1xf32> to vector<16x32xf32>
    %308 = arith.subf %293, %307 : vector<16x32xf32>
    %cst_113 = arith.constant 9.99999974E-6 : f32
    %309 = vector.broadcast %cst_113 : f32 to vector<16x1xf32>
    %310 = arith.addf %306, %309 : vector<16x1xf32>
    %311 = math.rsqrt %310 : vector<16x1xf32>
    %312 = vector.broadcast %311 : vector<16x1xf32> to vector<16x32xf32>
    %313 = arith.mulf %308, %312 : vector<16x32xf32>
    %314 = vector.broadcast %181 : vector<1x32xf32> to vector<16x32xf32>
    %315 = arith.mulf %313, %314 : vector<16x32xf32>
    %316 = vector.broadcast %183 : vector<1x32xf32> to vector<16x32xf32>
    %317 = arith.addf %315, %316 : vector<16x32xf32>
    %c0_114 = arith.constant 0 : index
    %c0_115 = arith.constant 0 : index
    %c0_116 = arith.constant 0 : index
    %318 = vector.load %arg9[%c0_114, %c0_115, %c0_116] : memref<1x16x32xf32, #tpu.memory_space<vmem>>, vector<1x16x32xf32>
    %319 = vector.shape_cast %318 : vector<1x16x32xf32> to vector<16x32xf32>
    %320 = vector.shape_cast %317 : vector<16x32xf32> to vector<1x16x32xf32>
    tpu.vector_store %arg9[%c0_114, %c0_115, %c0_116], %320 {strides = array<i32>} : memref<1x16x32xf32, #tpu.memory_space<vmem>>, vector<1x16x32xf32>,
    return
  }
  func.func @transform_0(%arg0: i32) -> (i32, i32, i32) {
    %c0_i32 = arith.constant 0 : i32
    %c0_i32_0 = arith.constant 0 : i32
    %c0_i32_1 = arith.constant 0 : i32
    return %arg0, %c0_i32, %c0_i32_0 : i32, i32, i32
  }
  func.func @transform_1(%arg0: i32) -> (i32, i32, i32) {
    %c0_i32 = arith.constant 0 : i32
    %c0_i32_0 = arith.constant 0 : i32
    %c0_i32_1 = arith.constant 0 : i32
    %c0_i32_2 = arith.constant 0 : i32
    return %c0_i32, %c0_i32_0, %c0_i32_1 : i32, i32, i32
  }
  func.func @transform_2(%arg0: i32) -> (i32, i32, i32) {
    %c0_i32 = arith.constant 0 : i32
    %c0_i32_0 = arith.constant 0 : i32
    %c0_i32_1 = arith.constant 0 : i32
    %c0_i32_2 = arith.constant 0 : i32
    return %c0_i32, %c0_i32_0, %c0_i32_1 : i32, i32, i32
  }
  func.func @transform_3(%arg0: i32) -> (i32, i32, i32) {
    %c0_i32 = arith.constant 0 : i32
    %c0_i32_0 = arith.constant 0 : i32
    %c0_i32_1 = arith.constant 0 : i32
    %c0_i32_2 = arith.constant 0 : i32
    return %c0_i32, %c0_i32_0, %c0_i32_1 : i32, i32, i32
  }
  func.func @transform_4(%arg0: i32) -> (i32, i32, i32) {
    %c0_i32 = arith.constant 0 : i32
    %c0_i32_0 = arith.constant 0 : i32
    %c0_i32_1 = arith.constant 0 : i32
    %c0_i32_2 = arith.constant 0 : i32
    return %c0_i32, %c0_i32_0, %c0_i32_1 : i32, i32, i32
  }
  func.func @transform_5(%arg0: i32) -> (i32, i32, i32) {
    %c0_i32 = arith.constant 0 : i32
    %c0_i32_0 = arith.constant 0 : i32
    %c0_i32_1 = arith.constant 0 : i32
    %c0_i32_2 = arith.constant 0 : i32
    return %c0_i32, %c0_i32_0, %c0_i32_1 : i32, i32, i32
  }
  func.func @transform_6(%arg0: i32) -> (i32, i32, i32) {
    %c0_i32 = arith.constant 0 : i32
    %c0_i32_0 = arith.constant 0 : i32
    %c0_i32_1 = arith.constant 0 : i32
    %c0_i32_2 = arith.constant 0 : i32
    return %c0_i32, %c0_i32_0, %c0_i32_1 : i32, i32, i32
  }
  func.func @transform_7(%arg0: i32) -> (i32, i32, i32, i32) {
    %c0_i32 = arith.constant 0 : i32
    %c0_i32_0 = arith.constant 0 : i32
    %c0_i32_1 = arith.constant 0 : i32
    %c0_i32_2 = arith.constant 0 : i32
    %c0_i32_3 = arith.constant 0 : i32
    return %c0_i32, %c0_i32_0, %c0_i32_1, %c0_i32_2 : i32, i32, i32, i32
  }
  func.func @transform_8(%arg0: i32) -> (i32, i32, i32) {
    %c0_i32 = arith.constant 0 : i32
    %c0_i32_0 = arith.constant 0 : i32
    %c0_i32_1 = arith.constant 0 : i32
    return %arg0, %c0_i32, %c0_i32_0 : i32, i32, i32
  }
}

</mosaic_0001>

<llo_original>
// kernel: transformer_encoder_forward.1
$region0: #{transformer_encoder_forward.1}
  #allocation0 [shape = 'u32[]', space=smem, size = 0x4, offset = 0x4, fixed_abs, tag = 'smem constant byte address 0x4 - core index']
  #allocation1 [shape = 'u32[144,128]{1,0:T(1,128)}', space=vmem, size = 0x12000, scoped, tag = 'internal scratch']
  %s0 = inlined_call_operand.hbm [shape: f32[2,16,32], index: 0, kind: input, shape index: {}]
  %s1 = inlined_call_operand.vmem [shape: f32[2,32,96], index: 1, kind: input, shape index: {}]
  %s2 = inlined_call_operand.vmem [shape: f32[2,1,96], index: 2, kind: input, shape index: {}]
  %s3 = inlined_call_operand.vmem [shape: f32[2,32,32], index: 3, kind: input, shape index: {}]
  %s4 = inlined_call_operand.vmem [shape: f32[2,32,64], index: 4, kind: input, shape index: {}]
  %s5 = inlined_call_operand.hbm [shape: f32[2,1,64], index: 5, kind: input, shape index: {}]
  %s6 = inlined_call_operand.vmem [shape: f32[2,64,32], index: 6, kind: input, shape index: {}]
  %s7 = inlined_call_operand.vmem [shape: f32[2,6,1,32], index: 7, kind: input, shape index: {}]
  %s8 = inlined_call_operand.hbm [shape: f32[2,16,32], index: 8, kind: output, shape index: {}]
  %s9 = sld [smem:[#allocation0]]
  $region73: #{transformer_encoder_forward.1} parent=0
    _
  %s11 = ssub.s32 1, %s9
  %s12 = scalar_select 0, %s11, %s9
  $region1: #{transformer_encoder_forward.1} parent=0
    #allocation2 [shape = 'u8[16384]{0}', space=vmem, size = 0x4000, scoped, tag = 'input window, operand 0']
    #allocation3 [shape = 's32[2]{0}', space=sflag, size = 0x8, scoped, tag = 'scoped memory for transformer_encoder_forward.1']
    #allocation4 [shape = 's32[2]{0}', space=sflag, size = 0x8, scoped, tag = 'scoped memory for transformer_encoder_forward.1']
    #allocation5 [shape = 'u8[1024]{0}', space=vmem, size = 0x400, scoped, tag = 'input window, operand 5, single buffered']
    #allocation6 [shape = 's32[1]{0}', space=sflag, size = 0x4, scoped, tag = 'scoped memory for transformer_encoder_forward.1']
    #allocation7 [shape = 'u8[16384]{0}', space=vmem, size = 0x4000, scoped, tag = 'output window, operand 0']
    %13 = vsyncpa [#allocation3], 0
    %s14 = scalar_lea.sflag [#allocation3], 1
    %15 = vsyncpa %s14, 0
    %16 = vsyncpa [#allocation6], 0
    %17 = vsyncpa [#allocation4], 0
    %s18 = scalar_lea.sflag [#allocation4], 1
    %19 = vsyncpa %s18, 0
    loop: start=0, step=1, limit=4
    $region2: #{transformer_encoder_forward.1} parent=1 // loop_pre_header
      _
    $region3: #{transformer_encoder_forward.1} parent=1 // loop_header
      %s21 = sphi 0, %s25
      %p22 = scmp.ge.s32.totalorder %s21, 4
      %s31 = sphi 0, %s33
      %s34 = sphi 0, %s31
      %s35 = sphi 0, %s34
      %s51 = sphi 0, %s35
      %s55 = sphi 0, %s55
      %s57 = sphi 0, %s55
      %s58 = sphi 0, %s57
      %s72 = sphi 0, %s58
      %s76 = sphi 0, %s76
      %s78 = sphi 0, %s76
      %s79 = sphi 0, %s78
      %s93 = sphi 0, %s79
      %s97 = sphi 0, %s97
      %s99 = sphi 0, %s97
      %s100 = sphi 0, %s99
      %s114 = sphi 0, %s100
      %s118 = sphi 0, %s118
      %s120 = sphi 0, %s118
      %s121 = sphi 0, %s120
      %s135 = sphi 0, %s121
      %s139 = sphi 0, %s139
      %s141 = sphi 0, %s139
      %s142 = sphi 0, %s141
      %s156 = sphi 0, %s142
      %s160 = sphi 0, %s160
      %s162 = sphi 0, %s160
      %s163 = sphi 0, %s162
      %s177 = sphi 0, %s163
      %s181 = sphi 0, %s181
      %s183 = sphi 0, %s181
      %s184 = sphi 0, %s183
      %s198 = sphi 0, %s184
      %s204 = sphi 0, %s206
      %s207 = sphi 0, %s204
      %s208 = sphi 0, %s207
      %s224 = sphi 0, %s208
    $region4: #{transformer_encoder_forward.1} parent=1 // loop_header_branch
      %24 = sbr.rel (%p22) target = $region8
    $region5: #{transformer_encoder_forward.1} parent=1 // loop_body
      %s26 = ssub.s32 %s21, 1
      %s27 = ssub.s32 %s21, 2
      %s28 = sadd.s32 %s21, 1
      %s29 = ssub.s32 %s21, %s28
      %p30 = scmp.eq.s32.totalorder %s29, 0
      %s32 = sadd.s32 %s31, 1
      %s33 = scalar_select %p30, %s31, %s32
      %p36 = pneg %p30
      %p37 = scmp.eq.s32.totalorder %s21, 1
      %p38 = por %p36, %p37
      %p39 = scmp.ne.s32.totalorder %s31, %s34
      %p40 = scmp.eq.s32.totalorder %s21, 0
      %p41 = por %p39, %p40
      %p42 = scmp.ne.s32.totalorder %s31, %s34
      %p43 = scmp.eq.s32.totalorder %s26, 1
      %p44 = por %p42, %p43
      %p45 = scmp.ne.s32.totalorder %s34, %s35
      %p46 = scmp.eq.s32.totalorder %s26, 0
      %p47 = por %p45, %p46
      %p48 = scmp.ne.s32.totalorder %s34, %s35
      %p49 = scmp.eq.s32.totalorder %s27, 1
      %p50 = por %p48, %p49
      %p52 = scmp.ne.s32.totalorder %s35, %s51
      %p53 = scmp.eq.s32.totalorder %s27, 0
      %p54 = por %p52, %p53
      %s56 = sadd.s32 %s55, 1
      %p59 = scmp.eq.s32.totalorder %s21, 1
      %p60 = scmp.ne.s32.totalorder %s55, %s57
      %p61 = scmp.eq.s32.totalorder %s21, 0
      %p62 = por %p60, %p61
      %p63 = scmp.ne.s32.totalorder %s55, %s57
      %p64 = scmp.eq.s32.totalorder %s26, 1
      %p65 = por %p63, %p64
      %p66 = scmp.ne.s32.totalorder %s57, %s58
      %p67 = scmp.eq.s32.totalorder %s26, 0
      %p68 = por %p66, %p67
      %p69 = scmp.ne.s32.totalorder %s57, %s58
      %p70 = scmp.eq.s32.totalorder %s27, 1
      %p71 = por %p69, %p70
      %p73 = scmp.ne.s32.totalorder %s58, %s72
      %p74 = scmp.eq.s32.totalorder %s27, 0
      %p75 = por %p73, %p74
      %s77 = sadd.s32 %s76, 1
      %p80 = scmp.eq.s32.totalorder %s21, 1
      %p81 = scmp.ne.s32.totalorder %s76, %s78
      %p82 = scmp.eq.s32.totalorder %s21, 0
      %p83 = por %p81, %p82
      %p84 = scmp.ne.s32.totalorder %s76, %s78
      %p85 = scmp.eq.s32.totalorder %s26, 1
      %p86 = por %p84, %p85
      %p87 = scmp.ne.s32.totalorder %s78, %s79
      %p88 = scmp.eq.s32.totalorder %s26, 0
      %p89 = por %p87, %p88
      %p90 = scmp.ne.s32.totalorder %s78, %s79
      %p91 = scmp.eq.s32.totalorder %s27, 1
      %p92 = por %p90, %p91
      %p94 = scmp.ne.s32.totalorder %s79, %s93
      %p95 = scmp.eq.s32.totalorder %s27, 0
      %p96 = por %p94, %p95
      %s98 = sadd.s32 %s97, 1
      %p101 = scmp.eq.s32.totalorder %s21, 1
      %p102 = scmp.ne.s32.totalorder %s97, %s99
      %p103 = scmp.eq.s32.totalorder %s21, 0
      %p104 = por %p102, %p103
      %p105 = scmp.ne.s32.totalorder %s97, %s99
      %p106 = scmp.eq.s32.totalorder %s26, 1
      %p107 = por %p105, %p106
      %p108 = scmp.ne.s32.totalorder %s99, %s100
      %p109 = scmp.eq.s32.totalorder %s26, 0
      %p110 = por %p108, %p109
      %p111 = scmp.ne.s32.totalorder %s99, %s100
      %p112 = scmp.eq.s32.totalorder %s27, 1
      %p113 = por %p111, %p112
      %p115 = scmp.ne.s32.totalorder %s100, %s114
      %p116 = scmp.eq.s32.totalorder %s27, 0
      %p117 = por %p115, %p116
      %s119 = sadd.s32 %s118, 1
      %p122 = scmp.eq.s32.totalorder %s21, 1
      %p123 = scmp.ne.s32.totalorder %s118, %s120
      %p124 = scmp.eq.s32.totalorder %s21, 0
      %p125 = por %p123, %p124
      %p126 = scmp.ne.s32.totalorder %s118, %s120
      %p127 = scmp.eq.s32.totalorder %s26, 1
      %p128 = por %p126, %p127
      %p129 = scmp.ne.s32.totalorder %s120, %s121
      %p130 = scmp.eq.s32.totalorder %s26, 0
      %p131 = por %p129, %p130
      %p132 = scmp.ne.s32.totalorder %s120, %s121
      %p133 = scmp.eq.s32.totalorder %s27, 1
      %p134 = por %p132, %p133
      %p136 = scmp.ne.s32.totalorder %s121, %s135
      %p137 = scmp.eq.s32.totalorder %s27, 0
      %p138 = por %p136, %p137
      %s140 = sadd.s32 %s139, 1
      %p143 = scmp.eq.s32.totalorder %s21, 1
      %p144 = scmp.ne.s32.totalorder %s139, %s141
      %p145 = scmp.eq.s32.totalorder %s21, 0
      %p146 = por %p144, %p145
      %p147 = scmp.ne.s32.totalorder %s139, %s141
      %p148 = scmp.eq.s32.totalorder %s26, 1
      %p149 = por %p147, %p148
      %p150 = scmp.ne.s32.totalorder %s141, %s142
      %p151 = scmp.eq.s32.totalorder %s26, 0
      %p152 = por %p150, %p151
      %p153 = scmp.ne.s32.totalorder %s141, %s142
      %p154 = scmp.eq.s32.totalorder %s27, 1
      %p155 = por %p153, %p154
      %p157 = scmp.ne.s32.totalorder %s142, %s156
      %p158 = scmp.eq.s32.totalorder %s27, 0
      %p159 = por %p157, %p158
      %s161 = sadd.s32 %s160, 1
      %p164 = scmp.eq.s32.totalorder %s21, 1
      %p165 = scmp.ne.s32.totalorder %s160, %s162
      %p166 = scmp.eq.s32.totalorder %s21, 0
      %p167 = por %p165, %p166
      %p168 = scmp.ne.s32.totalorder %s160, %s162
      %p169 = scmp.eq.s32.totalorder %s26, 1
      %p170 = por %p168, %p169
      %p171 = scmp.ne.s32.totalorder %s162, %s163
      %p172 = scmp.eq.s32.totalorder %s26, 0
      %p173 = por %p171, %p172
      %p174 = scmp.ne.s32.totalorder %s162, %s163
      %p175 = scmp.eq.s32.totalorder %s27, 1
      %p176 = por %p174, %p175
      %p178 = scmp.ne.s32.totalorder %s163, %s177
      %p179 = scmp.eq.s32.totalorder %s27, 0
      %p180 = por %p178, %p179
      %s182 = sadd.s32 %s181, 1
      %p185 = scmp.eq.s32.totalorder %s21, 1
      %p186 = scmp.ne.s32.totalorder %s181, %s183
      %p187 = scmp.eq.s32.totalorder %s21, 0
      %p188 = por %p186, %p187
      %p189 = scmp.ne.s32.totalorder %s181, %s183
      %p190 = scmp.eq.s32.totalorder %s26, 1
      %p191 = por %p189, %p190
      %p192 = scmp.ne.s32.totalorder %s183, %s184
      %p193 = scmp.eq.s32.totalorder %s26, 0
      %p194 = por %p192, %p193
      %p195 = scmp.ne.s32.totalorder %s183, %s184
      %p196 = scmp.eq.s32.totalorder %s27, 1
      %p197 = por %p195, %p196
      %p199 = scmp.ne.s32.totalorder %s184, %s198
      %p200 = scmp.eq.s32.totalorder %s27, 0
      %p201 = por %p199, %p200
      %s202 = ssub.s32 %s21, %s28
      %p203 = scmp.eq.s32.totalorder %s202, 0
      %s205 = sadd.s32 %s204, 1
      %s206 = scalar_select %p203, %s204, %s205
      %p209 = pneg %p203
      %p210 = scmp.eq.s32.totalorder %s21, 1
      %p211 = por %p209, %p210
      %p212 = scmp.ne.s32.totalorder %s204, %s207
      %p213 = scmp.eq.s32.totalorder %s21, 0
      %p214 = por %p212, %p213
      %p215 = scmp.ne.s32.totalorder %s204, %s207
      %p216 = scmp.eq.s32.totalorder %s26, 1
      %p217 = por %p215, %p216
      %p218 = scmp.ne.s32.totalorder %s207, %s208
      %p219 = scmp.eq.s32.totalorder %s26, 0
      %p220 = por %p218, %p219
      %p221 = scmp.ne.s32.totalorder %s207, %s208
      %p222 = scmp.eq.s32.totalorder %s27, 1
      %p223 = por %p221, %p222
      %p225 = scmp.ne.s32.totalorder %s208, %s224
      %p226 = scmp.eq.s32.totalorder %s27, 0
      %p227 = por %p225, %p226
      %p228 = scmp.le.s32.totalorder 1, %s21
      %p229 = scmp.lt.s32.totalorder %s21, 3
      %p230 = pnand %p228, %p229
      %p231 = pneg %p230
      // Predicated region
      $region9: #{transformer_encoder_forward.1} parent=5 // pred_check
        _
      $region10: #{transformer_encoder_forward.1} parent=5 // pred_check_branch
        %233 = sbr.rel (%p230) target = $region12
      $region11: #{transformer_encoder_forward.1} parent=5 // pred_region
        %s234 = ssub.s32 %s21, 1
        // Predicated region
        $region13: #{transformer_encoder_forward.1} parent=11 // pred_check
          %p235 = pneg %p68
        $region14: #{transformer_encoder_forward.1} parent=11 // pred_check_branch
          %237 = sbr.rel (%p235) target = $region16
        $region15: #{transformer_encoder_forward.1} parent=11 // pred_region
          _
        $region16: #{transformer_encoder_forward.1} parent=11 // pred_fallthru
          _
        // Predicated region
        $region17: #{transformer_encoder_forward.1} parent=11 // pred_check
          %p238 = pneg %p89
        $region18: #{transformer_encoder_forward.1} parent=11 // pred_check_branch
          %240 = sbr.rel (%p238) target = $region20
        $region19: #{transformer_encoder_forward.1} parent=11 // pred_region
          _
        $region20: #{transformer_encoder_forward.1} parent=11 // pred_fallthru
          _
        // Predicated region
        $region21: #{transformer_encoder_forward.1} parent=11 // pred_check
          %p241 = pneg %p110
        $region22: #{transformer_encoder_forward.1} parent=11 // pred_check_branch
          %243 = sbr.rel (%p241) target = $region24
        $region23: #{transformer_encoder_forward.1} parent=11 // pred_region
          _
        $region24: #{transformer_encoder_forward.1} parent=11 // pred_fallthru
          _
        // Predicated region
        $region25: #{transformer_encoder_forward.1} parent=11 // pred_check
          %p244 = pneg %p131
        $region26: #{transformer_encoder_forward.1} parent=11 // pred_check_branch
          %246 = sbr.rel (%p244) target = $region28
        $region27: #{transformer_encoder_forward.1} parent=11 // pred_region
          _
        $region28: #{transformer_encoder_forward.1} parent=11 // pred_fallthru
          _
        // Predicated region
        $region29: #{transformer_encoder_forward.1} parent=11 // pred_check
          %p247 = pneg %p152
        $region30: #{transformer_encoder_forward.1} parent=11 // pred_check_branch
          %249 = sbr.rel (%p247) target = $region32
        $region31: #{transformer_encoder_forward.1} parent=11 // pred_region
          %s251 = ssub.s32 32, 32
          %252 = vsyncadd [#allocation6], %s251
          %s253 = sshll.u32 [#allocation5], 4
          %s254 = int_to_ptr.vmem [resolvable:$true] %s253
          %259 = dma.hbm_to_vmem [thread:$0]  %s5, 32, %s254, [#allocation6], 16, 16, 1
        $region32: #{transformer_encoder_forward.1} parent=11 // pred_fallthru
          _
        // Predicated region
        $region33: #{transformer_encoder_forward.1} parent=11 // pred_check
          %p260 = pneg %p173
        $region34: #{transformer_encoder_forward.1} parent=11 // pred_check_branch
          %262 = sbr.rel (%p260) target = $region36
        $region35: #{transformer_encoder_forward.1} parent=11 // pred_region
          _
        $region36: #{transformer_encoder_forward.1} parent=11 // pred_fallthru
          _
        // Predicated region
        $region37: #{transformer_encoder_forward.1} parent=11 // pred_check
          %p263 = pneg %p194
        $region38: #{transformer_encoder_forward.1} parent=11 // pred_check_branch
          %265 = sbr.rel (%p263) target = $region40
        $region39: #{transformer_encoder_forward.1} parent=11 // pred_region
          _
        $region40: #{transformer_encoder_forward.1} parent=11 // pred_fallthru
          _
      $region12: #{transformer_encoder_forward.1} parent=5 // pred_fallthru
        _
      %p266 = scmp.lt.s32.totalorder %s21, 2
      // Predicated region
      $region41: #{transformer_encoder_forward.1} parent=5 // pred_check
        %p267 = pneg %p266
      $region42: #{transformer_encoder_forward.1} parent=5 // pred_check_branch
        %269 = sbr.rel (%p267) target = $region44
      $region43: #{transformer_encoder_forward.1} parent=5 // pred_region
        // Predicated region
        $region45: #{transformer_encoder_forward.1} parent=43 // pred_check
          %p270 = pneg %p41
        $region46: #{transformer_encoder_forward.1} parent=43 // pred_check_branch
          %272 = sbr.rel (%p270) target = $region48
        $region47: #{transformer_encoder_forward.1} parent=43 // pred_region
          %s273 = sand.u32 %s31, 1
          %s274 = scalar_lea.sflag [#allocation3], %s273
          %s275 = sand.u32 %s31, 1
          %s276 = smul.addr %s275, 16
          %s277 = scalar_lea.vmem [#allocation2], %s276
          %s279 = ssub.s32 256, 256
          %280 = vsyncadd %s274, %s279
          %s281 = smul.addr %s21, 2
          %s282 = smul.addr %s281, 128
          %s283 = scalar_lea.hbm %s0, %s282
          %s284 = sshll.u32 %s277, 4
          %s285 = int_to_ptr.vmem [resolvable:$true] %s284
          %290 = dma.hbm_to_vmem [thread:$0]  %s283, 256, %s285, %s274, 128, 128, 8
        $region48: #{transformer_encoder_forward.1} parent=43 // pred_fallthru
          _
      $region44: #{transformer_encoder_forward.1} parent=5 // pred_fallthru
        _
      %p291 = scmp.le.s32.totalorder 1, %s21
      %p292 = scmp.lt.s32.totalorder %s21, 3
      %p293 = pnand %p291, %p292
      %p294 = pneg %p293
      // Predicated region
      $region49: #{transformer_encoder_forward.1} parent=5 // pred_check
        _
      $region50: #{transformer_encoder_forward.1} parent=5 // pred_check_branch
        %296 = sbr.rel (%p293) target = $region52
      $region51: #{transformer_encoder_forward.1} parent=5 // pred_region
        %s297 = ssub.s32 %s21, 1
        %s298 = sand.u32 %s34, 1
        %s299 = scalar_lea.sflag [#allocation3], %s298
        %s300 = sand.u32 %s34, 1
        %s301 = smul.addr %s300, 16
        %s302 = scalar_lea.vmem [#allocation2], %s301
        // Predicated region
        $region53: #{transformer_encoder_forward.1} parent=51 // pred_check
          %p303 = pneg %p47
        $region54: #{transformer_encoder_forward.1} parent=51 // pred_check_branch
          %305 = sbr.rel (%p303) target = $region56
        $region55: #{transformer_encoder_forward.1} parent=51 // pred_region
          %306 = dma.done %s299, 256
        $region56: #{transformer_encoder_forward.1} parent=51 // pred_fallthru
          _
        // Predicated region
        $region57: #{transformer_encoder_forward.1} parent=51 // pred_check
          %p307 = pneg %p152
        $region58: #{transformer_encoder_forward.1} parent=51 // pred_check_branch
          %309 = sbr.rel (%p307) target = $region60
        $region59: #{transformer_encoder_forward.1} parent=51 // pred_region
          %310 = dma.done [#allocation6], 32
        $region60: #{transformer_encoder_forward.1} parent=51 // pred_fallthru
          _
        %s311 = sand.u32 %s34, 1
        %s312 = scalar_lea.sflag [#allocation3], %s311
        %s313 = sand.u32 %s34, 1
        %s314 = smul.addr %s313, 16
        %s315 = scalar_lea.vmem [#allocation2], %s314
        %p316 = pneg %p47
        %p317 = pneg %p44
        %p318 = pneg %p68
        %p319 = pneg %p65
        %p320 = pneg %p89
        %p321 = pneg %p86
        %p322 = pneg %p110
        %p323 = pneg %p107
        %p324 = pneg %p131
        %p325 = pneg %p128
        %p326 = pneg %p152
        %p327 = pneg %p149
        %p328 = pneg %p173
        %p329 = pneg %p170
        %p330 = pneg %p194
        %p331 = pneg %p191
        %p332 = pneg %p220
        %p333 = pneg %p217
        %s334 = sand.u32 %s207, 1
        %s335 = scalar_lea.sflag [#allocation4], %s334
        %s336 = sand.u32 %s207, 1
        %s337 = smul.addr %s336, 16
        %s338 = scalar_lea.vmem [#allocation7], %s337
        %v339 = vld [vmem:[%s302] sm:$0xff]
        %v340 = vld [vmem:[%s302 + $0x8] sm:$0xff]
        %v341 = vld [vmem:[%s1] sm:$0xff]
        %v342 = vld [vmem:[%s1 + $0x8] sm:$0xff]
        %v343 = vld [vmem:[%s1 + $0x10] sm:$0xff]
        %v344 = vld [vmem:[%s1 + $0x18] sm:$0xff]
        %v345 = vld [vmem:[%s2] sm:$0x1]
        %v346 = vld [vmem:[%s3] sm:$0xff]
        %v347 = vld [vmem:[%s3 + $0x8] sm:$0xff]
        %v348 = vld [vmem:[%s3 + $0x10] sm:$0xff]
        %v349 = vld [vmem:[%s3 + $0x18] sm:$0xff]
        %v350 = vld [vmem:[%s4] sm:$0xff]
        %v351 = vld [vmem:[%s4 + $0x8] sm:$0xff]
        %v352 = vld [vmem:[%s4 + $0x10] sm:$0xff]
        %v353 = vld [vmem:[%s4 + $0x18] sm:$0xff]
        %v354 = vld [vmem:[#allocation5] sm:$0x1]
        %v355 = vld [vmem:[%s6] sm:$0xff]
        %v356 = vld [vmem:[%s6 + $0x8] sm:$0xff]
        %v357 = vld [vmem:[%s6 + $0x10] sm:$0xff]
        %v358 = vld [vmem:[%s6 + $0x18] sm:$0xff]
        %v359 = vld [vmem:[%s6 + $0x20] sm:$0xff]
        %v360 = vld [vmem:[%s6 + $0x28] sm:$0xff]
        %v361 = vld [vmem:[%s6 + $0x30] sm:$0xff]
        %v362 = vld [vmem:[%s6 + $0x38] sm:$0xff]
        %v363 = vld [vmem:[%s7] sm:$0x1]
        %v364 = vld [vmem:[%s7 + $0x1] sm:$0x1]
        %v365 = vld [vmem:[%s7 + $0x2] sm:$0x1]
        %v366 = vld [vmem:[%s7 + $0x3] sm:$0x1]
        %v367 = vld [vmem:[%s7 + $0x4] sm:$0x1]
        %v368 = vld [vmem:[%s7 + $0x5] sm:$0x1]
        %v370 = vlaneseq
        %v371 = vshrl.u32 %v370, 7
        %v372 = vsub.s32 0, %v371
        %v373 = vrot.slane %v345, %v372
        %vm375 = vcmask 261120
        %v377 = vsel %vm375, %v339, 0
        %v380 = vsel %vm375, %v340, 0
        %382 = vmatprep.subr.mxu0 0.0
        %383 = vmatpush1.msra.mxu0 %v341
        %384 = vmatprep.subr.mxu0 0.0
        %385 = vmatpush1.msra.mxu0 %v342
        %386 = vmatprep.subr.mxu0 0.0
        %387 = vmatpush1.msra.mxu0 %v343
        %388 = vmatprep.subr.mxu0 0.0
        %389 = vmatpush1.msra.mxu0 %v344
        %390 = vmatprep.subr.mxu0 0.0
        %391 = vmatpush1.msra.mxu0 0.0
        %392 = vmatprep.subr.mxu0 0.0
        %393 = vmatpush1.msra.mxu0 0.0
        %394 = vmatprep.subr.mxu0 0.0
        %395 = vmatpush1.msra.mxu0 0.0
        %396 = vmatprep.subr.mxu0 0.0
        %397 = vmatpush1.msra.mxu0 0.0
        %398 = vmatprep.subr.mxu0 0.0
        %399 = vmatpush1.msra.mxu0 0.0
        %400 = vmatprep.subr.mxu0 0.0
        %401 = vmatpush1.msra.mxu0 0.0
        %402 = vmatprep.subr.mxu0 0.0
        %403 = vmatpush1.msra.mxu0 0.0
        %404 = vmatprep.subr.mxu0 0.0
        %405 = vmatpush1.msra.mxu0 0.0
        %406 = vmatprep.subr.mxu0 0.0
        %407 = vmatpush1.msra.mxu0 0.0
        %408 = vmatprep.subr.mxu0 0.0
        %409 = vmatpush1.msra.mxu0 0.0
        %410 = vmatprep.subr.mxu0 0.0
        %411 = vmatpush1.msra.mxu0 0.0
        %412 = vmatprep.subr.mxu0 0.0
        %413 = vmatpush1.msra.mxu0 0.0
        %414 = vmatprep.subr.mxu0 0.0
        %415 = vmatpush1.msra.mxu0 0.0
        %416 = vmatprep.subr.mxu0 0.0
        %417 = vmatpush1.msra.mxu0 0.0
        %418 = vmatprep.subr.mxu0 0.0
        %419 = vmatpush1.msra.mxu0 0.0
        %420 = vmatprep.subr.mxu0 0.0
        %421 = vmatpush1.msra.mxu0 0.0
        %422 = vmatprep.subr.mxu0 0.0
        %423 = vmatpush1.msra.mxu0 0.0
        %424 = vmatprep.subr.mxu0 0.0
        %425 = vmatpush1.msra.mxu0 0.0
        %426 = vmatprep.subr.mxu0 0.0
        %427 = vmatpush1.msra.mxu0 0.0
        %428 = vmatprep.subr.mxu0 0.0
        %429 = vmatpush1.msra.mxu0 0.0
        %430 = vmatprep.subr.mxu0 0.0
        %431 = vmatpush1.msra.mxu0 0.0
        %432 = vmatprep.subr.mxu0 0.0
        %433 = vmatpush1.msra.mxu0 0.0
        %434 = vmatprep.subr.mxu0 0.0
        %435 = vmatpush1.msra.mxu0 0.0
        %436 = vmatprep.subr.mxu0 0.0
        %437 = vmatpush1.msra.mxu0 0.0
        %438 = vmatprep.subr.mxu0 0.0
        %439 = vmatpush1.msra.mxu0 0.0
        %440 = vmatprep.subr.mxu0 0.0
        %441 = vmatpush1.msra.mxu0 0.0
        %442 = vmatprep.subr.mxu0 0.0
        %443 = vmatpush1.msra.mxu0 0.0
        %444 = vmatprep.subr.mxu0 0.0
        %445 = vmatpush1.msra.mxu0 0.0
        %446 = vmatprep.mubr.f32.mxu0 0.0
        %447 = vmatmul.mubr.f32.gmra.mrb[0].mxu0 %v377
        %v448 = vpop.f32.mrb[0].mxu0
        %v449 = vadd.f32 %v373, %v448
        %v450 = vpop.f32.mrb[0].mxu0
        %451 = vmatprep.mubr.f32.mxu0 0.0
        %452 = vmatmul.mubr.f32.gmra.mrb[0].mxu0 %v380
        %v453 = vpop.f32.mrb[0].mxu0
        %v454 = vadd.f32 %v373, %v453
        %v455 = vpop.f32.mrb[0].mxu0
        %456 = vdwg.mxu0
        %459 = vrot.lane.b32.xlu0 %v449, 96
        %v460 = vpop.permute.xlu0 %459
        %461 = vrot.lane.b32.xlu0 %v454, 96
        %v462 = vpop.permute.xlu0 %461
        %vm463 = vcmask 64512
        %v464 = vsel %vm463, %v449, 0
        %v466 = vsel %vm463, %v454, 0
        %v468 = vsel %vm463, %v460, 0
        %v470 = vsel %vm463, %v462, 0
        %472 = vmatprep.subr.mxu0 0.0
        %473 = vmatpush1.xpose.msra.mxu0 %v468
        %474 = vmatprep.subr.mxu0 0.0
        %475 = vmatpush1.xpose.msra.mxu0 %v470
        %476 = vmatprep.subr.mxu0 0.0
        %477 = vmatpush1.xpose.msra.mxu0 0.0
        %478 = vmatprep.subr.mxu0 0.0
        %479 = vmatpush1.xpose.msra.mxu0 0.0
        %480 = vmatprep.subr.mxu0 0.0
        %481 = vmatpush1.xpose.msra.mxu0 0.0
        %482 = vmatprep.subr.mxu0 0.0
        %483 = vmatpush1.xpose.msra.mxu0 0.0
        %484 = vmatprep.subr.mxu0 0.0
        %485 = vmatpush1.xpose.msra.mxu0 0.0
        %486 = vmatprep.subr.mxu0 0.0
        %487 = vmatpush1.xpose.msra.mxu0 0.0
        %488 = vmatprep.subr.mxu0 0.0
        %489 = vmatpush1.xpose.msra.mxu0 0.0
        %490 = vmatprep.subr.mxu0 0.0
        %491 = vmatpush1.xpose.msra.mxu0 0.0
        %492 = vmatprep.subr.mxu0 0.0
        %493 = vmatpush1.xpose.msra.mxu0 0.0
        %494 = vmatprep.subr.mxu0 0.0
        %495 = vmatpush1.xpose.msra.mxu0 0.0
        %496 = vmatprep.subr.mxu0 0.0
        %497 = vmatpush1.xpose.msra.mxu0 0.0
        %498 = vmatprep.subr.mxu0 0.0
        %499 = vmatpush1.xpose.msra.mxu0 0.0
        %500 = vmatprep.subr.mxu0 0.0
        %501 = vmatpush1.xpose.msra.mxu0 0.0
        %502 = vmatprep.subr.mxu0 0.0
        %503 = vmatpush1.xpose.msra.mxu0 0.0
        %504 = vmatprep.subr.mxu0 0.0
        %505 = vmatpush1.xpose.msra.mxu0 0.0
        %506 = vmatprep.subr.mxu0 0.0
        %507 = vmatpush1.xpose.msra.mxu0 0.0
        %508 = vmatprep.subr.mxu0 0.0
        %509 = vmatpush1.xpose.msra.mxu0 0.0
        %510 = vmatprep.subr.mxu0 0.0
        %511 = vmatpush1.xpose.msra.mxu0 0.0
        %512 = vmatprep.subr.mxu0 0.0
        %513 = vmatpush1.xpose.msra.mxu0 0.0
        %514 = vmatprep.subr.mxu0 0.0
        %515 = vmatpush1.xpose.msra.mxu0 0.0
        %516 = vmatprep.subr.mxu0 0.0
        %517 = vmatpush1.xpose.msra.mxu0 0.0
        %518 = vmatprep.subr.mxu0 0.0
        %519 = vmatpush1.xpose.msra.mxu0 0.0
        %520 = vmatprep.subr.mxu0 0.0
        %521 = vmatpush1.xpose.msra.mxu0 0.0
        %522 = vmatprep.subr.mxu0 0.0
        %523 = vmatpush1.xpose.msra.mxu0 0.0
        %524 = vmatprep.subr.mxu0 0.0
        %525 = vmatpush1.xpose.msra.mxu0 0.0
        %526 = vmatprep.subr.mxu0 0.0
        %527 = vmatpush1.xpose.msra.mxu0 0.0
        %528 = vmatprep.subr.mxu0 0.0
        %529 = vmatpush1.xpose.msra.mxu0 0.0
        %530 = vmatprep.subr.mxu0 0.0
        %531 = vmatpush1.xpose.msra.mxu0 0.0
        %532 = vmatprep.subr.mxu0 0.0
        %533 = vmatpush1.xpose.msra.mxu0 0.0
        %534 = vmatprep.subr.mxu0 0.0
        %535 = vmatpush1.xpose.msra.mxu0 0.0
        %536 = vmatprep.mubr.f32.mxu0 0.0
        %537 = vmatmul.mubr.f32.gmra.mrb[0].mxu0 %v464
        %v538 = vpop.f32.mrb[0].mxu0
        %v539 = vadd.f32 0.0, %v538
        %v540 = vpop.f32.mrb[0].mxu0
        %541 = vmatprep.mubr.f32.mxu0 0.0
        %542 = vmatmul.mubr.f32.gmra.mrb[0].mxu0 %v466
        %v543 = vpop.f32.mrb[0].mxu0
        %v544 = vadd.f32 0.0, %v543
        %v545 = vpop.f32.mrb[0].mxu0
        %546 = vdwg.mxu0
        %v547 = vmul.f32 %v539, 0.35355338
        %v548 = vmul.f32 %v544, 0.35355338
        %vm549 = vcmask 130048
        %v550 = vsel %vm549, %v547, -inf
        %551 = vmax.xlane.f32.xlu0 %v550
        %v552 = vpop.xlane.xlu0 %551
        %v553 = vsel %vm549, %v548, -inf
        %554 = vmax.xlane.f32.xlu0 %v553
        %v555 = vpop.xlane.xlu0 %554
        %v556 = vsub.f32 %v547, %v552
        %v557 = vsub.f32 %v548, %v555
        %v558 = vmul.f32 %v556, 1.442695
        %v559 = vpow.pop %v558
        %v560 = vmul.f32 %v557, 1.442695
        %v561 = vpow.pop %v560
        %v562 = vsel %vm549, %v559, 0.0
        %563 = vadd.xlane.f32.xlu0 %v562
        %v564 = vpop.xlane.xlu0 %563
        %v565 = vsel %vm549, %v561, 0.0
        %566 = vadd.xlane.f32.xlu0 %v565
        %v567 = vpop.xlane.xlu0 %566
        %v568 = vrcp.pop %v564
        %v569 = vmul.f32 %v559, %v568
        %v570 = vrcp.pop %v567
        %v571 = vmul.f32 %v561, %v570
        %572 = vrot.lane.b32.xlu0 %v449, 64
        %v573 = vpop.permute.xlu0 %572
        %574 = vrot.lane.b32.xlu0 %v454, 64
        %v575 = vpop.permute.xlu0 %574
        %v579 = vsel %vm549, %v569, 0
        %v582 = vsel %vm549, %v571, 0
        %584 = vmatprep.subr.mxu0 0.0
        %585 = vmatpush1.msra.mxu0 %v573
        %586 = vmatprep.subr.mxu0 0.0
        %587 = vmatpush1.msra.mxu0 %v575
        %588 = vmatprep.subr.mxu0 0.0
        %589 = vmatpush1.msra.mxu0 0.0
        %590 = vmatprep.subr.mxu0 0.0
        %591 = vmatpush1.msra.mxu0 0.0
        %592 = vmatprep.subr.mxu0 0.0
        %593 = vmatpush1.msra.mxu0 0.0
        %594 = vmatprep.subr.mxu0 0.0
        %595 = vmatpush1.msra.mxu0 0.0
        %596 = vmatprep.subr.mxu0 0.0
        %597 = vmatpush1.msra.mxu0 0.0
        %598 = vmatprep.subr.mxu0 0.0
        %599 = vmatpush1.msra.mxu0 0.0
        %600 = vmatprep.subr.mxu0 0.0
        %601 = vmatpush1.msra.mxu0 0.0
        %602 = vmatprep.subr.mxu0 0.0
        %603 = vmatpush1.msra.mxu0 0.0
        %604 = vmatprep.subr.mxu0 0.0
        %605 = vmatpush1.msra.mxu0 0.0
        %606 = vmatprep.subr.mxu0 0.0
        %607 = vmatpush1.msra.mxu0 0.0
        %608 = vmatprep.subr.mxu0 0.0
        %609 = vmatpush1.msra.mxu0 0.0
        %610 = vmatprep.subr.mxu0 0.0
        %611 = vmatpush1.msra.mxu0 0.0
        %612 = vmatprep.subr.mxu0 0.0
        %613 = vmatpush1.msra.mxu0 0.0
        %614 = vmatprep.subr.mxu0 0.0
        %615 = vmatpush1.msra.mxu0 0.0
        %616 = vmatprep.subr.mxu0 0.0
        %617 = vmatpush1.msra.mxu0 0.0
        %618 = vmatprep.subr.mxu0 0.0
        %619 = vmatpush1.msra.mxu0 0.0
        %620 = vmatprep.subr.mxu0 0.0
        %621 = vmatpush1.msra.mxu0 0.0
        %622 = vmatprep.subr.mxu0 0.0
        %623 = vmatpush1.msra.mxu0 0.0
        %624 = vmatprep.subr.mxu0 0.0
        %625 = vmatpush1.msra.mxu0 0.0
        %626 = vmatprep.subr.mxu0 0.0
        %627 = vmatpush1.msra.mxu0 0.0
        %628 = vmatprep.subr.mxu0 0.0
        %629 = vmatpush1.msra.mxu0 0.0
        %630 = vmatprep.subr.mxu0 0.0
        %631 = vmatpush1.msra.mxu0 0.0
        %632 = vmatprep.subr.mxu0 0.0
        %633 = vmatpush1.msra.mxu0 0.0
        %634 = vmatprep.subr.mxu0 0.0
        %635 = vmatpush1.msra.mxu0 0.0
        %636 = vmatprep.subr.mxu0 0.0
        %637 = vmatpush1.msra.mxu0 0.0
        %638 = vmatprep.subr.mxu0 0.0
        %639 = vmatpush1.msra.mxu0 0.0
        %640 = vmatprep.subr.mxu0 0.0
        %641 = vmatpush1.msra.mxu0 0.0
        %642 = vmatprep.subr.mxu0 0.0
        %643 = vmatpush1.msra.mxu0 0.0
        %644 = vmatprep.subr.mxu0 0.0
        %645 = vmatpush1.msra.mxu0 0.0
        %646 = vmatprep.subr.mxu0 0.0
        %647 = vmatpush1.msra.mxu0 0.0
        %648 = vmatprep.mubr.f32.mxu0 0.0
        %649 = vmatmul.mubr.f32.gmra.mrb[0].mxu0 %v579
        %v650 = vpop.f32.mrb[0].mxu0
        %v651 = vadd.f32 0.0, %v650
        %v652 = vpop.f32.mrb[0].mxu0
        %653 = vmatprep.mubr.f32.mxu0 0.0
        %654 = vmatmul.mubr.f32.gmra.mrb[0].mxu0 %v582
        %v655 = vpop.f32.mrb[0].mxu0
        %v656 = vadd.f32 0.0, %v655
        %v657 = vpop.f32.mrb[0].mxu0
        %658 = vdwg.mxu0
        %659 = vrot.lane.b32.xlu0 %v449, 120
        %v660 = vpop.permute.xlu0 %659
        %661 = vrot.lane.b32.xlu0 %v454, 120
        %v662 = vpop.permute.xlu0 %661
        %663 = vrot.lane.b32.xlu0 %v449, 88
        %v664 = vpop.permute.xlu0 %663
        %665 = vrot.lane.b32.xlu0 %v454, 88
        %v666 = vpop.permute.xlu0 %665
        %v667 = vsel %vm463, %v660, 0
        %v669 = vsel %vm463, %v662, 0
        %v671 = vsel %vm463, %v664, 0
        %v673 = vsel %vm463, %v666, 0
        %675 = vmatprep.subr.mxu0 0.0
        %676 = vmatpush1.xpose.msra.mxu0 %v671
        %677 = vmatprep.subr.mxu0 0.0
        %678 = vmatpush1.xpose.msra.mxu0 %v673
        %679 = vmatprep.subr.mxu0 0.0
        %680 = vmatpush1.xpose.msra.mxu0 0.0
        %681 = vmatprep.subr.mxu0 0.0
        %682 = vmatpush1.xpose.msra.mxu0 0.0
        %683 = vmatprep.subr.mxu0 0.0
        %684 = vmatpush1.xpose.msra.mxu0 0.0
        %685 = vmatprep.subr.mxu0 0.0
        %686 = vmatpush1.xpose.msra.mxu0 0.0
        %687 = vmatprep.subr.mxu0 0.0
        %688 = vmatpush1.xpose.msra.mxu0 0.0
        %689 = vmatprep.subr.mxu0 0.0
        %690 = vmatpush1.xpose.msra.mxu0 0.0
        %691 = vmatprep.subr.mxu0 0.0
        %692 = vmatpush1.xpose.msra.mxu0 0.0
        %693 = vmatprep.subr.mxu0 0.0
        %694 = vmatpush1.xpose.msra.mxu0 0.0
        %695 = vmatprep.subr.mxu0 0.0
        %696 = vmatpush1.xpose.msra.mxu0 0.0
        %697 = vmatprep.subr.mxu0 0.0
        %698 = vmatpush1.xpose.msra.mxu0 0.0
        %699 = vmatprep.subr.mxu0 0.0
        %700 = vmatpush1.xpose.msra.mxu0 0.0
        %701 = vmatprep.subr.mxu0 0.0
        %702 = vmatpush1.xpose.msra.mxu0 0.0
        %703 = vmatprep.subr.mxu0 0.0
        %704 = vmatpush1.xpose.msra.mxu0 0.0
        %705 = vmatprep.subr.mxu0 0.0
        %706 = vmatpush1.xpose.msra.mxu0 0.0
        %707 = vmatprep.subr.mxu0 0.0
        %708 = vmatpush1.xpose.msra.mxu0 0.0
        %709 = vmatprep.subr.mxu0 0.0
        %710 = vmatpush1.xpose.msra.mxu0 0.0
        %711 = vmatprep.subr.mxu0 0.0
        %712 = vmatpush1.xpose.msra.mxu0 0.0
        %713 = vmatprep.subr.mxu0 0.0
        %714 = vmatpush1.xpose.msra.mxu0 0.0
        %715 = vmatprep.subr.mxu0 0.0
        %716 = vmatpush1.xpose.msra.mxu0 0.0
        %717 = vmatprep.subr.mxu0 0.0
        %718 = vmatpush1.xpose.msra.mxu0 0.0
        %719 = vmatprep.subr.mxu0 0.0
        %720 = vmatpush1.xpose.msra.mxu0 0.0
        %721 = vmatprep.subr.mxu0 0.0
        %722 = vmatpush1.xpose.msra.mxu0 0.0
        %723 = vmatprep.subr.mxu0 0.0
        %724 = vmatpush1.xpose.msra.mxu0 0.0
        %725 = vmatprep.subr.mxu0 0.0
        %726 = vmatpush1.xpose.msra.mxu0 0.0
        %727 = vmatprep.subr.mxu0 0.0
        %728 = vmatpush1.xpose.msra.mxu0 0.0
        %729 = vmatprep.subr.mxu0 0.0
        %730 = vmatpush1.xpose.msra.mxu0 0.0
        %731 = vmatprep.subr.mxu0 0.0
        %732 = vmatpush1.xpose.msra.mxu0 0.0
        %733 = vmatprep.subr.mxu0 0.0
        %734 = vmatpush1.xpose.msra.mxu0 0.0
        %735 = vmatprep.subr.mxu0 0.0
        %736 = vmatpush1.xpose.msra.mxu0 0.0
        %737 = vmatprep.subr.mxu0 0.0
        %738 = vmatpush1.xpose.msra.mxu0 0.0
        %739 = vmatprep.mubr.f32.mxu0 0.0
        %740 = vmatmul.mubr.f32.gmra.mrb[0].mxu0 %v667
        %v741 = vpop.f32.mrb[0].mxu0
        %v742 = vadd.f32 0.0, %v741
        %v743 = vpop.f32.mrb[0].mxu0
        %744 = vmatprep.mubr.f32.mxu0 0.0
        %745 = vmatmul.mubr.f32.gmra.mrb[0].mxu0 %v669
        %v746 = vpop.f32.mrb[0].mxu0
        %v747 = vadd.f32 0.0, %v746
        %v748 = vpop.f32.mrb[0].mxu0
        %749 = vdwg.mxu0
        %v750 = vmul.f32 %v742, 0.35355338
        %v751 = vmul.f32 %v747, 0.35355338
        %v752 = vsel %vm549, %v750, -inf
        %753 = vmax.xlane.f32.xlu0 %v752
        %v754 = vpop.xlane.xlu0 %753
        %v755 = vsel %vm549, %v751, -inf
        %756 = vmax.xlane.f32.xlu0 %v755
        %v757 = vpop.xlane.xlu0 %756
        %v758 = vsub.f32 %v750, %v754
        %v759 = vsub.f32 %v751, %v757
        %v760 = vmul.f32 %v758, 1.442695
        %v761 = vpow.pop %v760
        %v762 = vmul.f32 %v759, 1.442695
        %v763 = vpow.pop %v762
        %v764 = vsel %vm549, %v761, 0.0
        %765 = vadd.xlane.f32.xlu0 %v764
        %v766 = vpop.xlane.xlu0 %765
        %v767 = vsel %vm549, %v763, 0.0
        %768 = vadd.xlane.f32.xlu0 %v767
        %v769 = vpop.xlane.xlu0 %768
        %v770 = vrcp.pop %v766
        %v771 = vmul.f32 %v761, %v770
        %v772 = vrcp.pop %v769
        %v773 = vmul.f32 %v763, %v772
        %774 = vrot.lane.b32.xlu0 %v449, 56
        %v775 = vpop.permute.xlu0 %774
        %776 = vrot.lane.b32.xlu0 %v454, 56
        %v777 = vpop.permute.xlu0 %776
        %v781 = vsel %vm549, %v771, 0
        %v784 = vsel %vm549, %v773, 0
        %786 = vmatprep.subr.mxu0 0.0
        %787 = vmatpush1.msra.mxu0 %v775
        %788 = vmatprep.subr.mxu0 0.0
        %789 = vmatpush1.msra.mxu0 %v777
        %790 = vmatprep.subr.mxu0 0.0
        %791 = vmatpush1.msra.mxu0 0.0
        %792 = vmatprep.subr.mxu0 0.0
        %793 = vmatpush1.msra.mxu0 0.0
        %794 = vmatprep.subr.mxu0 0.0
        %795 = vmatpush1.msra.mxu0 0.0
        %796 = vmatprep.subr.mxu0 0.0
        %797 = vmatpush1.msra.mxu0 0.0
        %798 = vmatprep.subr.mxu0 0.0
        %799 = vmatpush1.msra.mxu0 0.0
        %800 = vmatprep.subr.mxu0 0.0
        %801 = vmatpush1.msra.mxu0 0.0
        %802 = vmatprep.subr.mxu0 0.0
        %803 = vmatpush1.msra.mxu0 0.0
        %804 = vmatprep.subr.mxu0 0.0
        %805 = vmatpush1.msra.mxu0 0.0
        %806 = vmatprep.subr.mxu0 0.0
        %807 = vmatpush1.msra.mxu0 0.0
        %808 = vmatprep.subr.mxu0 0.0
        %809 = vmatpush1.msra.mxu0 0.0
        %810 = vmatprep.subr.mxu0 0.0
        %811 = vmatpush1.msra.mxu0 0.0
        %812 = vmatprep.subr.mxu0 0.0
        %813 = vmatpush1.msra.mxu0 0.0
        %814 = vmatprep.subr.mxu0 0.0
        %815 = vmatpush1.msra.mxu0 0.0
        %816 = vmatprep.subr.mxu0 0.0
        %817 = vmatpush1.msra.mxu0 0.0
        %818 = vmatprep.subr.mxu0 0.0
        %819 = vmatpush1.msra.mxu0 0.0
        %820 = vmatprep.subr.mxu0 0.0
        %821 = vmatpush1.msra.mxu0 0.0
        %822 = vmatprep.subr.mxu0 0.0
        %823 = vmatpush1.msra.mxu0 0.0
        %824 = vmatprep.subr.mxu0 0.0
        %825 = vmatpush1.msra.mxu0 0.0
        %826 = vmatprep.subr.mxu0 0.0
        %827 = vmatpush1.msra.mxu0 0.0
        %828 = vmatprep.subr.mxu0 0.0
        %829 = vmatpush1.msra.mxu0 0.0
        %830 = vmatprep.subr.mxu0 0.0
        %831 = vmatpush1.msra.mxu0 0.0
        %832 = vmatprep.subr.mxu0 0.0
        %833 = vmatpush1.msra.mxu0 0.0
        %834 = vmatprep.subr.mxu0 0.0
        %835 = vmatpush1.msra.mxu0 0.0
        %836 = vmatprep.subr.mxu0 0.0
        %837 = vmatpush1.msra.mxu0 0.0
        %838 = vmatprep.subr.mxu0 0.0
        %839 = vmatpush1.msra.mxu0 0.0
        %840 = vmatprep.subr.mxu0 0.0
        %841 = vmatpush1.msra.mxu0 0.0
        %842 = vmatprep.subr.mxu0 0.0
        %843 = vmatpush1.msra.mxu0 0.0
        %844 = vmatprep.subr.mxu0 0.0
        %845 = vmatpush1.msra.mxu0 0.0
        %846 = vmatprep.subr.mxu0 0.0
        %847 = vmatpush1.msra.mxu0 0.0
        %848 = vmatprep.subr.mxu0 0.0
        %849 = vmatpush1.msra.mxu0 0.0
        %850 = vmatprep.mubr.f32.mxu0 0.0
        %851 = vmatmul.mubr.f32.gmra.mrb[0].mxu0 %v781
        %v852 = vpop.f32.mrb[0].mxu0
        %v853 = vadd.f32 0.0, %v852
        %v854 = vpop.f32.mrb[0].mxu0
        %855 = vmatprep.mubr.f32.mxu0 0.0
        %856 = vmatmul.mubr.f32.gmra.mrb[0].mxu0 %v784
        %v857 = vpop.f32.mrb[0].mxu0
        %v858 = vadd.f32 0.0, %v857
        %v859 = vpop.f32.mrb[0].mxu0
        %860 = vdwg.mxu0
        %861 = vrot.lane.b32.xlu0 %v449, 112
        %v862 = vpop.permute.xlu0 %861
        %863 = vrot.lane.b32.xlu0 %v454, 112
        %v864 = vpop.permute.xlu0 %863
        %865 = vrot.lane.b32.xlu0 %v449, 80
        %v866 = vpop.permute.xlu0 %865
        %867 = vrot.lane.b32.xlu0 %v454, 80
        %v868 = vpop.permute.xlu0 %867
        %v869 = vsel %vm463, %v862, 0
        %v871 = vsel %vm463, %v864, 0
        %v873 = vsel %vm463, %v866, 0
        %v875 = vsel %vm463, %v868, 0
        %877 = vmatprep.subr.mxu0 0.0
        %878 = vmatpush1.xpose.msra.mxu0 %v873
        %879 = vmatprep.subr.mxu0 0.0
        %880 = vmatpush1.xpose.msra.mxu0 %v875
        %881 = vmatprep.subr.mxu0 0.0
        %882 = vmatpush1.xpose.msra.mxu0 0.0
        %883 = vmatprep.subr.mxu0 0.0
        %884 = vmatpush1.xpose.msra.mxu0 0.0
        %885 = vmatprep.subr.mxu0 0.0
        %886 = vmatpush1.xpose.msra.mxu0 0.0
        %887 = vmatprep.subr.mxu0 0.0
        %888 = vmatpush1.xpose.msra.mxu0 0.0
        %889 = vmatprep.subr.mxu0 0.0
        %890 = vmatpush1.xpose.msra.mxu0 0.0
        %891 = vmatprep.subr.mxu0 0.0
        %892 = vmatpush1.xpose.msra.mxu0 0.0
        %893 = vmatprep.subr.mxu0 0.0
        %894 = vmatpush1.xpose.msra.mxu0 0.0
        %895 = vmatprep.subr.mxu0 0.0
        %896 = vmatpush1.xpose.msra.mxu0 0.0
        %897 = vmatprep.subr.mxu0 0.0
        %898 = vmatpush1.xpose.msra.mxu0 0.0
        %899 = vmatprep.subr.mxu0 0.0
        %900 = vmatpush1.xpose.msra.mxu0 0.0
        %901 = vmatprep.subr.mxu0 0.0
        %902 = vmatpush1.xpose.msra.mxu0 0.0
        %903 = vmatprep.subr.mxu0 0.0
        %904 = vmatpush1.xpose.msra.mxu0 0.0
        %905 = vmatprep.subr.mxu0 0.0
        %906 = vmatpush1.xpose.msra.mxu0 0.0
        %907 = vmatprep.subr.mxu0 0.0
        %908 = vmatpush1.xpose.msra.mxu0 0.0
        %909 = vmatprep.subr.mxu0 0.0
        %910 = vmatpush1.xpose.msra.mxu0 0.0
        %911 = vmatprep.subr.mxu0 0.0
        %912 = vmatpush1.xpose.msra.mxu0 0.0
        %913 = vmatprep.subr.mxu0 0.0
        %914 = vmatpush1.xpose.msra.mxu0 0.0
        %915 = vmatprep.subr.mxu0 0.0
        %916 = vmatpush1.xpose.msra.mxu0 0.0
        %917 = vmatprep.subr.mxu0 0.0
        %918 = vmatpush1.xpose.msra.mxu0 0.0
        %919 = vmatprep.subr.mxu0 0.0
        %920 = vmatpush1.xpose.msra.mxu0 0.0
        %921 = vmatprep.subr.mxu0 0.0
        %922 = vmatpush1.xpose.msra.mxu0 0.0
        %923 = vmatprep.subr.mxu0 0.0
        %924 = vmatpush1.xpose.msra.mxu0 0.0
        %925 = vmatprep.subr.mxu0 0.0
        %926 = vmatpush1.xpose.msra.mxu0 0.0
        %927 = vmatprep.subr.mxu0 0.0
        %928 = vmatpush1.xpose.msra.mxu0 0.0
        %929 = vmatprep.subr.mxu0 0.0
        %930 = vmatpush1.xpose.msra.mxu0 0.0
        %931 = vmatprep.subr.mxu0 0.0
        %932 = vmatpush1.xpose.msra.mxu0 0.0
        %933 = vmatprep.subr.mxu0 0.0
        %934 = vmatpush1.xpose.msra.mxu0 0.0
        %935 = vmatprep.subr.mxu0 0.0
        %936 = vmatpush1.xpose.msra.mxu0 0.0
        %937 = vmatprep.subr.mxu0 0.0
        %938 = vmatpush1.xpose.msra.mxu0 0.0
        %939 = vmatprep.subr.mxu0 0.0
        %940 = vmatpush1.xpose.msra.mxu0 0.0
        %941 = vmatprep.mubr.f32.mxu0 0.0
        %942 = vmatmul.mubr.f32.gmra.mrb[0].mxu0 %v869
        %v943 = vpop.f32.mrb[0].mxu0
        %v944 = vadd.f32 0.0, %v943
        %v945 = vpop.f32.mrb[0].mxu0
        %946 = vmatprep.mubr.f32.mxu0 0.0
        %947 = vmatmul.mubr.f32.gmra.mrb[0].mxu0 %v871
        %v948 = vpop.f32.mrb[0].mxu0
        %v949 = vadd.f32 0.0, %v948
        %v950 = vpop.f32.mrb[0].mxu0
        %951 = vdwg.mxu0
        %v952 = vmul.f32 %v944, 0.35355338
        %v953 = vmul.f32 %v949, 0.35355338
        %v954 = vsel %vm549, %v952, -inf
        %955 = vmax.xlane.f32.xlu0 %v954
        %v956 = vpop.xlane.xlu0 %955
        %v957 = vsel %vm549, %v953, -inf
        %958 = vmax.xlane.f32.xlu0 %v957
        %v959 = vpop.xlane.xlu0 %958
        %v960 = vsub.f32 %v952, %v956
        %v961 = vsub.f32 %v953, %v959
        %v962 = vmul.f32 %v960, 1.442695
        %v963 = vpow.pop %v962
        %v964 = vmul.f32 %v961, 1.442695
        %v965 = vpow.pop %v964
        %v966 = vsel %vm549, %v963, 0.0
        %967 = vadd.xlane.f32.xlu0 %v966
        %v968 = vpop.xlane.xlu0 %967
        %v969 = vsel %vm549, %v965, 0.0
        %970 = vadd.xlane.f32.xlu0 %v969
        %v971 = vpop.xlane.xlu0 %970
        %v972 = vrcp.pop %v968
        %v973 = vmul.f32 %v963, %v972
        %v974 = vrcp.pop %v971
        %v975 = vmul.f32 %v965, %v974
        %976 = vrot.lane.b32.xlu0 %v449, 48
        %v977 = vpop.permute.xlu0 %976
        %978 = vrot.lane.b32.xlu0 %v454, 48
        %v979 = vpop.permute.xlu0 %978
        %v983 = vsel %vm549, %v973, 0
        %v986 = vsel %vm549, %v975, 0
        %988 = vmatprep.subr.mxu0 0.0
        %989 = vmatpush1.msra.mxu0 %v977
        %990 = vmatprep.subr.mxu0 0.0
        %991 = vmatpush1.msra.mxu0 %v979
        %992 = vmatprep.subr.mxu0 0.0
        %993 = vmatpush1.msra.mxu0 0.0
        %994 = vmatprep.subr.mxu0 0.0
        %995 = vmatpush1.msra.mxu0 0.0
        %996 = vmatprep.subr.mxu0 0.0
        %997 = vmatpush1.msra.mxu0 0.0
        %998 = vmatprep.subr.mxu0 0.0
        %999 = vmatpush1.msra.mxu0 0.0
        %1000 = vmatprep.subr.mxu0 0.0
        %1001 = vmatpush1.msra.mxu0 0.0
        %1002 = vmatprep.subr.mxu0 0.0
        %1003 = vmatpush1.msra.mxu0 0.0
        %1004 = vmatprep.subr.mxu0 0.0
        %1005 = vmatpush1.msra.mxu0 0.0
        %1006 = vmatprep.subr.mxu0 0.0
        %1007 = vmatpush1.msra.mxu0 0.0
        %1008 = vmatprep.subr.mxu0 0.0
        %1009 = vmatpush1.msra.mxu0 0.0
        %1010 = vmatprep.subr.mxu0 0.0
        %1011 = vmatpush1.msra.mxu0 0.0
        %1012 = vmatprep.subr.mxu0 0.0
        %1013 = vmatpush1.msra.mxu0 0.0
        %1014 = vmatprep.subr.mxu0 0.0
        %1015 = vmatpush1.msra.mxu0 0.0
        %1016 = vmatprep.subr.mxu0 0.0
        %1017 = vmatpush1.msra.mxu0 0.0
        %1018 = vmatprep.subr.mxu0 0.0
        %1019 = vmatpush1.msra.mxu0 0.0
        %1020 = vmatprep.subr.mxu0 0.0
        %1021 = vmatpush1.msra.mxu0 0.0
        %1022 = vmatprep.subr.mxu0 0.0
        %1023 = vmatpush1.msra.mxu0 0.0
        %1024 = vmatprep.subr.mxu0 0.0
        %1025 = vmatpush1.msra.mxu0 0.0
        %1026 = vmatprep.subr.mxu0 0.0
        %1027 = vmatpush1.msra.mxu0 0.0
        %1028 = vmatprep.subr.mxu0 0.0
        %1029 = vmatpush1.msra.mxu0 0.0
        %1030 = vmatprep.subr.mxu0 0.0
        %1031 = vmatpush1.msra.mxu0 0.0
        %1032 = vmatprep.subr.mxu0 0.0
        %1033 = vmatpush1.msra.mxu0 0.0
        %1034 = vmatprep.subr.mxu0 0.0
        %1035 = vmatpush1.msra.mxu0 0.0
        %1036 = vmatprep.subr.mxu0 0.0
        %1037 = vmatpush1.msra.mxu0 0.0
        %1038 = vmatprep.subr.mxu0 0.0
        %1039 = vmatpush1.msra.mxu0 0.0
        %1040 = vmatprep.subr.mxu0 0.0
        %1041 = vmatpush1.msra.mxu0 0.0
        %1042 = vmatprep.subr.mxu0 0.0
        %1043 = vmatpush1.msra.mxu0 0.0
        %1044 = vmatprep.subr.mxu0 0.0
        %1045 = vmatpush1.msra.mxu0 0.0
        %1046 = vmatprep.subr.mxu0 0.0
        %1047 = vmatpush1.msra.mxu0 0.0
        %1048 = vmatprep.subr.mxu0 0.0
        %1049 = vmatpush1.msra.mxu0 0.0
        %1050 = vmatprep.subr.mxu0 0.0
        %1051 = vmatpush1.msra.mxu0 0.0
        %1052 = vmatprep.mubr.f32.mxu0 0.0
        %1053 = vmatmul.mubr.f32.gmra.mrb[0].mxu0 %v983
        %v1054 = vpop.f32.mrb[0].mxu0
        %v1055 = vadd.f32 0.0, %v1054
        %v1056 = vpop.f32.mrb[0].mxu0
        %1057 = vmatprep.mubr.f32.mxu0 0.0
        %1058 = vmatmul.mubr.f32.gmra.mrb[0].mxu0 %v986
        %v1059 = vpop.f32.mrb[0].mxu0
        %v1060 = vadd.f32 0.0, %v1059
        %v1061 = vpop.f32.mrb[0].mxu0
        %1062 = vdwg.mxu0
        %1063 = vrot.lane.b32.xlu0 %v449, 104
        %v1064 = vpop.permute.xlu0 %1063
        %1065 = vrot.lane.b32.xlu0 %v454, 104
        %v1066 = vpop.permute.xlu0 %1065
        %1067 = vrot.lane.b32.xlu0 %v449, 72
        %v1068 = vpop.permute.xlu0 %1067
        %1069 = vrot.lane.b32.xlu0 %v454, 72
        %v1070 = vpop.permute.xlu0 %1069
        %v1071 = vsel %vm463, %v1064, 0
        %v1073 = vsel %vm463, %v1066, 0
        %v1075 = vsel %vm463, %v1068, 0
        %v1077 = vsel %vm463, %v1070, 0
        %1079 = vmatprep.subr.mxu0 0.0
        %1080 = vmatpush1.xpose.msra.mxu0 %v1075
        %1081 = vmatprep.subr.mxu0 0.0
        %1082 = vmatpush1.xpose.msra.mxu0 %v1077
        %1083 = vmatprep.subr.mxu0 0.0
        %1084 = vmatpush1.xpose.msra.mxu0 0.0
        %1085 = vmatprep.subr.mxu0 0.0
        %1086 = vmatpush1.xpose.msra.mxu0 0.0
        %1087 = vmatprep.subr.mxu0 0.0
        %1088 = vmatpush1.xpose.msra.mxu0 0.0
        %1089 = vmatprep.subr.mxu0 0.0
        %1090 = vmatpush1.xpose.msra.mxu0 0.0
        %1091 = vmatprep.subr.mxu0 0.0
        %1092 = vmatpush1.xpose.msra.mxu0 0.0
        %1093 = vmatprep.subr.mxu0 0.0
        %1094 = vmatpush1.xpose.msra.mxu0 0.0
        %1095 = vmatprep.subr.mxu0 0.0
        %1096 = vmatpush1.xpose.msra.mxu0 0.0
        %1097 = vmatprep.subr.mxu0 0.0
        %1098 = vmatpush1.xpose.msra.mxu0 0.0
        %1099 = vmatprep.subr.mxu0 0.0
        %1100 = vmatpush1.xpose.msra.mxu0 0.0
        %1101 = vmatprep.subr.mxu0 0.0
        %1102 = vmatpush1.xpose.msra.mxu0 0.0
        %1103 = vmatprep.subr.mxu0 0.0
        %1104 = vmatpush1.xpose.msra.mxu0 0.0
        %1105 = vmatprep.subr.mxu0 0.0
        %1106 = vmatpush1.xpose.msra.mxu0 0.0
        %1107 = vmatprep.subr.mxu0 0.0
        %1108 = vmatpush1.xpose.msra.mxu0 0.0
        %1109 = vmatprep.subr.mxu0 0.0
        %1110 = vmatpush1.xpose.msra.mxu0 0.0
        %1111 = vmatprep.subr.mxu0 0.0
        %1112 = vmatpush1.xpose.msra.mxu0 0.0
        %1113 = vmatprep.subr.mxu0 0.0
        %1114 = vmatpush1.xpose.msra.mxu0 0.0
        %1115 = vmatprep.subr.mxu0 0.0
        %1116 = vmatpush1.xpose.msra.mxu0 0.0
        %1117 = vmatprep.subr.mxu0 0.0
        %1118 = vmatpush1.xpose.msra.mxu0 0.0
        %1119 = vmatprep.subr.mxu0 0.0
        %1120 = vmatpush1.xpose.msra.mxu0 0.0
        %1121 = vmatprep.subr.mxu0 0.0
        %1122 = vmatpush1.xpose.msra.mxu0 0.0
        %1123 = vmatprep.subr.mxu0 0.0
        %1124 = vmatpush1.xpose.msra.mxu0 0.0
        %1125 = vmatprep.subr.mxu0 0.0
        %1126 = vmatpush1.xpose.msra.mxu0 0.0
        %1127 = vmatprep.subr.mxu0 0.0
        %1128 = vmatpush1.xpose.msra.mxu0 0.0
        %1129 = vmatprep.subr.mxu0 0.0
        %1130 = vmatpush1.xpose.msra.mxu0 0.0
        %1131 = vmatprep.subr.mxu0 0.0
        %1132 = vmatpush1.xpose.msra.mxu0 0.0
        %1133 = vmatprep.subr.mxu0 0.0
        %1134 = vmatpush1.xpose.msra.mxu0 0.0
        %1135 = vmatprep.subr.mxu0 0.0
        %1136 = vmatpush1.xpose.msra.mxu0 0.0
        %1137 = vmatprep.subr.mxu0 0.0
        %1138 = vmatpush1.xpose.msra.mxu0 0.0
        %1139 = vmatprep.subr.mxu0 0.0
        %1140 = vmatpush1.xpose.msra.mxu0 0.0
        %1141 = vmatprep.subr.mxu0 0.0
        %1142 = vmatpush1.xpose.msra.mxu0 0.0
        %1143 = vmatprep.mubr.f32.mxu0 0.0
        %1144 = vmatmul.mubr.f32.gmra.mrb[0].mxu0 %v1071
        %v1145 = vpop.f32.mrb[0].mxu0
        %v1146 = vadd.f32 0.0, %v1145
        %v1147 = vpop.f32.mrb[0].mxu0
        %1148 = vmatprep.mubr.f32.mxu0 0.0
        %1149 = vmatmul.mubr.f32.gmra.mrb[0].mxu0 %v1073
        %v1150 = vpop.f32.mrb[0].mxu0
        %v1151 = vadd.f32 0.0, %v1150
        %v1152 = vpop.f32.mrb[0].mxu0
        %1153 = vdwg.mxu0
        %v1154 = vmul.f32 %v1146, 0.35355338
        %v1155 = vmul.f32 %v1151, 0.35355338
        %v1156 = vsel %vm549, %v1154, -inf
        %1157 = vmax.xlane.f32.xlu0 %v1156
        %v1158 = vpop.xlane.xlu0 %1157
        %v1159 = vsel %vm549, %v1155, -inf
        %1160 = vmax.xlane.f32.xlu0 %v1159
        %v1161 = vpop.xlane.xlu0 %1160
        %v1162 = vsub.f32 %v1154, %v1158
        %v1163 = vsub.f32 %v1155, %v1161
        %v1164 = vmul.f32 %v1162, 1.442695
        %v1165 = vpow.pop %v1164
        %v1166 = vmul.f32 %v1163, 1.442695
        %v1167 = vpow.pop %v1166
        %v1168 = vsel %vm549, %v1165, 0.0
        %1169 = vadd.xlane.f32.xlu0 %v1168
        %v1170 = vpop.xlane.xlu0 %1169
        %v1171 = vsel %vm549, %v1167, 0.0
        %1172 = vadd.xlane.f32.xlu0 %v1171
        %v1173 = vpop.xlane.xlu0 %1172
        %v1174 = vrcp.pop %v1170
        %v1175 = vmul.f32 %v1165, %v1174
        %v1176 = vrcp.pop %v1173
        %v1177 = vmul.f32 %v1167, %v1176
        %1178 = vrot.lane.b32.xlu0 %v449, 40
        %v1179 = vpop.permute.xlu0 %1178
        %1180 = vrot.lane.b32.xlu0 %v454, 40
        %v1181 = vpop.permute.xlu0 %1180
        %v1185 = vsel %vm549, %v1175, 0
        %v1188 = vsel %vm549, %v1177, 0
        %1190 = vmatprep.subr.mxu0 0.0
        %1191 = vmatpush1.msra.mxu0 %v1179
        %1192 = vmatprep.subr.mxu0 0.0
        %1193 = vmatpush1.msra.mxu0 %v1181
        %1194 = vmatprep.subr.mxu0 0.0
        %1195 = vmatpush1.msra.mxu0 0.0
        %1196 = vmatprep.subr.mxu0 0.0
        %1197 = vmatpush1.msra.mxu0 0.0
        %1198 = vmatprep.subr.mxu0 0.0
        %1199 = vmatpush1.msra.mxu0 0.0
        %1200 = vmatprep.subr.mxu0 0.0
        %1201 = vmatpush1.msra.mxu0 0.0
        %1202 = vmatprep.subr.mxu0 0.0
        %1203 = vmatpush1.msra.mxu0 0.0
        %1204 = vmatprep.subr.mxu0 0.0
        %1205 = vmatpush1.msra.mxu0 0.0
        %1206 = vmatprep.subr.mxu0 0.0
        %1207 = vmatpush1.msra.mxu0 0.0
        %1208 = vmatprep.subr.mxu0 0.0
        %1209 = vmatpush1.msra.mxu0 0.0
        %1210 = vmatprep.subr.mxu0 0.0
        %1211 = vmatpush1.msra.mxu0 0.0
        %1212 = vmatprep.subr.mxu0 0.0
        %1213 = vmatpush1.msra.mxu0 0.0
        %1214 = vmatprep.subr.mxu0 0.0
        %1215 = vmatpush1.msra.mxu0 0.0
        %1216 = vmatprep.subr.mxu0 0.0
        %1217 = vmatpush1.msra.mxu0 0.0
        %1218 = vmatprep.subr.mxu0 0.0
        %1219 = vmatpush1.msra.mxu0 0.0
        %1220 = vmatprep.subr.mxu0 0.0
        %1221 = vmatpush1.msra.mxu0 0.0
        %1222 = vmatprep.subr.mxu0 0.0
        %1223 = vmatpush1.msra.mxu0 0.0
        %1224 = vmatprep.subr.mxu0 0.0
        %1225 = vmatpush1.msra.mxu0 0.0
        %1226 = vmatprep.subr.mxu0 0.0
        %1227 = vmatpush1.msra.mxu0 0.0
        %1228 = vmatprep.subr.mxu0 0.0
        %1229 = vmatpush1.msra.mxu0 0.0
        %1230 = vmatprep.subr.mxu0 0.0
        %1231 = vmatpush1.msra.mxu0 0.0
        %1232 = vmatprep.subr.mxu0 0.0
        %1233 = vmatpush1.msra.mxu0 0.0
        %1234 = vmatprep.subr.mxu0 0.0
        %1235 = vmatpush1.msra.mxu0 0.0
        %1236 = vmatprep.subr.mxu0 0.0
        %1237 = vmatpush1.msra.mxu0 0.0
        %1238 = vmatprep.subr.mxu0 0.0
        %1239 = vmatpush1.msra.mxu0 0.0
        %1240 = vmatprep.subr.mxu0 0.0
        %1241 = vmatpush1.msra.mxu0 0.0
        %1242 = vmatprep.subr.mxu0 0.0
        %1243 = vmatpush1.msra.mxu0 0.0
        %1244 = vmatprep.subr.mxu0 0.0
        %1245 = vmatpush1.msra.mxu0 0.0
        %1246 = vmatprep.subr.mxu0 0.0
        %1247 = vmatpush1.msra.mxu0 0.0
        %1248 = vmatprep.subr.mxu0 0.0
        %1249 = vmatpush1.msra.mxu0 0.0
        %1250 = vmatprep.subr.mxu0 0.0
        %1251 = vmatpush1.msra.mxu0 0.0
        %1252 = vmatprep.subr.mxu0 0.0
        %1253 = vmatpush1.msra.mxu0 0.0
        %1254 = vmatprep.mubr.f32.mxu0 0.0
        %1255 = vmatmul.mubr.f32.gmra.mrb[0].mxu0 %v1185
        %v1256 = vpop.f32.mrb[0].mxu0
        %v1257 = vadd.f32 0.0, %v1256
        %v1258 = vpop.f32.mrb[0].mxu0
        %1259 = vmatprep.mubr.f32.mxu0 0.0
        %1260 = vmatmul.mubr.f32.gmra.mrb[0].mxu0 %v1188
        %v1261 = vpop.f32.mrb[0].mxu0
        %v1262 = vadd.f32 0.0, %v1261
        %v1263 = vpop.f32.mrb[0].mxu0
        %1264 = vdwg.mxu0
        %1267 = vrot.lane.b32.xlu0 %v853, 8
        %v1268 = vpop.permute.xlu0 %1267
        %1269 = vrot.lane.b32.xlu0 %v858, 8
        %v1270 = vpop.permute.xlu0 %1269
        %1275 = vrot.lane.b32.xlu0 %v1055, 16
        %v1276 = vpop.permute.xlu0 %1275
        %1277 = vrot.lane.b32.xlu0 %v1060, 16
        %v1278 = vpop.permute.xlu0 %1277
        %1283 = vrot.lane.b32.xlu0 %v1257, 24
        %v1284 = vpop.permute.xlu0 %1283
        %1285 = vrot.lane.b32.xlu0 %v1262, 24
        %v1286 = vpop.permute.xlu0 %1285
        %v1289 = vsel %vm463, %v651, %v1268
        %v1290 = vsel %vm463, %v656, %v1270
        %v1291 = vsel %vm549, %v1289, %v1276
        %v1292 = vsel %vm549, %v1290, %v1278
        %vm1293 = vcmask 195584
        %v1294 = vsel %vm1293, %v1291, %v1284
        %v1295 = vsel %vm1293, %v1292, %v1286
        %v1297 = vlaneseq
        %v1298 = vshrl.u32 %v1297, 7
        %v1299 = vsub.s32 0, %v1298
        %v1300 = vrot.slane %v363, %v1299
        %v1303 = vsel %vm375, %v1294, 0
        %v1306 = vsel %vm375, %v1295, 0
        %1308 = vmatprep.subr.mxu0 0.0
        %1309 = vmatpush1.msra.mxu0 %v346
        %1310 = vmatprep.subr.mxu0 0.0
        %1311 = vmatpush1.msra.mxu0 %v347
        %1312 = vmatprep.subr.mxu0 0.0
        %1313 = vmatpush1.msra.mxu0 %v348
        %1314 = vmatprep.subr.mxu0 0.0
        %1315 = vmatpush1.msra.mxu0 %v349
        %1316 = vmatprep.subr.mxu0 0.0
        %1317 = vmatpush1.msra.mxu0 0.0
        %1318 = vmatprep.subr.mxu0 0.0
        %1319 = vmatpush1.msra.mxu0 0.0
        %1320 = vmatprep.subr.mxu0 0.0
        %1321 = vmatpush1.msra.mxu0 0.0
        %1322 = vmatprep.subr.mxu0 0.0
        %1323 = vmatpush1.msra.mxu0 0.0
        %1324 = vmatprep.subr.mxu0 0.0
        %1325 = vmatpush1.msra.mxu0 0.0
        %1326 = vmatprep.subr.mxu0 0.0
        %1327 = vmatpush1.msra.mxu0 0.0
        %1328 = vmatprep.subr.mxu0 0.0
        %1329 = vmatpush1.msra.mxu0 0.0
        %1330 = vmatprep.subr.mxu0 0.0
        %1331 = vmatpush1.msra.mxu0 0.0
        %1332 = vmatprep.subr.mxu0 0.0
        %1333 = vmatpush1.msra.mxu0 0.0
        %1334 = vmatprep.subr.mxu0 0.0
        %1335 = vmatpush1.msra.mxu0 0.0
        %1336 = vmatprep.subr.mxu0 0.0
        %1337 = vmatpush1.msra.mxu0 0.0
        %1338 = vmatprep.subr.mxu0 0.0
        %1339 = vmatpush1.msra.mxu0 0.0
        %1340 = vmatprep.subr.mxu0 0.0
        %1341 = vmatpush1.msra.mxu0 0.0
        %1342 = vmatprep.subr.mxu0 0.0
        %1343 = vmatpush1.msra.mxu0 0.0
        %1344 = vmatprep.subr.mxu0 0.0
        %1345 = vmatpush1.msra.mxu0 0.0
        %1346 = vmatprep.subr.mxu0 0.0
        %1347 = vmatpush1.msra.mxu0 0.0
        %1348 = vmatprep.subr.mxu0 0.0
        %1349 = vmatpush1.msra.mxu0 0.0
        %1350 = vmatprep.subr.mxu0 0.0
        %1351 = vmatpush1.msra.mxu0 0.0
        %1352 = vmatprep.subr.mxu0 0.0
        %1353 = vmatpush1.msra.mxu0 0.0
        %1354 = vmatprep.subr.mxu0 0.0
        %1355 = vmatpush1.msra.mxu0 0.0
        %1356 = vmatprep.subr.mxu0 0.0
        %1357 = vmatpush1.msra.mxu0 0.0
        %1358 = vmatprep.subr.mxu0 0.0
        %1359 = vmatpush1.msra.mxu0 0.0
        %1360 = vmatprep.subr.mxu0 0.0
        %1361 = vmatpush1.msra.mxu0 0.0
        %1362 = vmatprep.subr.mxu0 0.0
        %1363 = vmatpush1.msra.mxu0 0.0
        %1364 = vmatprep.subr.mxu0 0.0
        %1365 = vmatpush1.msra.mxu0 0.0
        %1366 = vmatprep.subr.mxu0 0.0
        %1367 = vmatpush1.msra.mxu0 0.0
        %1368 = vmatprep.subr.mxu0 0.0
        %1369 = vmatpush1.msra.mxu0 0.0
        %1370 = vmatprep.subr.mxu0 0.0
        %1371 = vmatpush1.msra.mxu0 0.0
        %1372 = vmatprep.mubr.f32.mxu0 0.0
        %1373 = vmatmul.mubr.f32.gmra.mrb[0].mxu0 %v1303
        %v1374 = vpop.f32.mrb[0].mxu0
        %v1375 = vadd.f32 %v1300, %v1374
        %v1376 = vpop.f32.mrb[0].mxu0
        %1377 = vmatprep.mubr.f32.mxu0 0.0
        %1378 = vmatmul.mubr.f32.gmra.mrb[0].mxu0 %v1306
        %v1379 = vpop.f32.mrb[0].mxu0
        %v1380 = vadd.f32 %v1300, %v1379
        %v1381 = vpop.f32.mrb[0].mxu0
        %1382 = vdwg.mxu0
        %v1383 = vadd.f32 %v339, %v1375
        %v1384 = vadd.f32 %v340, %v1380
        %v1385 = vsel %vm375, %v1383, 0.0
        %1386 = vadd.xlane.f32.xlu0 %v1385
        %v1387 = vpop.xlane.xlu0 %1386
        %v1388 = vsel %vm375, %v1384, 0.0
        %1389 = vadd.xlane.f32.xlu0 %v1388
        %v1390 = vpop.xlane.xlu0 %1389
        %v1391 = vrcp.pop 32.0
        %v1392 = vmul.f32 %v1387, %v1391
        %v1393 = vmul.f32 %v1390, %v1391
        %v1394 = vsub.f32 %v1383, %v1392
        %v1395 = vsub.f32 %v1384, %v1393
        %v1396 = vmul.f32 %v1394, %v1394
        %v1397 = vmul.f32 %v1395, %v1395
        %v1398 = vsel %vm375, %v1396, 0.0
        %1399 = vadd.xlane.f32.xlu0 %v1398
        %v1400 = vpop.xlane.xlu0 %1399
        %v1401 = vsel %vm375, %v1397, 0.0
        %1402 = vadd.xlane.f32.xlu0 %v1401
        %v1403 = vpop.xlane.xlu0 %1402
        %v1404 = vmul.f32 %v1400, %v1391
        %v1405 = vmul.f32 %v1403, %v1391
        %v1406 = vadd.f32 %v1404, 1e-05
        %v1407 = vadd.f32 %v1405, 1e-05
        %v1408 = vrsqrt.pop %v1406
        %v1409 = vrsqrt.pop %v1407
        %v1410 = vmul.f32 %v1394, %v1408
        %v1411 = vmul.f32 %v1395, %v1409
        %v1413 = vlaneseq
        %v1414 = vshrl.u32 %v1413, 7
        %v1415 = vsub.s32 0, %v1414
        %v1416 = vrot.slane %v364, %v1415
        %v1418 = vmul.f32 %v1410, %v1416
        %v1419 = vmul.f32 %v1411, %v1416
        %v1421 = vlaneseq
        %v1422 = vshrl.u32 %v1421, 7
        %v1423 = vsub.s32 0, %v1422
        %v1424 = vrot.slane %v365, %v1423
        %v1426 = vadd.f32 %v1418, %v1424
        %v1427 = vadd.f32 %v1419, %v1424
        %v1429 = vlaneseq
        %v1430 = vshrl.u32 %v1429, 7
        %v1431 = vsub.s32 0, %v1430
        %v1432 = vrot.slane %v354, %v1431
        %v1435 = vsel %vm375, %v1426, 0
        %v1438 = vsel %vm375, %v1427, 0
        %1440 = vmatprep.subr.mxu0 0.0
        %1441 = vmatpush1.msra.mxu0 %v350
        %1442 = vmatprep.subr.mxu0 0.0
        %1443 = vmatpush1.msra.mxu0 %v351
        %1444 = vmatprep.subr.mxu0 0.0
        %1445 = vmatpush1.msra.mxu0 %v352
        %1446 = vmatprep.subr.mxu0 0.0
        %1447 = vmatpush1.msra.mxu0 %v353
        %1448 = vmatprep.subr.mxu0 0.0
        %1449 = vmatpush1.msra.mxu0 0.0
        %1450 = vmatprep.subr.mxu0 0.0
        %1451 = vmatpush1.msra.mxu0 0.0
        %1452 = vmatprep.subr.mxu0 0.0
        %1453 = vmatpush1.msra.mxu0 0.0
        %1454 = vmatprep.subr.mxu0 0.0
        %1455 = vmatpush1.msra.mxu0 0.0
        %1456 = vmatprep.subr.mxu0 0.0
        %1457 = vmatpush1.msra.mxu0 0.0
        %1458 = vmatprep.subr.mxu0 0.0
        %1459 = vmatpush1.msra.mxu0 0.0
        %1460 = vmatprep.subr.mxu0 0.0
        %1461 = vmatpush1.msra.mxu0 0.0
        %1462 = vmatprep.subr.mxu0 0.0
        %1463 = vmatpush1.msra.mxu0 0.0
        %1464 = vmatprep.subr.mxu0 0.0
        %1465 = vmatpush1.msra.mxu0 0.0
        %1466 = vmatprep.subr.mxu0 0.0
        %1467 = vmatpush1.msra.mxu0 0.0
        %1468 = vmatprep.subr.mxu0 0.0
        %1469 = vmatpush1.msra.mxu0 0.0
        %1470 = vmatprep.subr.mxu0 0.0
        %1471 = vmatpush1.msra.mxu0 0.0
        %1472 = vmatprep.subr.mxu0 0.0
        %1473 = vmatpush1.msra.mxu0 0.0
        %1474 = vmatprep.subr.mxu0 0.0
        %1475 = vmatpush1.msra.mxu0 0.0
        %1476 = vmatprep.subr.mxu0 0.0
        %1477 = vmatpush1.msra.mxu0 0.0
        %1478 = vmatprep.subr.mxu0 0.0
        %1479 = vmatpush1.msra.mxu0 0.0
        %1480 = vmatprep.subr.mxu0 0.0
        %1481 = vmatpush1.msra.mxu0 0.0
        %1482 = vmatprep.subr.mxu0 0.0
        %1483 = vmatpush1.msra.mxu0 0.0
        %1484 = vmatprep.subr.mxu0 0.0
        %1485 = vmatpush1.msra.mxu0 0.0
        %1486 = vmatprep.subr.mxu0 0.0
        %1487 = vmatpush1.msra.mxu0 0.0
        %1488 = vmatprep.subr.mxu0 0.0
        %1489 = vmatpush1.msra.mxu0 0.0
        %1490 = vmatprep.subr.mxu0 0.0
        %1491 = vmatpush1.msra.mxu0 0.0
        %1492 = vmatprep.subr.mxu0 0.0
        %1493 = vmatpush1.msra.mxu0 0.0
        %1494 = vmatprep.subr.mxu0 0.0
        %1495 = vmatpush1.msra.mxu0 0.0
        %1496 = vmatprep.subr.mxu0 0.0
        %1497 = vmatpush1.msra.mxu0 0.0
        %1498 = vmatprep.subr.mxu0 0.0
        %1499 = vmatpush1.msra.mxu0 0.0
        %1500 = vmatprep.subr.mxu0 0.0
        %1501 = vmatpush1.msra.mxu0 0.0
        %1502 = vmatprep.subr.mxu0 0.0
        %1503 = vmatpush1.msra.mxu0 0.0
        %1504 = vmatprep.mubr.f32.mxu0 0.0
        %1505 = vmatmul.mubr.f32.gmra.mrb[0].mxu0 %v1435
        %v1506 = vpop.f32.mrb[0].mxu0
        %v1507 = vadd.f32 %v1432, %v1506
        %v1508 = vpop.f32.mrb[0].mxu0
        %1509 = vmatprep.mubr.f32.mxu0 0.0
        %1510 = vmatmul.mubr.f32.gmra.mrb[0].mxu0 %v1438
        %v1511 = vpop.f32.mrb[0].mxu0
        %v1512 = vadd.f32 %v1432, %v1511
        %v1513 = vpop.f32.mrb[0].mxu0
        %1514 = vdwg.mxu0
        %v1515 = vmax.f32 %v1507, 0.0
        %v1516 = vmax.f32 %v1512, 0.0
        %v1518 = vlaneseq
        %v1519 = vshrl.u32 %v1518, 7
        %v1520 = vsub.s32 0, %v1519
        %v1521 = vrot.slane %v368, %v1520
        %vm1523 = vcmask 523264
        %v1525 = vsel %vm1523, %v1515, 0
        %v1528 = vsel %vm1523, %v1516, 0
        %1530 = vmatprep.subr.mxu0 0.0
        %1531 = vmatpush1.msra.mxu0 %v355
        %1532 = vmatprep.subr.mxu0 0.0
        %1533 = vmatpush1.msra.mxu0 %v356
        %1534 = vmatprep.subr.mxu0 0.0
        %1535 = vmatpush1.msra.mxu0 %v357
        %1536 = vmatprep.subr.mxu0 0.0
        %1537 = vmatpush1.msra.mxu0 %v358
        %1538 = vmatprep.subr.mxu0 0.0
        %1539 = vmatpush1.msra.mxu0 %v359
        %1540 = vmatprep.subr.mxu0 0.0
        %1541 = vmatpush1.msra.mxu0 %v360
        %1542 = vmatprep.subr.mxu0 0.0
        %1543 = vmatpush1.msra.mxu0 %v361
        %1544 = vmatprep.subr.mxu0 0.0
        %1545 = vmatpush1.msra.mxu0 %v362
        %1546 = vmatprep.subr.mxu0 0.0
        %1547 = vmatpush1.msra.mxu0 0.0
        %1548 = vmatprep.subr.mxu0 0.0
        %1549 = vmatpush1.msra.mxu0 0.0
        %1550 = vmatprep.subr.mxu0 0.0
        %1551 = vmatpush1.msra.mxu0 0.0
        %1552 = vmatprep.subr.mxu0 0.0
        %1553 = vmatpush1.msra.mxu0 0.0
        %1554 = vmatprep.subr.mxu0 0.0
        %1555 = vmatpush1.msra.mxu0 0.0
        %1556 = vmatprep.subr.mxu0 0.0
        %1557 = vmatpush1.msra.mxu0 0.0
        %1558 = vmatprep.subr.mxu0 0.0
        %1559 = vmatpush1.msra.mxu0 0.0
        %1560 = vmatprep.subr.mxu0 0.0
        %1561 = vmatpush1.msra.mxu0 0.0
        %1562 = vmatprep.subr.mxu0 0.0
        %1563 = vmatpush1.msra.mxu0 0.0
        %1564 = vmatprep.subr.mxu0 0.0
        %1565 = vmatpush1.msra.mxu0 0.0
        %1566 = vmatprep.subr.mxu0 0.0
        %1567 = vmatpush1.msra.mxu0 0.0
        %1568 = vmatprep.subr.mxu0 0.0
        %1569 = vmatpush1.msra.mxu0 0.0
        %1570 = vmatprep.subr.mxu0 0.0
        %1571 = vmatpush1.msra.mxu0 0.0
        %1572 = vmatprep.subr.mxu0 0.0
        %1573 = vmatpush1.msra.mxu0 0.0
        %1574 = vmatprep.subr.mxu0 0.0
        %1575 = vmatpush1.msra.mxu0 0.0
        %1576 = vmatprep.subr.mxu0 0.0
        %1577 = vmatpush1.msra.mxu0 0.0
        %1578 = vmatprep.subr.mxu0 0.0
        %1579 = vmatpush1.msra.mxu0 0.0
        %1580 = vmatprep.subr.mxu0 0.0
        %1581 = vmatpush1.msra.mxu0 0.0
        %1582 = vmatprep.subr.mxu0 0.0
        %1583 = vmatpush1.msra.mxu0 0.0
        %1584 = vmatprep.subr.mxu0 0.0
        %1585 = vmatpush1.msra.mxu0 0.0
        %1586 = vmatprep.subr.mxu0 0.0
        %1587 = vmatpush1.msra.mxu0 0.0
        %1588 = vmatprep.subr.mxu0 0.0
        %1589 = vmatpush1.msra.mxu0 0.0
        %1590 = vmatprep.subr.mxu0 0.0
        %1591 = vmatpush1.msra.mxu0 0.0
        %1592 = vmatprep.subr.mxu0 0.0
        %1593 = vmatpush1.msra.mxu0 0.0
        %1594 = vmatprep.mubr.f32.mxu0 0.0
        %1595 = vmatmul.mubr.f32.gmra.mrb[0].mxu0 %v1525
        %v1596 = vpop.f32.mrb[0].mxu0
        %v1597 = vadd.f32 %v1521, %v1596
        %v1598 = vpop.f32.mrb[0].mxu0
        %1599 = vmatprep.mubr.f32.mxu0 0.0
        %1600 = vmatmul.mubr.f32.gmra.mrb[0].mxu0 %v1528
        %v1601 = vpop.f32.mrb[0].mxu0
        %v1602 = vadd.f32 %v1521, %v1601
        %v1603 = vpop.f32.mrb[0].mxu0
        %1604 = vdwg.mxu0
        %v1605 = vadd.f32 %v1426, %v1597
        %v1606 = vadd.f32 %v1427, %v1602
        %v1607 = vsel %vm375, %v1605, 0.0
        %1608 = vadd.xlane.f32.xlu0 %v1607
        %v1609 = vpop.xlane.xlu0 %1608
        %v1610 = vsel %vm375, %v1606, 0.0
        %1611 = vadd.xlane.f32.xlu0 %v1610
        %v1612 = vpop.xlane.xlu0 %1611
        %v1613 = vmul.f32 %v1609, %v1391
        %v1614 = vmul.f32 %v1612, %v1391
        %v1615 = vsub.f32 %v1605, %v1613
        %v1616 = vsub.f32 %v1606, %v1614
        %v1617 = vmul.f32 %v1615, %v1615
        %v1618 = vmul.f32 %v1616, %v1616
        %v1619 = vsel %vm375, %v1617, 0.0
        %1620 = vadd.xlane.f32.xlu0 %v1619
        %v1621 = vpop.xlane.xlu0 %1620
        %v1622 = vsel %vm375, %v1618, 0.0
        %1623 = vadd.xlane.f32.xlu0 %v1622
        %v1624 = vpop.xlane.xlu0 %1623
        %v1625 = vmul.f32 %v1621, %v1391
        %v1626 = vmul.f32 %v1624, %v1391
        %v1627 = vadd.f32 %v1625, 1e-05
        %v1628 = vadd.f32 %v1626, 1e-05
        %v1629 = vrsqrt.pop %v1627
        %v1630 = vrsqrt.pop %v1628
        %v1631 = vmul.f32 %v1615, %v1629
        %v1632 = vmul.f32 %v1616, %v1630
        %v1634 = vlaneseq
        %v1635 = vshrl.u32 %v1634, 7
        %v1636 = vsub.s32 0, %v1635
        %v1637 = vrot.slane %v366, %v1636
        %v1639 = vmul.f32 %v1631, %v1637
        %v1640 = vmul.f32 %v1632, %v1637
        %v1642 = vlaneseq
        %v1643 = vshrl.u32 %v1642, 7
        %v1644 = vsub.s32 0, %v1643
        %v1645 = vrot.slane %v367, %v1644
        %v1647 = vadd.f32 %v1639, %v1645
        %v1648 = vadd.f32 %v1640, %v1645
        %s1649 = scalar_lea.vmem %s1, 32
        %v1650 = vld [vmem:[%s1649] sm:$0xff]
        %v1651 = vld [vmem:[%s1649 + $0x8] sm:$0xff]
        %v1652 = vld [vmem:[%s1649 + $0x10] sm:$0xff]
        %v1653 = vld [vmem:[%s1649 + $0x18] sm:$0xff]
        %s1654 = scalar_lea.vmem %s2, 1
        %v1655 = vld [vmem:[%s1654] sm:$0x1]
        %s1656 = scalar_lea.vmem %s3, 32
        %v1657 = vld [vmem:[%s1656] sm:$0xff]
        %v1658 = vld [vmem:[%s1656 + $0x8] sm:$0xff]
        %v1659 = vld [vmem:[%s1656 + $0x10] sm:$0xff]
        %v1660 = vld [vmem:[%s1656 + $0x18] sm:$0xff]
        %s1661 = scalar_lea.vmem %s4, 32
        %v1662 = vld [vmem:[%s1661] sm:$0xff]
        %v1663 = vld [vmem:[%s1661 + $0x8] sm:$0xff]
        %v1664 = vld [vmem:[%s1661 + $0x10] sm:$0xff]
        %v1665 = vld [vmem:[%s1661 + $0x18] sm:$0xff]
        %s1666 = scalar_lea.vmem [#allocation5], 1
        %v1667 = vld [vmem:[%s1666] sm:$0x1]
        %s1668 = scalar_lea.vmem %s6, 64
        %v1669 = vld [vmem:[%s1668] sm:$0xff]
        %v1670 = vld [vmem:[%s1668 + $0x8] sm:$0xff]
        %v1671 = vld [vmem:[%s1668 + $0x10] sm:$0xff]
        %v1672 = vld [vmem:[%s1668 + $0x18] sm:$0xff]
        %v1673 = vld [vmem:[%s1668 + $0x20] sm:$0xff]
        %v1674 = vld [vmem:[%s1668 + $0x28] sm:$0xff]
        %v1675 = vld [vmem:[%s1668 + $0x30] sm:$0xff]
        %v1676 = vld [vmem:[%s1668 + $0x38] sm:$0xff]
        %s1677 = scalar_lea.vmem %s7, 6
        %v1678 = vld [vmem:[%s1677] sm:$0x1]
        %v1679 = vld [vmem:[%s1677 + $0x1] sm:$0x1]
        %v1680 = vld [vmem:[%s1677 + $0x2] sm:$0x1]
        %v1681 = vld [vmem:[%s1677 + $0x3] sm:$0x1]
        %v1682 = vld [vmem:[%s1677 + $0x4] sm:$0x1]
        %v1683 = vld [vmem:[%s1677 + $0x5] sm:$0x1]
        %v1685 = vlaneseq
        %v1686 = vshrl.u32 %v1685, 7
        %v1687 = vsub.s32 0, %v1686
        %v1688 = vrot.slane %v1655, %v1687
        %v1691 = vsel %vm375, %v1647, 0
        %v1694 = vsel %vm375, %v1648, 0
        %1696 = vmatprep.subr.mxu0 0.0
        %1697 = vmatpush1.msra.mxu0 %v1650
        %1698 = vmatprep.subr.mxu0 0.0
        %1699 = vmatpush1.msra.mxu0 %v1651
        %1700 = vmatprep.subr.mxu0 0.0
        %1701 = vmatpush1.msra.mxu0 %v1652
        %1702 = vmatprep.subr.mxu0 0.0
        %1703 = vmatpush1.msra.mxu0 %v1653
        %1704 = vmatprep.subr.mxu0 0.0
        %1705 = vmatpush1.msra.mxu0 0.0
        %1706 = vmatprep.subr.mxu0 0.0
        %1707 = vmatpush1.msra.mxu0 0.0
        %1708 = vmatprep.subr.mxu0 0.0
        %1709 = vmatpush1.msra.mxu0 0.0
        %1710 = vmatprep.subr.mxu0 0.0
        %1711 = vmatpush1.msra.mxu0 0.0
        %1712 = vmatprep.subr.mxu0 0.0
        %1713 = vmatpush1.msra.mxu0 0.0
        %1714 = vmatprep.subr.mxu0 0.0
        %1715 = vmatpush1.msra.mxu0 0.0
        %1716 = vmatprep.subr.mxu0 0.0
        %1717 = vmatpush1.msra.mxu0 0.0
        %1718 = vmatprep.subr.mxu0 0.0
        %1719 = vmatpush1.msra.mxu0 0.0
        %1720 = vmatprep.subr.mxu0 0.0
        %1721 = vmatpush1.msra.mxu0 0.0
        %1722 = vmatprep.subr.mxu0 0.0
        %1723 = vmatpush1.msra.mxu0 0.0
        %1724 = vmatprep.subr.mxu0 0.0
        %1725 = vmatpush1.msra.mxu0 0.0
        %1726 = vmatprep.subr.mxu0 0.0
        %1727 = vmatpush1.msra.mxu0 0.0
        %1728 = vmatprep.subr.mxu0 0.0
        %1729 = vmatpush1.msra.mxu0 0.0
        %1730 = vmatprep.subr.mxu0 0.0
        %1731 = vmatpush1.msra.mxu0 0.0
        %1732 = vmatprep.subr.mxu0 0.0
        %1733 = vmatpush1.msra.mxu0 0.0
        %1734 = vmatprep.subr.mxu0 0.0
        %1735 = vmatpush1.msra.mxu0 0.0
        %1736 = vmatprep.subr.mxu0 0.0
        %1737 = vmatpush1.msra.mxu0 0.0
        %1738 = vmatprep.subr.mxu0 0.0
        %1739 = vmatpush1.msra.mxu0 0.0
        %1740 = vmatprep.subr.mxu0 0.0
        %1741 = vmatpush1.msra.mxu0 0.0
        %1742 = vmatprep.subr.mxu0 0.0
        %1743 = vmatpush1.msra.mxu0 0.0
        %1744 = vmatprep.subr.mxu0 0.0
        %1745 = vmatpush1.msra.mxu0 0.0
        %1746 = vmatprep.subr.mxu0 0.0
        %1747 = vmatpush1.msra.mxu0 0.0
        %1748 = vmatprep.subr.mxu0 0.0
        %1749 = vmatpush1.msra.mxu0 0.0
        %1750 = vmatprep.subr.mxu0 0.0
        %1751 = vmatpush1.msra.mxu0 0.0
        %1752 = vmatprep.subr.mxu0 0.0
        %1753 = vmatpush1.msra.mxu0 0.0
        %1754 = vmatprep.subr.mxu0 0.0
        %1755 = vmatpush1.msra.mxu0 0.0
        %1756 = vmatprep.subr.mxu0 0.0
        %1757 = vmatpush1.msra.mxu0 0.0
        %1758 = vmatprep.subr.mxu0 0.0
        %1759 = vmatpush1.msra.mxu0 0.0
        %1760 = vmatprep.mubr.f32.mxu0 0.0
        %1761 = vmatmul.mubr.f32.gmra.mrb[0].mxu0 %v1691
        %v1762 = vpop.f32.mrb[0].mxu0
        %v1763 = vadd.f32 %v1688, %v1762
        %v1764 = vpop.f32.mrb[0].mxu0
        %1765 = vmatprep.mubr.f32.mxu0 0.0
        %1766 = vmatmul.mubr.f32.gmra.mrb[0].mxu0 %v1694
        %v1767 = vpop.f32.mrb[0].mxu0
        %v1768 = vadd.f32 %v1688, %v1767
        %v1769 = vpop.f32.mrb[0].mxu0
        %1770 = vdwg.mxu0
        %1773 = vrot.lane.b32.xlu0 %v1763, 96
        %v1774 = vpop.permute.xlu0 %1773
        %1775 = vrot.lane.b32.xlu0 %v1768, 96
        %v1776 = vpop.permute.xlu0 %1775
        %v1777 = vsel %vm463, %v1763, 0
        %v1779 = vsel %vm463, %v1768, 0
        %v1781 = vsel %vm463, %v1774, 0
        %v1783 = vsel %vm463, %v1776, 0
        %1785 = vmatprep.subr.mxu0 0.0
        %1786 = vmatpush1.xpose.msra.mxu0 %v1781
        %1787 = vmatprep.subr.mxu0 0.0
        %1788 = vmatpush1.xpose.msra.mxu0 %v1783
        %1789 = vmatprep.subr.mxu0 0.0
        %1790 = vmatpush1.xpose.msra.mxu0 0.0
        %1791 = vmatprep.subr.mxu0 0.0
        %1792 = vmatpush1.xpose.msra.mxu0 0.0
        %1793 = vmatprep.subr.mxu0 0.0
        %1794 = vmatpush1.xpose.msra.mxu0 0.0
        %1795 = vmatprep.subr.mxu0 0.0
        %1796 = vmatpush1.xpose.msra.mxu0 0.0
        %1797 = vmatprep.subr.mxu0 0.0
        %1798 = vmatpush1.xpose.msra.mxu0 0.0
        %1799 = vmatprep.subr.mxu0 0.0
        %1800 = vmatpush1.xpose.msra.mxu0 0.0
        %1801 = vmatprep.subr.mxu0 0.0
        %1802 = vmatpush1.xpose.msra.mxu0 0.0
        %1803 = vmatprep.subr.mxu0 0.0
        %1804 = vmatpush1.xpose.msra.mxu0 0.0
        %1805 = vmatprep.subr.mxu0 0.0
        %1806 = vmatpush1.xpose.msra.mxu0 0.0
        %1807 = vmatprep.subr.mxu0 0.0
        %1808 = vmatpush1.xpose.msra.mxu0 0.0
        %1809 = vmatprep.subr.mxu0 0.0
        %1810 = vmatpush1.xpose.msra.mxu0 0.0
        %1811 = vmatprep.subr.mxu0 0.0
        %1812 = vmatpush1.xpose.msra.mxu0 0.0
        %1813 = vmatprep.subr.mxu0 0.0
        %1814 = vmatpush1.xpose.msra.mxu0 0.0
        %1815 = vmatprep.subr.mxu0 0.0
        %1816 = vmatpush1.xpose.msra.mxu0 0.0
        %1817 = vmatprep.subr.mxu0 0.0
        %1818 = vmatpush1.xpose.msra.mxu0 0.0
        %1819 = vmatprep.subr.mxu0 0.0
        %1820 = vmatpush1.xpose.msra.mxu0 0.0
        %1821 = vmatprep.subr.mxu0 0.0
        %1822 = vmatpush1.xpose.msra.mxu0 0.0
        %1823 = vmatprep.subr.mxu0 0.0
        %1824 = vmatpush1.xpose.msra.mxu0 0.0
        %1825 = vmatprep.subr.mxu0 0.0
        %1826 = vmatpush1.xpose.msra.mxu0 0.0
        %1827 = vmatprep.subr.mxu0 0.0
        %1828 = vmatpush1.xpose.msra.mxu0 0.0
        %1829 = vmatprep.subr.mxu0 0.0
        %1830 = vmatpush1.xpose.msra.mxu0 0.0
        %1831 = vmatprep.subr.mxu0 0.0
        %1832 = vmatpush1.xpose.msra.mxu0 0.0
        %1833 = vmatprep.subr.mxu0 0.0
        %1834 = vmatpush1.xpose.msra.mxu0 0.0
        %1835 = vmatprep.subr.mxu0 0.0
        %1836 = vmatpush1.xpose.msra.mxu0 0.0
        %1837 = vmatprep.subr.mxu0 0.0
        %1838 = vmatpush1.xpose.msra.mxu0 0.0
        %1839 = vmatprep.subr.mxu0 0.0
        %1840 = vmatpush1.xpose.msra.mxu0 0.0
        %1841 = vmatprep.subr.mxu0 0.0
        %1842 = vmatpush1.xpose.msra.mxu0 0.0
        %1843 = vmatprep.subr.mxu0 0.0
        %1844 = vmatpush1.xpose.msra.mxu0 0.0
        %1845 = vmatprep.subr.mxu0 0.0
        %1846 = vmatpush1.xpose.msra.mxu0 0.0
        %1847 = vmatprep.subr.mxu0 0.0
        %1848 = vmatpush1.xpose.msra.mxu0 0.0
        %1849 = vmatprep.mubr.f32.mxu0 0.0
        %1850 = vmatmul.mubr.f32.gmra.mrb[0].mxu0 %v1777
        %v1851 = vpop.f32.mrb[0].mxu0
        %v1852 = vadd.f32 0.0, %v1851
        %v1853 = vpop.f32.mrb[0].mxu0
        %1854 = vmatprep.mubr.f32.mxu0 0.0
        %1855 = vmatmul.mubr.f32.gmra.mrb[0].mxu0 %v1779
        %v1856 = vpop.f32.mrb[0].mxu0
        %v1857 = vadd.f32 0.0, %v1856
        %v1858 = vpop.f32.mrb[0].mxu0
        %1859 = vdwg.mxu0
        %v1860 = vmul.f32 %v1852, 0.35355338
        %v1861 = vmul.f32 %v1857, 0.35355338
        %v1862 = vsel %vm549, %v1860, -inf
        %1863 = vmax.xlane.f32.xlu0 %v1862
        %v1864 = vpop.xlane.xlu0 %1863
        %v1865 = vsel %vm549, %v1861, -inf
        %1866 = vmax.xlane.f32.xlu0 %v1865
        %v1867 = vpop.xlane.xlu0 %1866
        %v1868 = vsub.f32 %v1860, %v1864
        %v1869 = vsub.f32 %v1861, %v1867
        %v1870 = vmul.f32 %v1868, 1.442695
        %v1871 = vpow.pop %v1870
        %v1872 = vmul.f32 %v1869, 1.442695
        %v1873 = vpow.pop %v1872
        %v1874 = vsel %vm549, %v1871, 0.0
        %1875 = vadd.xlane.f32.xlu0 %v1874
        %v1876 = vpop.xlane.xlu0 %1875
        %v1877 = vsel %vm549, %v1873, 0.0
        %1878 = vadd.xlane.f32.xlu0 %v1877
        %v1879 = vpop.xlane.xlu0 %1878
        %v1880 = vrcp.pop %v1876
        %v1881 = vmul.f32 %v1871, %v1880
        %v1882 = vrcp.pop %v1879
        %v1883 = vmul.f32 %v1873, %v1882
        %1884 = vrot.lane.b32.xlu0 %v1763, 64
        %v1885 = vpop.permute.xlu0 %1884
        %1886 = vrot.lane.b32.xlu0 %v1768, 64
        %v1887 = vpop.permute.xlu0 %1886
        %v1891 = vsel %vm549, %v1881, 0
        %v1894 = vsel %vm549, %v1883, 0
        %1896 = vmatprep.subr.mxu0 0.0
        %1897 = vmatpush1.msra.mxu0 %v1885
        %1898 = vmatprep.subr.mxu0 0.0
        %1899 = vmatpush1.msra.mxu0 %v1887
        %1900 = vmatprep.subr.mxu0 0.0
        %1901 = vmatpush1.msra.mxu0 0.0
        %1902 = vmatprep.subr.mxu0 0.0
        %1903 = vmatpush1.msra.mxu0 0.0
        %1904 = vmatprep.subr.mxu0 0.0
        %1905 = vmatpush1.msra.mxu0 0.0
        %1906 = vmatprep.subr.mxu0 0.0
        %1907 = vmatpush1.msra.mxu0 0.0
        %1908 = vmatprep.subr.mxu0 0.0
        %1909 = vmatpush1.msra.mxu0 0.0
        %1910 = vmatprep.subr.mxu0 0.0
        %1911 = vmatpush1.msra.mxu0 0.0
        %1912 = vmatprep.subr.mxu0 0.0
        %1913 = vmatpush1.msra.mxu0 0.0
        %1914 = vmatprep.subr.mxu0 0.0
        %1915 = vmatpush1.msra.mxu0 0.0
        %1916 = vmatprep.subr.mxu0 0.0
        %1917 = vmatpush1.msra.mxu0 0.0
        %1918 = vmatprep.subr.mxu0 0.0
        %1919 = vmatpush1.msra.mxu0 0.0
        %1920 = vmatprep.subr.mxu0 0.0
        %1921 = vmatpush1.msra.mxu0 0.0
        %1922 = vmatprep.subr.mxu0 0.0
        %1923 = vmatpush1.msra.mxu0 0.0
        %1924 = vmatprep.subr.mxu0 0.0
        %1925 = vmatpush1.msra.mxu0 0.0
        %1926 = vmatprep.subr.mxu0 0.0
        %1927 = vmatpush1.msra.mxu0 0.0
        %1928 = vmatprep.subr.mxu0 0.0
        %1929 = vmatpush1.msra.mxu0 0.0
        %1930 = vmatprep.subr.mxu0 0.0
        %1931 = vmatpush1.msra.mxu0 0.0
        %1932 = vmatprep.subr.mxu0 0.0
        %1933 = vmatpush1.msra.mxu0 0.0
        %1934 = vmatprep.subr.mxu0 0.0
        %1935 = vmatpush1.msra.mxu0 0.0
        %1936 = vmatprep.subr.mxu0 0.0
        %1937 = vmatpush1.msra.mxu0 0.0
        %1938 = vmatprep.subr.mxu0 0.0
        %1939 = vmatpush1.msra.mxu0 0.0
        %1940 = vmatprep.subr.mxu0 0.0
        %1941 = vmatpush1.msra.mxu0 0.0
        %1942 = vmatprep.subr.mxu0 0.0
        %1943 = vmatpush1.msra.mxu0 0.0
        %1944 = vmatprep.subr.mxu0 0.0
        %1945 = vmatpush1.msra.mxu0 0.0
        %1946 = vmatprep.subr.mxu0 0.0
        %1947 = vmatpush1.msra.mxu0 0.0
        %1948 = vmatprep.subr.mxu0 0.0
        %1949 = vmatpush1.msra.mxu0 0.0
        %1950 = vmatprep.subr.mxu0 0.0
        %1951 = vmatpush1.msra.mxu0 0.0
        %1952 = vmatprep.subr.mxu0 0.0
        %1953 = vmatpush1.msra.mxu0 0.0
        %1954 = vmatprep.subr.mxu0 0.0
        %1955 = vmatpush1.msra.mxu0 0.0
        %1956 = vmatprep.subr.mxu0 0.0
        %1957 = vmatpush1.msra.mxu0 0.0
        %1958 = vmatprep.subr.mxu0 0.0
        %1959 = vmatpush1.msra.mxu0 0.0
        %1960 = vmatprep.mubr.f32.mxu0 0.0
        %1961 = vmatmul.mubr.f32.gmra.mrb[0].mxu0 %v1891
        %v1962 = vpop.f32.mrb[0].mxu0
        %v1963 = vadd.f32 0.0, %v1962
        %v1964 = vpop.f32.mrb[0].mxu0
        %1965 = vmatprep.mubr.f32.mxu0 0.0
        %1966 = vmatmul.mubr.f32.gmra.mrb[0].mxu0 %v1894
        %v1967 = vpop.f32.mrb[0].mxu0
        %v1968 = vadd.f32 0.0, %v1967
        %v1969 = vpop.f32.mrb[0].mxu0
        %1970 = vdwg.mxu0
        %1971 = vrot.lane.b32.xlu0 %v1763, 120
        %v1972 = vpop.permute.xlu0 %1971
        %1973 = vrot.lane.b32.xlu0 %v1768, 120
        %v1974 = vpop.permute.xlu0 %1973
        %1975 = vrot.lane.b32.xlu0 %v1763, 88
        %v1976 = vpop.permute.xlu0 %1975
        %1977 = vrot.lane.b32.xlu0 %v1768, 88
        %v1978 = vpop.permute.xlu0 %1977
        %v1979 = vsel %vm463, %v1972, 0
        %v1981 = vsel %vm463, %v1974, 0
        %v1983 = vsel %vm463, %v1976, 0
        %v1985 = vsel %vm463, %v1978, 0
        %1987 = vmatprep.subr.mxu0 0.0
        %1988 = vmatpush1.xpose.msra.mxu0 %v1983
        %1989 = vmatprep.subr.mxu0 0.0
        %1990 = vmatpush1.xpose.msra.mxu0 %v1985
        %1991 = vmatprep.subr.mxu0 0.0
        %1992 = vmatpush1.xpose.msra.mxu0 0.0
        %1993 = vmatprep.subr.mxu0 0.0
        %1994 = vmatpush1.xpose.msra.mxu0 0.0
        %1995 = vmatprep.subr.mxu0 0.0
        %1996 = vmatpush1.xpose.msra.mxu0 0.0
        %1997 = vmatprep.subr.mxu0 0.0
        %1998 = vmatpush1.xpose.msra.mxu0 0.0
        %1999 = vmatprep.subr.mxu0 0.0
        %2000 = vmatpush1.xpose.msra.mxu0 0.0
        %2001 = vmatprep.subr.mxu0 0.0
        %2002 = vmatpush1.xpose.msra.mxu0 0.0
        %2003 = vmatprep.subr.mxu0 0.0
        %2004 = vmatpush1.xpose.msra.mxu0 0.0
        %2005 = vmatprep.subr.mxu0 0.0
        %2006 = vmatpush1.xpose.msra.mxu0 0.0
        %2007 = vmatprep.subr.mxu0 0.0
        %2008 = vmatpush1.xpose.msra.mxu0 0.0
        %2009 = vmatprep.subr.mxu0 0.0
        %2010 = vmatpush1.xpose.msra.mxu0 0.0
        %2011 = vmatprep.subr.mxu0 0.0
        %2012 = vmatpush1.xpose.msra.mxu0 0.0
        %2013 = vmatprep.subr.mxu0 0.0
        %2014 = vmatpush1.xpose.msra.mxu0 0.0
        %2015 = vmatprep.subr.mxu0 0.0
        %2016 = vmatpush1.xpose.msra.mxu0 0.0
        %2017 = vmatprep.subr.mxu0 0.0
        %2018 = vmatpush1.xpose.msra.mxu0 0.0
        %2019 = vmatprep.subr.mxu0 0.0
        %2020 = vmatpush1.xpose.msra.mxu0 0.0
        %2021 = vmatprep.subr.mxu0 0.0
        %2022 = vmatpush1.xpose.msra.mxu0 0.0
        %2023 = vmatprep.subr.mxu0 0.0
        %2024 = vmatpush1.xpose.msra.mxu0 0.0
        %2025 = vmatprep.subr.mxu0 0.0
        %2026 = vmatpush1.xpose.msra.mxu0 0.0
        %2027 = vmatprep.subr.mxu0 0.0
        %2028 = vmatpush1.xpose.msra.mxu0 0.0
        %2029 = vmatprep.subr.mxu0 0.0
        %2030 = vmatpush1.xpose.msra.mxu0 0.0
        %2031 = vmatprep.subr.mxu0 0.0
        %2032 = vmatpush1.xpose.msra.mxu0 0.0
        %2033 = vmatprep.subr.mxu0 0.0
        %2034 = vmatpush1.xpose.msra.mxu0 0.0
        %2035 = vmatprep.subr.mxu0 0.0
        %2036 = vmatpush1.xpose.msra.mxu0 0.0
        %2037 = vmatprep.subr.mxu0 0.0
        %2038 = vmatpush1.xpose.msra.mxu0 0.0
        %2039 = vmatprep.subr.mxu0 0.0
        %2040 = vmatpush1.xpose.msra.mxu0 0.0
        %2041 = vmatprep.subr.mxu0 0.0
        %2042 = vmatpush1.xpose.msra.mxu0 0.0
        %2043 = vmatprep.subr.mxu0 0.0
        %2044 = vmatpush1.xpose.msra.mxu0 0.0
        %2045 = vmatprep.subr.mxu0 0.0
        %2046 = vmatpush1.xpose.msra.mxu0 0.0
        %2047 = vmatprep.subr.mxu0 0.0
        %2048 = vmatpush1.xpose.msra.mxu0 0.0
        %2049 = vmatprep.subr.mxu0 0.0
        %2050 = vmatpush1.xpose.msra.mxu0 0.0
        %2051 = vmatprep.mubr.f32.mxu0 0.0
        %2052 = vmatmul.mubr.f32.gmra.mrb[0].mxu0 %v1979
        %v2053 = vpop.f32.mrb[0].mxu0
        %v2054 = vadd.f32 0.0, %v2053
        %v2055 = vpop.f32.mrb[0].mxu0
        %2056 = vmatprep.mubr.f32.mxu0 0.0
        %2057 = vmatmul.mubr.f32.gmra.mrb[0].mxu0 %v1981
        %v2058 = vpop.f32.mrb[0].mxu0
        %v2059 = vadd.f32 0.0, %v2058
        %v2060 = vpop.f32.mrb[0].mxu0
        %2061 = vdwg.mxu0
        %v2062 = vmul.f32 %v2054, 0.35355338
        %v2063 = vmul.f32 %v2059, 0.35355338
        %v2064 = vsel %vm549, %v2062, -inf
        %2065 = vmax.xlane.f32.xlu0 %v2064
        %v2066 = vpop.xlane.xlu0 %2065
        %v2067 = vsel %vm549, %v2063, -inf
        %2068 = vmax.xlane.f32.xlu0 %v2067
        %v2069 = vpop.xlane.xlu0 %2068
        %v2070 = vsub.f32 %v2062, %v2066
        %v2071 = vsub.f32 %v2063, %v2069
        %v2072 = vmul.f32 %v2070, 1.442695
        %v2073 = vpow.pop %v2072
        %v2074 = vmul.f32 %v2071, 1.442695
        %v2075 = vpow.pop %v2074
        %v2076 = vsel %vm549, %v2073, 0.0
        %2077 = vadd.xlane.f32.xlu0 %v2076
        %v2078 = vpop.xlane.xlu0 %2077
        %v2079 = vsel %vm549, %v2075, 0.0
        %2080 = vadd.xlane.f32.xlu0 %v2079
        %v2081 = vpop.xlane.xlu0 %2080
        %v2082 = vrcp.pop %v2078
        %v2083 = vmul.f32 %v2073, %v2082
        %v2084 = vrcp.pop %v2081
        %v2085 = vmul.f32 %v2075, %v2084
        %2086 = vrot.lane.b32.xlu0 %v1763, 56
        %v2087 = vpop.permute.xlu0 %2086
        %2088 = vrot.lane.b32.xlu0 %v1768, 56
        %v2089 = vpop.permute.xlu0 %2088
        %v2093 = vsel %vm549, %v2083, 0
        %v2096 = vsel %vm549, %v2085, 0
        %2098 = vmatprep.subr.mxu0 0.0
        %2099 = vmatpush1.msra.mxu0 %v2087
        %2100 = vmatprep.subr.mxu0 0.0
        %2101 = vmatpush1.msra.mxu0 %v2089
        %2102 = vmatprep.subr.mxu0 0.0
        %2103 = vmatpush1.msra.mxu0 0.0
        %2104 = vmatprep.subr.mxu0 0.0
        %2105 = vmatpush1.msra.mxu0 0.0
        %2106 = vmatprep.subr.mxu0 0.0
        %2107 = vmatpush1.msra.mxu0 0.0
        %2108 = vmatprep.subr.mxu0 0.0
        %2109 = vmatpush1.msra.mxu0 0.0
        %2110 = vmatprep.subr.mxu0 0.0
        %2111 = vmatpush1.msra.mxu0 0.0
        %2112 = vmatprep.subr.mxu0 0.0
        %2113 = vmatpush1.msra.mxu0 0.0
        %2114 = vmatprep.subr.mxu0 0.0
        %2115 = vmatpush1.msra.mxu0 0.0
        %2116 = vmatprep.subr.mxu0 0.0
        %2117 = vmatpush1.msra.mxu0 0.0
        %2118 = vmatprep.subr.mxu0 0.0
        %2119 = vmatpush1.msra.mxu0 0.0
        %2120 = vmatprep.subr.mxu0 0.0
        %2121 = vmatpush1.msra.mxu0 0.0
        %2122 = vmatprep.subr.mxu0 0.0
        %2123 = vmatpush1.msra.mxu0 0.0
        %2124 = vmatprep.subr.mxu0 0.0
        %2125 = vmatpush1.msra.mxu0 0.0
        %2126 = vmatprep.subr.mxu0 0.0
        %2127 = vmatpush1.msra.mxu0 0.0
        %2128 = vmatprep.subr.mxu0 0.0
        %2129 = vmatpush1.msra.mxu0 0.0
        %2130 = vmatprep.subr.mxu0 0.0
        %2131 = vmatpush1.msra.mxu0 0.0
        %2132 = vmatprep.subr.mxu0 0.0
        %2133 = vmatpush1.msra.mxu0 0.0
        %2134 = vmatprep.subr.mxu0 0.0
        %2135 = vmatpush1.msra.mxu0 0.0
        %2136 = vmatprep.subr.mxu0 0.0
        %2137 = vmatpush1.msra.mxu0 0.0
        %2138 = vmatprep.subr.mxu0 0.0
        %2139 = vmatpush1.msra.mxu0 0.0
        %2140 = vmatprep.subr.mxu0 0.0
        %2141 = vmatpush1.msra.mxu0 0.0
        %2142 = vmatprep.subr.mxu0 0.0
        %2143 = vmatpush1.msra.mxu0 0.0
        %2144 = vmatprep.subr.mxu0 0.0
        %2145 = vmatpush1.msra.mxu0 0.0
        %2146 = vmatprep.subr.mxu0 0.0
        %2147 = vmatpush1.msra.mxu0 0.0
        %2148 = vmatprep.subr.mxu0 0.0
        %2149 = vmatpush1.msra.mxu0 0.0
        %2150 = vmatprep.subr.mxu0 0.0
        %2151 = vmatpush1.msra.mxu0 0.0
        %2152 = vmatprep.subr.mxu0 0.0
        %2153 = vmatpush1.msra.mxu0 0.0
        %2154 = vmatprep.subr.mxu0 0.0
        %2155 = vmatpush1.msra.mxu0 0.0
        %2156 = vmatprep.subr.mxu0 0.0
        %2157 = vmatpush1.msra.mxu0 0.0
        %2158 = vmatprep.subr.mxu0 0.0
        %2159 = vmatpush1.msra.mxu0 0.0
        %2160 = vmatprep.subr.mxu0 0.0
        %2161 = vmatpush1.msra.mxu0 0.0
        %2162 = vmatprep.mubr.f32.mxu0 0.0
        %2163 = vmatmul.mubr.f32.gmra.mrb[0].mxu0 %v2093
        %v2164 = vpop.f32.mrb[0].mxu0
        %v2165 = vadd.f32 0.0, %v2164
        %v2166 = vpop.f32.mrb[0].mxu0
        %2167 = vmatprep.mubr.f32.mxu0 0.0
        %2168 = vmatmul.mubr.f32.gmra.mrb[0].mxu0 %v2096
        %v2169 = vpop.f32.mrb[0].mxu0
        %v2170 = vadd.f32 0.0, %v2169
        %v2171 = vpop.f32.mrb[0].mxu0
        %2172 = vdwg.mxu0
        %2173 = vrot.lane.b32.xlu0 %v1763, 112
        %v2174 = vpop.permute.xlu0 %2173
        %2175 = vrot.lane.b32.xlu0 %v1768, 112
        %v2176 = vpop.permute.xlu0 %2175
        %2177 = vrot.lane.b32.xlu0 %v1763, 80
        %v2178 = vpop.permute.xlu0 %2177
        %2179 = vrot.lane.b32.xlu0 %v1768, 80
        %v2180 = vpop.permute.xlu0 %2179
        %v2181 = vsel %vm463, %v2174, 0
        %v2183 = vsel %vm463, %v2176, 0
        %v2185 = vsel %vm463, %v2178, 0
        %v2187 = vsel %vm463, %v2180, 0
        %2189 = vmatprep.subr.mxu0 0.0
        %2190 = vmatpush1.xpose.msra.mxu0 %v2185
        %2191 = vmatprep.subr.mxu0 0.0
        %2192 = vmatpush1.xpose.msra.mxu0 %v2187
        %2193 = vmatprep.subr.mxu0 0.0
        %2194 = vmatpush1.xpose.msra.mxu0 0.0
        %2195 = vmatprep.subr.mxu0 0.0
        %2196 = vmatpush1.xpose.msra.mxu0 0.0
        %2197 = vmatprep.subr.mxu0 0.0
        %2198 = vmatpush1.xpose.msra.mxu0 0.0
        %2199 = vmatprep.subr.mxu0 0.0
        %2200 = vmatpush1.xpose.msra.mxu0 0.0
        %2201 = vmatprep.subr.mxu0 0.0
        %2202 = vmatpush1.xpose.msra.mxu0 0.0
        %2203 = vmatprep.subr.mxu0 0.0
        %2204 = vmatpush1.xpose.msra.mxu0 0.0
        %2205 = vmatprep.subr.mxu0 0.0
        %2206 = vmatpush1.xpose.msra.mxu0 0.0
        %2207 = vmatprep.subr.mxu0 0.0
        %2208 = vmatpush1.xpose.msra.mxu0 0.0
        %2209 = vmatprep.subr.mxu0 0.0
        %2210 = vmatpush1.xpose.msra.mxu0 0.0
        %2211 = vmatprep.subr.mxu0 0.0
        %2212 = vmatpush1.xpose.msra.mxu0 0.0
        %2213 = vmatprep.subr.mxu0 0.0
        %2214 = vmatpush1.xpose.msra.mxu0 0.0
        %2215 = vmatprep.subr.mxu0 0.0
        %2216 = vmatpush1.xpose.msra.mxu0 0.0
        %2217 = vmatprep.subr.mxu0 0.0
        %2218 = vmatpush1.xpose.msra.mxu0 0.0
        %2219 = vmatprep.subr.mxu0 0.0
        %2220 = vmatpush1.xpose.msra.mxu0 0.0
        %2221 = vmatprep.subr.mxu0 0.0
        %2222 = vmatpush1.xpose.msra.mxu0 0.0
        %2223 = vmatprep.subr.mxu0 0.0
        %2224 = vmatpush1.xpose.msra.mxu0 0.0
        %2225 = vmatprep.subr.mxu0 0.0
        %2226 = vmatpush1.xpose.msra.mxu0 0.0
        %2227 = vmatprep.subr.mxu0 0.0
        %2228 = vmatpush1.xpose.msra.mxu0 0.0
        %2229 = vmatprep.subr.mxu0 0.0
        %2230 = vmatpush1.xpose.msra.mxu0 0.0
        %2231 = vmatprep.subr.mxu0 0.0
        %2232 = vmatpush1.xpose.msra.mxu0 0.0
        %2233 = vmatprep.subr.mxu0 0.0
        %2234 = vmatpush1.xpose.msra.mxu0 0.0
        %2235 = vmatprep.subr.mxu0 0.0
        %2236 = vmatpush1.xpose.msra.mxu0 0.0
        %2237 = vmatprep.subr.mxu0 0.0
        %2238 = vmatpush1.xpose.msra.mxu0 0.0
        %2239 = vmatprep.subr.mxu0 0.0
        %2240 = vmatpush1.xpose.msra.mxu0 0.0
        %2241 = vmatprep.subr.mxu0 0.0
        %2242 = vmatpush1.xpose.msra.mxu0 0.0
        %2243 = vmatprep.subr.mxu0 0.0
        %2244 = vmatpush1.xpose.msra.mxu0 0.0
        %2245 = vmatprep.subr.mxu0 0.0
        %2246 = vmatpush1.xpose.msra.mxu0 0.0
        %2247 = vmatprep.subr.mxu0 0.0
        %2248 = vmatpush1.xpose.msra.mxu0 0.0
        %2249 = vmatprep.subr.mxu0 0.0
        %2250 = vmatpush1.xpose.msra.mxu0 0.0
        %2251 = vmatprep.subr.mxu0 0.0
        %2252 = vmatpush1.xpose.msra.mxu0 0.0
        %2253 = vmatprep.mubr.f32.mxu0 0.0
        %2254 = vmatmul.mubr.f32.gmra.mrb[0].mxu0 %v2181
        %v2255 = vpop.f32.mrb[0].mxu0
        %v2256 = vadd.f32 0.0, %v2255
        %v2257 = vpop.f32.mrb[0].mxu0
        %2258 = vmatprep.mubr.f32.mxu0 0.0
        %2259 = vmatmul.mubr.f32.gmra.mrb[0].mxu0 %v2183
        %v2260 = vpop.f32.mrb[0].mxu0
        %v2261 = vadd.f32 0.0, %v2260
        %v2262 = vpop.f32.mrb[0].mxu0
        %2263 = vdwg.mxu0
        %v2264 = vmul.f32 %v2256, 0.35355338
        %v2265 = vmul.f32 %v2261, 0.35355338
        %v2266 = vsel %vm549, %v2264, -inf
        %2267 = vmax.xlane.f32.xlu0 %v2266
        %v2268 = vpop.xlane.xlu0 %2267
        %v2269 = vsel %vm549, %v2265, -inf
        %2270 = vmax.xlane.f32.xlu0 %v2269
        %v2271 = vpop.xlane.xlu0 %2270
        %v2272 = vsub.f32 %v2264, %v2268
        %v2273 = vsub.f32 %v2265, %v2271
        %v2274 = vmul.f32 %v2272, 1.442695
        %v2275 = vpow.pop %v2274
        %v2276 = vmul.f32 %v2273, 1.442695
        %v2277 = vpow.pop %v2276
        %v2278 = vsel %vm549, %v2275, 0.0
        %2279 = vadd.xlane.f32.xlu0 %v2278
        %v2280 = vpop.xlane.xlu0 %2279
        %v2281 = vsel %vm549, %v2277, 0.0
        %2282 = vadd.xlane.f32.xlu0 %v2281
        %v2283 = vpop.xlane.xlu0 %2282
        %v2284 = vrcp.pop %v2280
        %v2285 = vmul.f32 %v2275, %v2284
        %v2286 = vrcp.pop %v2283
        %v2287 = vmul.f32 %v2277, %v2286
        %2288 = vrot.lane.b32.xlu0 %v1763, 48
        %v2289 = vpop.permute.xlu0 %2288
        %2290 = vrot.lane.b32.xlu0 %v1768, 48
        %v2291 = vpop.permute.xlu0 %2290
        %v2295 = vsel %vm549, %v2285, 0
        %v2298 = vsel %vm549, %v2287, 0
        %2300 = vmatprep.subr.mxu0 0.0
        %2301 = vmatpush1.msra.mxu0 %v2289
        %2302 = vmatprep.subr.mxu0 0.0
        %2303 = vmatpush1.msra.mxu0 %v2291
        %2304 = vmatprep.subr.mxu0 0.0
        %2305 = vmatpush1.msra.mxu0 0.0
        %2306 = vmatprep.subr.mxu0 0.0
        %2307 = vmatpush1.msra.mxu0 0.0
        %2308 = vmatprep.subr.mxu0 0.0
        %2309 = vmatpush1.msra.mxu0 0.0
        %2310 = vmatprep.subr.mxu0 0.0
        %2311 = vmatpush1.msra.mxu0 0.0
        %2312 = vmatprep.subr.mxu0 0.0
        %2313 = vmatpush1.msra.mxu0 0.0
        %2314 = vmatprep.subr.mxu0 0.0
        %2315 = vmatpush1.msra.mxu0 0.0
        %2316 = vmatprep.subr.mxu0 0.0
        %2317 = vmatpush1.msra.mxu0 0.0
        %2318 = vmatprep.subr.mxu0 0.0
        %2319 = vmatpush1.msra.mxu0 0.0
        %2320 = vmatprep.subr.mxu0 0.0
        %2321 = vmatpush1.msra.mxu0 0.0
        %2322 = vmatprep.subr.mxu0 0.0
        %2323 = vmatpush1.msra.mxu0 0.0
        %2324 = vmatprep.subr.mxu0 0.0
        %2325 = vmatpush1.msra.mxu0 0.0
        %2326 = vmatprep.subr.mxu0 0.0
        %2327 = vmatpush1.msra.mxu0 0.0
        %2328 = vmatprep.subr.mxu0 0.0
        %2329 = vmatpush1.msra.mxu0 0.0
        %2330 = vmatprep.subr.mxu0 0.0
        %2331 = vmatpush1.msra.mxu0 0.0
        %2332 = vmatprep.subr.mxu0 0.0
        %2333 = vmatpush1.msra.mxu0 0.0
        %2334 = vmatprep.subr.mxu0 0.0
        %2335 = vmatpush1.msra.mxu0 0.0
        %2336 = vmatprep.subr.mxu0 0.0
        %2337 = vmatpush1.msra.mxu0 0.0
        %2338 = vmatprep.subr.mxu0 0.0
        %2339 = vmatpush1.msra.mxu0 0.0
        %2340 = vmatprep.subr.mxu0 0.0
        %2341 = vmatpush1.msra.mxu0 0.0
        %2342 = vmatprep.subr.mxu0 0.0
        %2343 = vmatpush1.msra.mxu0 0.0
        %2344 = vmatprep.subr.mxu0 0.0
        %2345 = vmatpush1.msra.mxu0 0.0
        %2346 = vmatprep.subr.mxu0 0.0
        %2347 = vmatpush1.msra.mxu0 0.0
        %2348 = vmatprep.subr.mxu0 0.0
        %2349 = vmatpush1.msra.mxu0 0.0
        %2350 = vmatprep.subr.mxu0 0.0
        %2351 = vmatpush1.msra.mxu0 0.0
        %2352 = vmatprep.subr.mxu0 0.0
        %2353 = vmatpush1.msra.mxu0 0.0
        %2354 = vmatprep.subr.mxu0 0.0
        %2355 = vmatpush1.msra.mxu0 0.0
        %2356 = vmatprep.subr.mxu0 0.0
        %2357 = vmatpush1.msra.mxu0 0.0
        %2358 = vmatprep.subr.mxu0 0.0
        %2359 = vmatpush1.msra.mxu0 0.0
        %2360 = vmatprep.subr.mxu0 0.0
        %2361 = vmatpush1.msra.mxu0 0.0
        %2362 = vmatprep.subr.mxu0 0.0
        %2363 = vmatpush1.msra.mxu0 0.0
        %2364 = vmatprep.mubr.f32.mxu0 0.0
        %2365 = vmatmul.mubr.f32.gmra.mrb[0].mxu0 %v2295
        %v2366 = vpop.f32.mrb[0].mxu0
        %v2367 = vadd.f32 0.0, %v2366
        %v2368 = vpop.f32.mrb[0].mxu0
        %2369 = vmatprep.mubr.f32.mxu0 0.0
        %2370 = vmatmul.mubr.f32.gmra.mrb[0].mxu0 %v2298
        %v2371 = vpop.f32.mrb[0].mxu0
        %v2372 = vadd.f32 0.0, %v2371
        %v2373 = vpop.f32.mrb[0].mxu0
        %2374 = vdwg.mxu0
        %2375 = vrot.lane.b32.xlu0 %v1763, 104
        %v2376 = vpop.permute.xlu0 %2375
        %2377 = vrot.lane.b32.xlu0 %v1768, 104
        %v2378 = vpop.permute.xlu0 %2377
        %2379 = vrot.lane.b32.xlu0 %v1763, 72
        %v2380 = vpop.permute.xlu0 %2379
        %2381 = vrot.lane.b32.xlu0 %v1768, 72
        %v2382 = vpop.permute.xlu0 %2381
        %v2383 = vsel %vm463, %v2376, 0
        %v2385 = vsel %vm463, %v2378, 0
        %v2387 = vsel %vm463, %v2380, 0
        %v2389 = vsel %vm463, %v2382, 0
        %2391 = vmatprep.subr.mxu0 0.0
        %2392 = vmatpush1.xpose.msra.mxu0 %v2387
        %2393 = vmatprep.subr.mxu0 0.0
        %2394 = vmatpush1.xpose.msra.mxu0 %v2389
        %2395 = vmatprep.subr.mxu0 0.0
        %2396 = vmatpush1.xpose.msra.mxu0 0.0
        %2397 = vmatprep.subr.mxu0 0.0
        %2398 = vmatpush1.xpose.msra.mxu0 0.0
        %2399 = vmatprep.subr.mxu0 0.0
        %2400 = vmatpush1.xpose.msra.mxu0 0.0
        %2401 = vmatprep.subr.mxu0 0.0
        %2402 = vmatpush1.xpose.msra.mxu0 0.0
        %2403 = vmatprep.subr.mxu0 0.0
        %2404 = vmatpush1.xpose.msra.mxu0 0.0
        %2405 = vmatprep.subr.mxu0 0.0
        %2406 = vmatpush1.xpose.msra.mxu0 0.0
        %2407 = vmatprep.subr.mxu0 0.0
        %2408 = vmatpush1.xpose.msra.mxu0 0.0
        %2409 = vmatprep.subr.mxu0 0.0
        %2410 = vmatpush1.xpose.msra.mxu0 0.0
        %2411 = vmatprep.subr.mxu0 0.0
        %2412 = vmatpush1.xpose.msra.mxu0 0.0
        %2413 = vmatprep.subr.mxu0 0.0
        %2414 = vmatpush1.xpose.msra.mxu0 0.0
        %2415 = vmatprep.subr.mxu0 0.0
        %2416 = vmatpush1.xpose.msra.mxu0 0.0
        %2417 = vmatprep.subr.mxu0 0.0
        %2418 = vmatpush1.xpose.msra.mxu0 0.0
        %2419 = vmatprep.subr.mxu0 0.0
        %2420 = vmatpush1.xpose.msra.mxu0 0.0
        %2421 = vmatprep.subr.mxu0 0.0
        %2422 = vmatpush1.xpose.msra.mxu0 0.0
        %2423 = vmatprep.subr.mxu0 0.0
        %2424 = vmatpush1.xpose.msra.mxu0 0.0
        %2425 = vmatprep.subr.mxu0 0.0
        %2426 = vmatpush1.xpose.msra.mxu0 0.0
        %2427 = vmatprep.subr.mxu0 0.0
        %2428 = vmatpush1.xpose.msra.mxu0 0.0
        %2429 = vmatprep.subr.mxu0 0.0
        %2430 = vmatpush1.xpose.msra.mxu0 0.0
        %2431 = vmatprep.subr.mxu0 0.0
        %2432 = vmatpush1.xpose.msra.mxu0 0.0
        %2433 = vmatprep.subr.mxu0 0.0
        %2434 = vmatpush1.xpose.msra.mxu0 0.0
        %2435 = vmatprep.subr.mxu0 0.0
        %2436 = vmatpush1.xpose.msra.mxu0 0.0
        %2437 = vmatprep.subr.mxu0 0.0
        %2438 = vmatpush1.xpose.msra.mxu0 0.0
        %2439 = vmatprep.subr.mxu0 0.0
        %2440 = vmatpush1.xpose.msra.mxu0 0.0
        %2441 = vmatprep.subr.mxu0 0.0
        %2442 = vmatpush1.xpose.msra.mxu0 0.0
        %2443 = vmatprep.subr.mxu0 0.0
        %2444 = vmatpush1.xpose.msra.mxu0 0.0
        %2445 = vmatprep.subr.mxu0 0.0
        %2446 = vmatpush1.xpose.msra.mxu0 0.0
        %2447 = vmatprep.subr.mxu0 0.0
        %2448 = vmatpush1.xpose.msra.mxu0 0.0
        %2449 = vmatprep.subr.mxu0 0.0
        %2450 = vmatpush1.xpose.msra.mxu0 0.0
        %2451 = vmatprep.subr.mxu0 0.0
        %2452 = vmatpush1.xpose.msra.mxu0 0.0
        %2453 = vmatprep.subr.mxu0 0.0
        %2454 = vmatpush1.xpose.msra.mxu0 0.0
        %2455 = vmatprep.mubr.f32.mxu0 0.0
        %2456 = vmatmul.mubr.f32.gmra.mrb[0].mxu0 %v2383
        %v2457 = vpop.f32.mrb[0].mxu0
        %v2458 = vadd.f32 0.0, %v2457
        %v2459 = vpop.f32.mrb[0].mxu0
        %2460 = vmatprep.mubr.f32.mxu0 0.0
        %2461 = vmatmul.mubr.f32.gmra.mrb[0].mxu0 %v2385
        %v2462 = vpop.f32.mrb[0].mxu0
        %v2463 = vadd.f32 0.0, %v2462
        %v2464 = vpop.f32.mrb[0].mxu0
        %2465 = vdwg.mxu0
        %v2466 = vmul.f32 %v2458, 0.35355338
        %v2467 = vmul.f32 %v2463, 0.35355338
        %v2468 = vsel %vm549, %v2466, -inf
        %2469 = vmax.xlane.f32.xlu0 %v2468
        %v2470 = vpop.xlane.xlu0 %2469
        %v2471 = vsel %vm549, %v2467, -inf
        %2472 = vmax.xlane.f32.xlu0 %v2471
        %v2473 = vpop.xlane.xlu0 %2472
        %v2474 = vsub.f32 %v2466, %v2470
        %v2475 = vsub.f32 %v2467, %v2473
        %v2476 = vmul.f32 %v2474, 1.442695
        %v2477 = vpow.pop %v2476
        %v2478 = vmul.f32 %v2475, 1.442695
        %v2479 = vpow.pop %v2478
        %v2480 = vsel %vm549, %v2477, 0.0
        %2481 = vadd.xlane.f32.xlu0 %v2480
        %v2482 = vpop.xlane.xlu0 %2481
        %v2483 = vsel %vm549, %v2479, 0.0
        %2484 = vadd.xlane.f32.xlu0 %v2483
        %v2485 = vpop.xlane.xlu0 %2484
        %v2486 = vrcp.pop %v2482
        %v2487 = vmul.f32 %v2477, %v2486
        %v2488 = vrcp.pop %v2485
        %v2489 = vmul.f32 %v2479, %v2488
        %2490 = vrot.lane.b32.xlu0 %v1763, 40
        %v2491 = vpop.permute.xlu0 %2490
        %2492 = vrot.lane.b32.xlu0 %v1768, 40
        %v2493 = vpop.permute.xlu0 %2492
        %v2497 = vsel %vm549, %v2487, 0
        %v2500 = vsel %vm549, %v2489, 0
        %2502 = vmatprep.subr.mxu0 0.0
        %2503 = vmatpush1.msra.mxu0 %v2491
        %2504 = vmatprep.subr.mxu0 0.0
        %2505 = vmatpush1.msra.mxu0 %v2493
        %2506 = vmatprep.subr.mxu0 0.0
        %2507 = vmatpush1.msra.mxu0 0.0
        %2508 = vmatprep.subr.mxu0 0.0
        %2509 = vmatpush1.msra.mxu0 0.0
        %2510 = vmatprep.subr.mxu0 0.0
        %2511 = vmatpush1.msra.mxu0 0.0
        %2512 = vmatprep.subr.mxu0 0.0
        %2513 = vmatpush1.msra.mxu0 0.0
        %2514 = vmatprep.subr.mxu0 0.0
        %2515 = vmatpush1.msra.mxu0 0.0
        %2516 = vmatprep.subr.mxu0 0.0
        %2517 = vmatpush1.msra.mxu0 0.0
        %2518 = vmatprep.subr.mxu0 0.0
        %2519 = vmatpush1.msra.mxu0 0.0
        %2520 = vmatprep.subr.mxu0 0.0
        %2521 = vmatpush1.msra.mxu0 0.0
        %2522 = vmatprep.subr.mxu0 0.0
        %2523 = vmatpush1.msra.mxu0 0.0
        %2524 = vmatprep.subr.mxu0 0.0
        %2525 = vmatpush1.msra.mxu0 0.0
        %2526 = vmatprep.subr.mxu0 0.0
        %2527 = vmatpush1.msra.mxu0 0.0
        %2528 = vmatprep.subr.mxu0 0.0
        %2529 = vmatpush1.msra.mxu0 0.0
        %2530 = vmatprep.subr.mxu0 0.0
        %2531 = vmatpush1.msra.mxu0 0.0
        %2532 = vmatprep.subr.mxu0 0.0
        %2533 = vmatpush1.msra.mxu0 0.0
        %2534 = vmatprep.subr.mxu0 0.0
        %2535 = vmatpush1.msra.mxu0 0.0
        %2536 = vmatprep.subr.mxu0 0.0
        %2537 = vmatpush1.msra.mxu0 0.0
        %2538 = vmatprep.subr.mxu0 0.0
        %2539 = vmatpush1.msra.mxu0 0.0
        %2540 = vmatprep.subr.mxu0 0.0
        %2541 = vmatpush1.msra.mxu0 0.0
        %2542 = vmatprep.subr.mxu0 0.0
        %2543 = vmatpush1.msra.mxu0 0.0
        %2544 = vmatprep.subr.mxu0 0.0
        %2545 = vmatpush1.msra.mxu0 0.0
        %2546 = vmatprep.subr.mxu0 0.0
        %2547 = vmatpush1.msra.mxu0 0.0
        %2548 = vmatprep.subr.mxu0 0.0
        %2549 = vmatpush1.msra.mxu0 0.0
        %2550 = vmatprep.subr.mxu0 0.0
        %2551 = vmatpush1.msra.mxu0 0.0
        %2552 = vmatprep.subr.mxu0 0.0
        %2553 = vmatpush1.msra.mxu0 0.0
        %2554 = vmatprep.subr.mxu0 0.0
        %2555 = vmatpush1.msra.mxu0 0.0
        %2556 = vmatprep.subr.mxu0 0.0
        %2557 = vmatpush1.msra.mxu0 0.0
        %2558 = vmatprep.subr.mxu0 0.0
        %2559 = vmatpush1.msra.mxu0 0.0
        %2560 = vmatprep.subr.mxu0 0.0
        %2561 = vmatpush1.msra.mxu0 0.0
        %2562 = vmatprep.subr.mxu0 0.0
        %2563 = vmatpush1.msra.mxu0 0.0
        %2564 = vmatprep.subr.mxu0 0.0
        %2565 = vmatpush1.msra.mxu0 0.0
        %2566 = vmatprep.mubr.f32.mxu0 0.0
        %2567 = vmatmul.mubr.f32.gmra.mrb[0].mxu0 %v2497
        %v2568 = vpop.f32.mrb[0].mxu0
        %v2569 = vadd.f32 0.0, %v2568
        %v2570 = vpop.f32.mrb[0].mxu0
        %2571 = vmatprep.mubr.f32.mxu0 0.0
        %2572 = vmatmul.mubr.f32.gmra.mrb[0].mxu0 %v2500
        %v2573 = vpop.f32.mrb[0].mxu0
        %v2574 = vadd.f32 0.0, %v2573
        %v2575 = vpop.f32.mrb[0].mxu0
        %2576 = vdwg.mxu0
        %2579 = vrot.lane.b32.xlu0 %v2165, 8
        %v2580 = vpop.permute.xlu0 %2579
        %2581 = vrot.lane.b32.xlu0 %v2170, 8
        %v2582 = vpop.permute.xlu0 %2581
        %2587 = vrot.lane.b32.xlu0 %v2367, 16
        %v2588 = vpop.permute.xlu0 %2587
        %2589 = vrot.lane.b32.xlu0 %v2372, 16
        %v2590 = vpop.permute.xlu0 %2589
        %2595 = vrot.lane.b32.xlu0 %v2569, 24
        %v2596 = vpop.permute.xlu0 %2595
        %2597 = vrot.lane.b32.xlu0 %v2574, 24
        %v2598 = vpop.permute.xlu0 %2597
        %v2601 = vsel %vm463, %v1963, %v2580
        %v2602 = vsel %vm463, %v1968, %v2582
        %v2603 = vsel %vm549, %v2601, %v2588
        %v2604 = vsel %vm549, %v2602, %v2590
        %v2605 = vsel %vm1293, %v2603, %v2596
        %v2606 = vsel %vm1293, %v2604, %v2598
        %v2608 = vlaneseq
        %v2609 = vshrl.u32 %v2608, 7
        %v2610 = vsub.s32 0, %v2609
        %v2611 = vrot.slane %v1678, %v2610
        %v2614 = vsel %vm375, %v2605, 0
        %v2617 = vsel %vm375, %v2606, 0
        %2619 = vmatprep.subr.mxu0 0.0
        %2620 = vmatpush1.msra.mxu0 %v1657
        %2621 = vmatprep.subr.mxu0 0.0
        %2622 = vmatpush1.msra.mxu0 %v1658
        %2623 = vmatprep.subr.mxu0 0.0
        %2624 = vmatpush1.msra.mxu0 %v1659
        %2625 = vmatprep.subr.mxu0 0.0
        %2626 = vmatpush1.msra.mxu0 %v1660
        %2627 = vmatprep.subr.mxu0 0.0
        %2628 = vmatpush1.msra.mxu0 0.0
        %2629 = vmatprep.subr.mxu0 0.0
        %2630 = vmatpush1.msra.mxu0 0.0
        %2631 = vmatprep.subr.mxu0 0.0
        %2632 = vmatpush1.msra.mxu0 0.0
        %2633 = vmatprep.subr.mxu0 0.0
        %2634 = vmatpush1.msra.mxu0 0.0
        %2635 = vmatprep.subr.mxu0 0.0
        %2636 = vmatpush1.msra.mxu0 0.0
        %2637 = vmatprep.subr.mxu0 0.0
        %2638 = vmatpush1.msra.mxu0 0.0
        %2639 = vmatprep.subr.mxu0 0.0
        %2640 = vmatpush1.msra.mxu0 0.0
        %2641 = vmatprep.subr.mxu0 0.0
        %2642 = vmatpush1.msra.mxu0 0.0
        %2643 = vmatprep.subr.mxu0 0.0
        %2644 = vmatpush1.msra.mxu0 0.0
        %2645 = vmatprep.subr.mxu0 0.0
        %2646 = vmatpush1.msra.mxu0 0.0
        %2647 = vmatprep.subr.mxu0 0.0
        %2648 = vmatpush1.msra.mxu0 0.0
        %2649 = vmatprep.subr.mxu0 0.0
        %2650 = vmatpush1.msra.mxu0 0.0
        %2651 = vmatprep.subr.mxu0 0.0
        %2652 = vmatpush1.msra.mxu0 0.0
        %2653 = vmatprep.subr.mxu0 0.0
        %2654 = vmatpush1.msra.mxu0 0.0
        %2655 = vmatprep.subr.mxu0 0.0
        %2656 = vmatpush1.msra.mxu0 0.0
        %2657 = vmatprep.subr.mxu0 0.0
        %2658 = vmatpush1.msra.mxu0 0.0
        %2659 = vmatprep.subr.mxu0 0.0
        %2660 = vmatpush1.msra.mxu0 0.0
        %2661 = vmatprep.subr.mxu0 0.0
        %2662 = vmatpush1.msra.mxu0 0.0
        %2663 = vmatprep.subr.mxu0 0.0
        %2664 = vmatpush1.msra.mxu0 0.0
        %2665 = vmatprep.subr.mxu0 0.0
        %2666 = vmatpush1.msra.mxu0 0.0
        %2667 = vmatprep.subr.mxu0 0.0
        %2668 = vmatpush1.msra.mxu0 0.0
        %2669 = vmatprep.subr.mxu0 0.0
        %2670 = vmatpush1.msra.mxu0 0.0
        %2671 = vmatprep.subr.mxu0 0.0
        %2672 = vmatpush1.msra.mxu0 0.0
        %2673 = vmatprep.subr.mxu0 0.0
        %2674 = vmatpush1.msra.mxu0 0.0
        %2675 = vmatprep.subr.mxu0 0.0
        %2676 = vmatpush1.msra.mxu0 0.0
        %2677 = vmatprep.subr.mxu0 0.0
        %2678 = vmatpush1.msra.mxu0 0.0
        %2679 = vmatprep.subr.mxu0 0.0
        %2680 = vmatpush1.msra.mxu0 0.0
        %2681 = vmatprep.subr.mxu0 0.0
        %2682 = vmatpush1.msra.mxu0 0.0
        %2683 = vmatprep.mubr.f32.mxu0 0.0
        %2684 = vmatmul.mubr.f32.gmra.mrb[0].mxu0 %v2614
        %v2685 = vpop.f32.mrb[0].mxu0
        %v2686 = vadd.f32 %v2611, %v2685
        %v2687 = vpop.f32.mrb[0].mxu0
        %2688 = vmatprep.mubr.f32.mxu0 0.0
        %2689 = vmatmul.mubr.f32.gmra.mrb[0].mxu0 %v2617
        %v2690 = vpop.f32.mrb[0].mxu0
        %v2691 = vadd.f32 %v2611, %v2690
        %v2692 = vpop.f32.mrb[0].mxu0
        %2693 = vdwg.mxu0
        %v2694 = vadd.f32 %v1647, %v2686
        %v2695 = vadd.f32 %v1648, %v2691
        %v2696 = vsel %vm375, %v2694, 0.0
        %2697 = vadd.xlane.f32.xlu0 %v2696
        %v2698 = vpop.xlane.xlu0 %2697
        %v2699 = vsel %vm375, %v2695, 0.0
        %2700 = vadd.xlane.f32.xlu0 %v2699
        %v2701 = vpop.xlane.xlu0 %2700
        %v2702 = vmul.f32 %v2698, %v1391
        %v2703 = vmul.f32 %v2701, %v1391
        %v2704 = vsub.f32 %v2694, %v2702
        %v2705 = vsub.f32 %v2695, %v2703
        %v2706 = vmul.f32 %v2704, %v2704
        %v2707 = vmul.f32 %v2705, %v2705
        %v2708 = vsel %vm375, %v2706, 0.0
        %2709 = vadd.xlane.f32.xlu0 %v2708
        %v2710 = vpop.xlane.xlu0 %2709
        %v2711 = vsel %vm375, %v2707, 0.0
        %2712 = vadd.xlane.f32.xlu0 %v2711
        %v2713 = vpop.xlane.xlu0 %2712
        %v2714 = vmul.f32 %v2710, %v1391
        %v2715 = vmul.f32 %v2713, %v1391
        %v2716 = vadd.f32 %v2714, 1e-05
        %v2717 = vadd.f32 %v2715, 1e-05
        %v2718 = vrsqrt.pop %v2716
        %v2719 = vrsqrt.pop %v2717
        %v2720 = vmul.f32 %v2704, %v2718
        %v2721 = vmul.f32 %v2705, %v2719
        %v2723 = vlaneseq
        %v2724 = vshrl.u32 %v2723, 7
        %v2725 = vsub.s32 0, %v2724
        %v2726 = vrot.slane %v1679, %v2725
        %v2728 = vmul.f32 %v2720, %v2726
        %v2729 = vmul.f32 %v2721, %v2726
        %v2731 = vlaneseq
        %v2732 = vshrl.u32 %v2731, 7
        %v2733 = vsub.s32 0, %v2732
        %v2734 = vrot.slane %v1680, %v2733
        %v2736 = vadd.f32 %v2728, %v2734
        %v2737 = vadd.f32 %v2729, %v2734
        %v2739 = vlaneseq
        %v2740 = vshrl.u32 %v2739, 7
        %v2741 = vsub.s32 0, %v2740
        %v2742 = vrot.slane %v1667, %v2741
        %v2745 = vsel %vm375, %v2736, 0
        %v2748 = vsel %vm375, %v2737, 0
        %2750 = vmatprep.subr.mxu0 0.0
        %2751 = vmatpush1.msra.mxu0 %v1662
        %2752 = vmatprep.subr.mxu0 0.0
        %2753 = vmatpush1.msra.mxu0 %v1663
        %2754 = vmatprep.subr.mxu0 0.0
        %2755 = vmatpush1.msra.mxu0 %v1664
        %2756 = vmatprep.subr.mxu0 0.0
        %2757 = vmatpush1.msra.mxu0 %v1665
        %2758 = vmatprep.subr.mxu0 0.0
        %2759 = vmatpush1.msra.mxu0 0.0
        %2760 = vmatprep.subr.mxu0 0.0
        %2761 = vmatpush1.msra.mxu0 0.0
        %2762 = vmatprep.subr.mxu0 0.0
        %2763 = vmatpush1.msra.mxu0 0.0
        %2764 = vmatprep.subr.mxu0 0.0
        %2765 = vmatpush1.msra.mxu0 0.0
        %2766 = vmatprep.subr.mxu0 0.0
        %2767 = vmatpush1.msra.mxu0 0.0
        %2768 = vmatprep.subr.mxu0 0.0
        %2769 = vmatpush1.msra.mxu0 0.0
        %2770 = vmatprep.subr.mxu0 0.0
        %2771 = vmatpush1.msra.mxu0 0.0
        %2772 = vmatprep.subr.mxu0 0.0
        %2773 = vmatpush1.msra.mxu0 0.0
        %2774 = vmatprep.subr.mxu0 0.0
        %2775 = vmatpush1.msra.mxu0 0.0
        %2776 = vmatprep.subr.mxu0 0.0
        %2777 = vmatpush1.msra.mxu0 0.0
        %2778 = vmatprep.subr.mxu0 0.0
        %2779 = vmatpush1.msra.mxu0 0.0
        %2780 = vmatprep.subr.mxu0 0.0
        %2781 = vmatpush1.msra.mxu0 0.0
        %2782 = vmatprep.subr.mxu0 0.0
        %2783 = vmatpush1.msra.mxu0 0.0
        %2784 = vmatprep.subr.mxu0 0.0
        %2785 = vmatpush1.msra.mxu0 0.0
        %2786 = vmatprep.subr.mxu0 0.0
        %2787 = vmatpush1.msra.mxu0 0.0
        %2788 = vmatprep.subr.mxu0 0.0
        %2789 = vmatpush1.msra.mxu0 0.0
        %2790 = vmatprep.subr.mxu0 0.0
        %2791 = vmatpush1.msra.mxu0 0.0
        %2792 = vmatprep.subr.mxu0 0.0
        %2793 = vmatpush1.msra.mxu0 0.0
        %2794 = vmatprep.subr.mxu0 0.0
        %2795 = vmatpush1.msra.mxu0 0.0
        %2796 = vmatprep.subr.mxu0 0.0
        %2797 = vmatpush1.msra.mxu0 0.0
        %2798 = vmatprep.subr.mxu0 0.0
        %2799 = vmatpush1.msra.mxu0 0.0
        %2800 = vmatprep.subr.mxu0 0.0
        %2801 = vmatpush1.msra.mxu0 0.0
        %2802 = vmatprep.subr.mxu0 0.0
        %2803 = vmatpush1.msra.mxu0 0.0
        %2804 = vmatprep.subr.mxu0 0.0
        %2805 = vmatpush1.msra.mxu0 0.0
        %2806 = vmatprep.subr.mxu0 0.0
        %2807 = vmatpush1.msra.mxu0 0.0
        %2808 = vmatprep.subr.mxu0 0.0
        %2809 = vmatpush1.msra.mxu0 0.0
        %2810 = vmatprep.subr.mxu0 0.0
        %2811 = vmatpush1.msra.mxu0 0.0
        %2812 = vmatprep.subr.mxu0 0.0
        %2813 = vmatpush1.msra.mxu0 0.0
        %2814 = vmatprep.mubr.f32.mxu0 0.0
        %2815 = vmatmul.mubr.f32.gmra.mrb[0].mxu0 %v2745
        %v2816 = vpop.f32.mrb[0].mxu0
        %v2817 = vadd.f32 %v2742, %v2816
        %v2818 = vpop.f32.mrb[0].mxu0
        %2819 = vmatprep.mubr.f32.mxu0 0.0
        %2820 = vmatmul.mubr.f32.gmra.mrb[0].mxu0 %v2748
        %v2821 = vpop.f32.mrb[0].mxu0
        %v2822 = vadd.f32 %v2742, %v2821
        %v2823 = vpop.f32.mrb[0].mxu0
        %2824 = vdwg.mxu0
        %v2825 = vmax.f32 %v2817, 0.0
        %v2826 = vmax.f32 %v2822, 0.0
        %v2828 = vlaneseq
        %v2829 = vshrl.u32 %v2828, 7
        %v2830 = vsub.s32 0, %v2829
        %v2831 = vrot.slane %v1683, %v2830
        %v2834 = vsel %vm1523, %v2825, 0
        %v2837 = vsel %vm1523, %v2826, 0
        %2839 = vmatprep.subr.mxu0 0.0
        %2840 = vmatpush1.msra.mxu0 %v1669
        %2841 = vmatprep.subr.mxu0 0.0
        %2842 = vmatpush1.msra.mxu0 %v1670
        %2843 = vmatprep.subr.mxu0 0.0
        %2844 = vmatpush1.msra.mxu0 %v1671
        %2845 = vmatprep.subr.mxu0 0.0
        %2846 = vmatpush1.msra.mxu0 %v1672
        %2847 = vmatprep.subr.mxu0 0.0
        %2848 = vmatpush1.msra.mxu0 %v1673
        %2849 = vmatprep.subr.mxu0 0.0
        %2850 = vmatpush1.msra.mxu0 %v1674
        %2851 = vmatprep.subr.mxu0 0.0
        %2852 = vmatpush1.msra.mxu0 %v1675
        %2853 = vmatprep.subr.mxu0 0.0
        %2854 = vmatpush1.msra.mxu0 %v1676
        %2855 = vmatprep.subr.mxu0 0.0
        %2856 = vmatpush1.msra.mxu0 0.0
        %2857 = vmatprep.subr.mxu0 0.0
        %2858 = vmatpush1.msra.mxu0 0.0
        %2859 = vmatprep.subr.mxu0 0.0
        %2860 = vmatpush1.msra.mxu0 0.0
        %2861 = vmatprep.subr.mxu0 0.0
        %2862 = vmatpush1.msra.mxu0 0.0
        %2863 = vmatprep.subr.mxu0 0.0
        %2864 = vmatpush1.msra.mxu0 0.0
        %2865 = vmatprep.subr.mxu0 0.0
        %2866 = vmatpush1.msra.mxu0 0.0
        %2867 = vmatprep.subr.mxu0 0.0
        %2868 = vmatpush1.msra.mxu0 0.0
        %2869 = vmatprep.subr.mxu0 0.0
        %2870 = vmatpush1.msra.mxu0 0.0
        %2871 = vmatprep.subr.mxu0 0.0
        %2872 = vmatpush1.msra.mxu0 0.0
        %2873 = vmatprep.subr.mxu0 0.0
        %2874 = vmatpush1.msra.mxu0 0.0
        %2875 = vmatprep.subr.mxu0 0.0
        %2876 = vmatpush1.msra.mxu0 0.0
        %2877 = vmatprep.subr.mxu0 0.0
        %2878 = vmatpush1.msra.mxu0 0.0
        %2879 = vmatprep.subr.mxu0 0.0
        %2880 = vmatpush1.msra.mxu0 0.0
        %2881 = vmatprep.subr.mxu0 0.0
        %2882 = vmatpush1.msra.mxu0 0.0
        %2883 = vmatprep.subr.mxu0 0.0
        %2884 = vmatpush1.msra.mxu0 0.0
        %2885 = vmatprep.subr.mxu0 0.0
        %2886 = vmatpush1.msra.mxu0 0.0
        %2887 = vmatprep.subr.mxu0 0.0
        %2888 = vmatpush1.msra.mxu0 0.0
        %2889 = vmatprep.subr.mxu0 0.0
        %2890 = vmatpush1.msra.mxu0 0.0
        %2891 = vmatprep.subr.mxu0 0.0
        %2892 = vmatpush1.msra.mxu0 0.0
        %2893 = vmatprep.subr.mxu0 0.0
        %2894 = vmatpush1.msra.mxu0 0.0
        %2895 = vmatprep.subr.mxu0 0.0
        %2896 = vmatpush1.msra.mxu0 0.0
        %2897 = vmatprep.subr.mxu0 0.0
        %2898 = vmatpush1.msra.mxu0 0.0
        %2899 = vmatprep.subr.mxu0 0.0
        %2900 = vmatpush1.msra.mxu0 0.0
        %2901 = vmatprep.subr.mxu0 0.0
        %2902 = vmatpush1.msra.mxu0 0.0
        %2903 = vmatprep.mubr.f32.mxu0 0.0
        %2904 = vmatmul.mubr.f32.gmra.mrb[0].mxu0 %v2834
        %v2905 = vpop.f32.mrb[0].mxu0
        %v2906 = vadd.f32 %v2831, %v2905
        %v2907 = vpop.f32.mrb[0].mxu0
        %2908 = vmatprep.mubr.f32.mxu0 0.0
        %2909 = vmatmul.mubr.f32.gmra.mrb[0].mxu0 %v2837
        %v2910 = vpop.f32.mrb[0].mxu0
        %v2911 = vadd.f32 %v2831, %v2910
        %v2912 = vpop.f32.mrb[0].mxu0
        %2913 = vdwg.mxu0
        %v2914 = vadd.f32 %v2736, %v2906
        %v2915 = vadd.f32 %v2737, %v2911
        %v2916 = vsel %vm375, %v2914, 0.0
        %2917 = vadd.xlane.f32.xlu0 %v2916
        %v2918 = vpop.xlane.xlu0 %2917
        %v2919 = vsel %vm375, %v2915, 0.0
        %2920 = vadd.xlane.f32.xlu0 %v2919
        %v2921 = vpop.xlane.xlu0 %2920
        %v2922 = vmul.f32 %v2918, %v1391
        %v2923 = vmul.f32 %v2921, %v1391
        %v2924 = vsub.f32 %v2914, %v2922
        %v2925 = vsub.f32 %v2915, %v2923
        %v2926 = vmul.f32 %v2924, %v2924
        %v2927 = vmul.f32 %v2925, %v2925
        %v2928 = vsel %vm375, %v2926, 0.0
        %2929 = vadd.xlane.f32.xlu0 %v2928
        %v2930 = vpop.xlane.xlu0 %2929
        %v2931 = vsel %vm375, %v2927, 0.0
        %2932 = vadd.xlane.f32.xlu0 %v2931
        %v2933 = vpop.xlane.xlu0 %2932
        %v2934 = vmul.f32 %v2930, %v1391
        %v2935 = vmul.f32 %v2933, %v1391
        %v2936 = vadd.f32 %v2934, 1e-05
        %v2937 = vadd.f32 %v2935, 1e-05
        %v2938 = vrsqrt.pop %v2936
        %v2939 = vrsqrt.pop %v2937
        %v2940 = vmul.f32 %v2924, %v2938
        %v2941 = vmul.f32 %v2925, %v2939
        %v2943 = vlaneseq
        %v2944 = vshrl.u32 %v2943, 7
        %v2945 = vsub.s32 0, %v2944
        %v2946 = vrot.slane %v1681, %v2945
        %v2948 = vmul.f32 %v2940, %v2946
        %v2949 = vmul.f32 %v2941, %v2946
        %v2951 = vlaneseq
        %v2952 = vshrl.u32 %v2951, 7
        %v2953 = vsub.s32 0, %v2952
        %v2954 = vrot.slane %v1682, %v2953
        %v2956 = vadd.f32 %v2948, %v2954
        %v2957 = vadd.f32 %v2949, %v2954
        %2958 = vst.msk [vmem:[%s338] sm:$0xff] %vm375, %v2956
        %2959 = vst.msk [vmem:[%s338 + $0x8] sm:$0xff] %vm375, %v2957
        %s2960 = sand.u32 %s207, 1
        %s2961 = scalar_lea.sflag [#allocation4], %s2960
        %s2962 = sand.u32 %s207, 1
        %s2963 = smul.addr %s2962, 16
        %s2964 = scalar_lea.vmem [#allocation7], %s2963
        // Predicated region
        $region61: #{transformer_encoder_forward.1} parent=51 // pred_check
          %p2965 = pneg %p217
        $region62: #{transformer_encoder_forward.1} parent=51 // pred_check_branch
          %2967 = sbr.rel (%p2965) target = $region64
        $region63: #{transformer_encoder_forward.1} parent=51 // pred_region
          %s2969 = ssub.s32 256, 256
          %2970 = vsyncadd %s2961, %s2969
          %s2971 = smul.addr %s26, 2
          %s2972 = smul.addr %s2971, 128
          %s2973 = scalar_lea.hbm %s8, %s2972
          %s2974 = sshll.u32 %s2964, 4
          %s2975 = int_to_ptr.vmem [resolvable:$true] %s2974
          %2980 = dma.vmem_to_hbm [thread:$0]  %s2975, 256, %s2973, %s2961, 128, 128, 8
        $region64: #{transformer_encoder_forward.1} parent=51 // pred_fallthru
          _
      $region52: #{transformer_encoder_forward.1} parent=5 // pred_fallthru
        _
      %p2981 = scmp.le.s32.totalorder 2, %s21
      // Predicated region
      $region65: #{transformer_encoder_forward.1} parent=5 // pred_check
        %p2982 = pneg %p2981
      $region66: #{transformer_encoder_forward.1} parent=5 // pred_check_branch
        %2984 = sbr.rel (%p2982) target = $region68
      $region67: #{transformer_encoder_forward.1} parent=5 // pred_region
        %s2985 = ssub.s32 %s21, 2
        // Predicated region
        $region69: #{transformer_encoder_forward.1} parent=67 // pred_check
          %p2986 = pneg %p223
        $region70: #{transformer_encoder_forward.1} parent=67 // pred_check_branch
          %2988 = sbr.rel (%p2986) target = $region72
        $region71: #{transformer_encoder_forward.1} parent=67 // pred_region
          %s2989 = sand.u32 %s208, 1
          %s2990 = scalar_lea.sflag [#allocation4], %s2989
          %s2991 = sand.u32 %s208, 1
          %s2992 = smul.addr %s2991, 16
          %s2993 = scalar_lea.vmem [#allocation7], %s2992
          %2994 = dma.done %s2990, 256
        $region72: #{transformer_encoder_forward.1} parent=67 // pred_fallthru
          _
      $region68: #{transformer_encoder_forward.1} parent=5 // pred_fallthru
        _
    $region6: #{transformer_encoder_forward.1} parent=1 // loop_footer
      %s25 = sadd.s32 1, %s21
    $region7: #{transformer_encoder_forward.1} parent=1 // loop_footer_branch
      %20 = sbr.rel target = $region3
    $region8: #{transformer_encoder_forward.1} parent=1 // loop_exit
      _
    %2995 = vsyncpa [#allocation3], 1
    %s2996 = scalar_lea.sflag [#allocation3], 1
    %2997 = vsyncpa %s2996, 1
    %2998 = vsyncpa [#allocation6], 1
    %2999 = vsyncpa [#allocation4], 1
    %s3000 = scalar_lea.sflag [#allocation4], 1
    %3001 = vsyncpa %s3000, 1

</llo_original>
